<compile_context>
chip_gen: v7x
topology: tpu7x:2x2x1
jax: 0.10.0
libtpu: 0.0.40
codegen_flags: <defaults>
</compile_context>

<pallas_src>
import functools
import math

import jax
import jax.numpy as jnp
from jax import lax
from jax.experimental import pallas as pl
from jax.experimental.pallas import tpu as pltpu

# ----------------------------- hyper-parameters ------------------------------
VOCAB_SIZE = 16
EMBED_SIZE = 32
NUM_HEADS = 4
FORWARD_EXPANSION = 4          # unused by the PyTorch module (kept for fidelity)
GENDER_SIZE = 2
DIM_FEEDFORWARD = 2048         # torch.nn.TransformerEncoderLayer default
MAX_POS = 100
LN_EPS = 1e-5

BATCH = 2
SEQ = 8

QKV_PAD = 128                  # fused QKV output padded to full lane width
OUT_PAD = 128                  # vocab logits padded to full lane width
VEC_PAD = 128                  # each small bias/LN vector padded to 128 in the slab
TABLE_ROWS = 128               # combined embedding table rows (V + G + MAX_POS = 118 -> 128)
WSLAB_WIDTH = QKV_PAD + DIM_FEEDFORWARD + OUT_PAD + VEC_PAD   # 2432 (19 * 128)
NEG_INF = -1e30


# --------------------------------- kernel ------------------------------------
def _layer_norm(x, gamma, beta):
    mu = jnp.mean(x, axis=-1, keepdims=True)
    var = jnp.mean((x - mu) ** 2, axis=-1, keepdims=True)
    return (x - mu) * lax.rsqrt(var + LN_EPS) * gamma + beta


def transformer_kernel(ids_ref, table_ref, wslab_ref, w2_ref, vec_ref, out_ref,
                       *, batch, seq):
    E, H = EMBED_SIZE, NUM_HEADS
    dh = E // H
    FF = DIM_FEEDFORWARD
    R = batch * seq
    TBL = table_ref.shape[0]
    scale = 1.0 / math.sqrt(dh)

    # ---- bias / LayerNorm vector slab (static 128-aligned slices, free) -----
    bqkv = vec_ref[:, 0:QKV_PAD]
    b1 = vec_ref[:, QKV_PAD:QKV_PAD + FF]
    bout = vec_ref[:, QKV_PAD + FF:QKV_PAD + FF + OUT_PAD]
    o = QKV_PAD + FF + OUT_PAD
    bo = vec_ref[:, o:o + E];   o += VEC_PAD
    g1 = vec_ref[:, o:o + E];   o += VEC_PAD
    be1 = vec_ref[:, o:o + E];  o += VEC_PAD
    g2 = vec_ref[:, o:o + E];   o += VEC_PAD
    be2 = vec_ref[:, o:o + E];  o += VEC_PAD
    b2 = vec_ref[:, o:o + E]

    # ---- fused embedding lookup: token + gender + position, ONE bf16 matmul --
    col = lax.broadcasted_iota(jnp.int32, (R, TBL), 1)
    row = lax.broadcasted_iota(jnp.int32, (R, TBL), 0)
    tok_id = ids_ref[:, 0:1]                                  # (R, 1)
    gen_id = ids_ref[:, 1:2] + VOCAB_SIZE                     # (R, 1)
    pos_id = row % seq + (VOCAB_SIZE + GENDER_SIZE)           # (R, TBL)
    multi_hot = ((col == tok_id) | (col == gen_id) | (col == pos_id)
                 ).astype(jnp.bfloat16)                       # (R, TBL) 0/1
    x2 = jnp.dot(multi_hot, table_ref[...],
                 preferred_element_type=jnp.float32)          # (R, E) f32

    # ---- fused QKV projection: one bf16 MXU launch, 128-lane-wide output ----
    qkv = jnp.dot(x2.astype(jnp.bfloat16), wslab_ref[:, 0:QKV_PAD],
                  preferred_element_type=jnp.float32) + bqkv  # (R, 128)

    # ---- per-head 2D MXU attention with static position mask ----------------
    # torch layer is batch_first=False: attention mixes the module's batch dim
    # for each position s, i.e. row r attends to rows r' with r' % seq == r % seq.
    rr = lax.broadcasted_iota(jnp.int32, (R, R), 0)
    cc = lax.broadcasted_iota(jnp.int32, (R, R), 1)
    mask = jnp.where((rr % seq) == (cc % seq), 0.0, NEG_INF).astype(jnp.float32)

    ctx_heads = []
    for h in range(H):                                        # 4 heads, unrolled
        q_h = qkv[:, h * dh:(h + 1) * dh]                     # (R, dh)
        k_h = qkv[:, E + h * dh:E + (h + 1) * dh]             # (R, dh)
        v_h = qkv[:, 2 * E + h * dh:2 * E + (h + 1) * dh]     # (R, dh)
        s_h = jnp.dot(q_h, k_h.T, preferred_element_type=jnp.float32) * scale + mask
        s_h = s_h - jnp.max(s_h, axis=-1, keepdims=True)
        p_h = jnp.exp(s_h)
        p_h = p_h * pl.reciprocal(jnp.sum(p_h, axis=-1, keepdims=True), approx=True)
        ctx_heads.append(jnp.dot(p_h, v_h, preferred_element_type=jnp.float32))
    ctx = jnp.concatenate(ctx_heads, axis=-1)                 # (R, E)

    wo = wslab_ref[:, QKV_PAD + FF + OUT_PAD:QKV_PAD + FF + OUT_PAD + E]
    attn_out = jnp.dot(ctx.astype(jnp.bfloat16), wo,
                       preferred_element_type=jnp.float32) + bo

    # residual + LayerNorm1 (dropout == identity in eval mode)
    h1 = _layer_norm(x2 + attn_out, g1, be1)

    # ---- feed-forward: bf16 MXU operands, f32 accumulate; elementwise f32 ----
    f = jnp.dot(h1.astype(jnp.bfloat16), wslab_ref[:, QKV_PAD:QKV_PAD + FF],
                preferred_element_type=jnp.float32) + b1
    f = jnp.maximum(f, 0.0)
    f = jnp.dot(f.astype(jnp.bfloat16), w2_ref[...],
                preferred_element_type=jnp.float32) + b2
    h2 = _layer_norm(h1 + f, g2, be2)

    # ---- output projection, lane-dense 128-wide store (vocab zero-padded) ----
    out_ref[...] = jnp.dot(h2.astype(jnp.bfloat16),
                           wslab_ref[:, QKV_PAD + FF:QKV_PAD + FF + OUT_PAD],
                           preferred_element_type=jnp.float32) + bout


# -------------------------------- wrapper -------------------------------------
@jax.jit
def minimal_transformer_forward(x_tokens, gender_ids, params):
    B, S = x_tokens.shape
    R = B * S

    # Tiny int/id prep only; all embedding math happens inside the kernel.
    tok = x_tokens.reshape(R, 1).astype(jnp.int32)
    gen = jnp.broadcast_to(gender_ids[:, None], (B, S)).reshape(R, 1).astype(jnp.int32)
    ids = jnp.concatenate([tok, gen, jnp.zeros((R, 6), jnp.int32)], axis=1)   # (R, 8)

    kernel = functools.partial(transformer_kernel, batch=B, seq=S)

    out_padded = pl.pallas_call(
        kernel,
        out_shape=jax.ShapeDtypeStruct((R, OUT_PAD), jnp.float32),
        in_specs=[pl.BlockSpec(memory_space=pltpu.MemorySpace.VMEM)] * 5,
        out_specs=pl.BlockSpec(memory_space=pltpu.MemorySpace.VMEM),
        compiler_params=pltpu.CompilerParams(vmem_limit_bytes=8 * 1024 * 1024),
    )(
        ids, params["table_bf16"], params["wslab_bf16"],
        params["w2_bf16"], params["vec_slab"],
    )
    # rows are ordered r = b*S + s, so this is a free reshape (no transpose)
    return out_padded[:, :VOCAB_SIZE].reshape(B, S, VOCAB_SIZE)


# ---------------------------- parameter init -----------------------------------
def init_params(key):
    E, V, G, FF = EMBED_SIZE, VOCAB_SIZE, GENDER_SIZE, DIM_FEEDFORWARD
    ks = jax.random.split(key, 12)

    def rnd(k, shape, scale=0.05):
        return (scale * jax.random.normal(k, shape)).astype(jnp.float32)

    in_proj_w = rnd(ks[3], (3 * E, E))     # torch layout: rows = [Wq; Wk; Wv]
    in_proj_b = rnd(ks[4], (3 * E,))

    p = dict(
        embed=rnd(ks[0], (V, E), 0.1),
        gender_embed=rnd(ks[1], (G, E), 0.1),
        pos_enc=rnd(ks[2], (1, MAX_POS, E), 0.1),
        # weights stored transposed so kernels compute x @ W^T as x @ w_t
        wq_t=in_proj_w[0:E].T,         bq=in_proj_b[0:E].reshape(1, E),
        wk_t=in_proj_w[E:2 * E].T,     bk=in_proj_b[E:2 * E].reshape(1, E),
        wv_t=in_proj_w[2 * E:3 * E].T, bv=in_proj_b[2 * E:3 * E].reshape(1, E),
        wo_t=rnd(ks[5], (E, E)).T,     bo=rnd(ks[6], (E,)).reshape(1, E),
        ln1_g=jnp.ones((1, E), jnp.float32), ln1_b=jnp.zeros((1, E), jnp.float32),
        ln2_g=jnp.ones((1, E), jnp.float32), ln2_b=jnp.zeros((1, E), jnp.float32),
        w1_t=rnd(ks[7], (FF, E)).T,    b1=rnd(ks[8], (FF,)).reshape(1, FF),
        w2_t=rnd(ks[9], (E, FF)).T,    b2=jnp.zeros((1, E), jnp.float32),
        wout_t=rnd(ks[10], (V, E)).T,  bout=rnd(ks[11], (V,)).reshape(1, V),
    )
    p = {k: jnp.asarray(v, jnp.float32) for k, v in p.items()}

    # ---- kernel-friendly fused / packed tensors (bf16 MXU operands) ---------
    # (a) combined embedding table: rows [token(V) | gender(G) | pos(MAX_POS)] -> 128
    table = jnp.concatenate([p["embed"], p["gender_embed"], p["pos_enc"][0]], axis=0)
    table = jnp.pad(table, ((0, TABLE_ROWS - table.shape[0]), (0, 0)))
    p["table_bf16"] = table.astype(jnp.bfloat16)

    # (b) single bf16 weight slab, all sections 128-lane aligned:
    #     [ wqkv (3E -> 128) | w1 (FF) | wout (V -> 128) | wo (E) | pad ]
    wqkv = jnp.concatenate([p["wq_t"], p["wk_t"], p["wv_t"]], axis=1)       # (E, 3E)
    wqkv = jnp.pad(wqkv, ((0, 0), (0, QKV_PAD - 3 * E)))
    wout = jnp.pad(p["wout_t"], ((0, 0), (0, OUT_PAD - V)))
    wslab = jnp.concatenate([wqkv, p["w1_t"], wout, p["wo_t"]], axis=1)
    wslab = jnp.pad(wslab, ((0, 0), (0, WSLAB_WIDTH - wslab.shape[1])))
    p["wslab_bf16"] = wslab.astype(jnp.bfloat16)

    p["w2_bf16"] = p["w2_t"].astype(jnp.bfloat16)

    # (c) single f32 vector slab (biases + LayerNorm params), 128-lane-aligned
    def pad_vec(v):
        return jnp.pad(v, ((0, 0), (0, VEC_PAD - v.shape[1])))
    bqkv = jnp.concatenate([p["bq"], p["bk"], p["bv"]], axis=1)             # (1, 3E)
    p["vec_slab"] = jnp.concatenate([
        pad_vec(bqkv), p["b1"], pad_vec(p["bout"]),
        pad_vec(p["bo"]), pad_vec(p["ln1_g"]), pad_vec(p["ln1_b"]),
        pad_vec(p["ln2_g"]), pad_vec(p["ln2_b"]), pad_vec(p["b2"]),
    ], axis=1)
    return p


# --------------------------- pure-JAX reference --------------------------------
def reference_forward(x_tokens, gender_ids, p):
    B, S = x_tokens.shape
    E, H = EMBED_SIZE, NUM_HEADS
    dh = E // H

    tok = jnp.take(p["embed"], x_tokens, axis=0)                    # (B, S, E)
    gen = jnp.take(p["gender_embed"], gender_ids, axis=0)[:, None, :]
    x = tok + p["pos_enc"][:, :S, :] + gen                          # (L=B, N=S, E)

    xf = x.reshape(B * S, E)
    q = (xf @ p["wq_t"] + p["bq"]).reshape(B, S, H, dh)
    k = (xf @ p["wk_t"] + p["bk"]).reshape(B, S, H, dh)
    v = (xf @ p["wv_t"] + p["bv"]).reshape(B, S, H, dh)
    scores = jnp.einsum("lnhd,mnhd->nhlm", q, k) / math.sqrt(dh)
    attn = jax.nn.softmax(scores, axis=-1)
    ctx = jnp.einsum("nhlm,mnhd->lnhd", attn, v).reshape(B * S, E)
    a_out = ctx @ p["wo_t"] + p["bo"]

    def ln(z, g, b):
        mu = jnp.mean(z, -1, keepdims=True)
        var = jnp.mean((z - mu) ** 2, -1, keepdims=True)
        return (z - mu) / jnp.sqrt(var + LN_EPS) * g + b

    h1 = ln(xf + a_out, p["ln1_g"], p["ln1_b"])
    f = jnp.maximum(h1 @ p["w1_t"] + p["b1"], 0.0) @ p["w2_t"] + p["b2"]
    h2 = ln(h1 + f, p["ln2_g"], p["ln2_b"])
    logits = h2 @ p["wout_t"] + p["bout"]
    return logits.reshape(B, S, VOCAB_SIZE)


# ----------------------------------- main --------------------------------------
if __name__ == "__main__":
    key = jax.random.PRNGKey(0)
    kp, kx, kg = jax.random.split(key, 3)

    params = init_params(kp)
    x_tokens = jax.random.randint(kx, (BATCH, SEQ), 0, VOCAB_SIZE, dtype=jnp.int32)
    gender_ids = jax.random.randint(kg, (BATCH,), 0, GENDER_SIZE, dtype=jnp.int32)

    out = minimal_transformer_forward(x_tokens, gender_ids, params)
    out = jax.block_until_ready(out)
    assert out.shape == (BATCH, SEQ, VOCAB_SIZE)

    # bf16 weight operands + approx reciprocal deviate slightly from the f32
    # reference; comfortably within the 1e-2 tolerance.
    ref = reference_forward(x_tokens, gender_ids, params)
    max_err = float(jnp.max(jnp.abs(out - ref)))
    if max_err > 1e-2:
        raise AssertionError(f"kernel/reference mismatch, max abs err = {max_err}")

    print("KERNEL_OK")
</pallas_src>

<mosaic_0001>
module attributes {stable_mosaic.version = 11 : i64} {
  func.func @transformer_kernel(%arg0: memref<16x8xi32, #tpu.memory_space<vmem>>, %arg1: memref<128x32xbf16, #tpu.memory_space<vmem>>, %arg2: memref<32x2432xbf16, #tpu.memory_space<vmem>>, %arg3: memref<2048x32xbf16, #tpu.memory_space<vmem>>, %arg4: memref<1x3072xf32, #tpu.memory_space<vmem>>, %arg5: memref<16x128xf32, #tpu.memory_space<vmem>>) attributes {dimension_semantics = [], scalar_prefetch = 0 : i64, scratch_operands = 0 : i64, tpu.core_type = #tpu.core_type<tc>} {
    %c0 = arith.constant 0 : index
    %c0_0 = arith.constant 0 : index
    %0 = vector.load %arg4[%c0, %c0_0] : memref<1x3072xf32, #tpu.memory_space<vmem>>, vector<1x128xf32>
    %c0_1 = arith.constant 0 : index
    %c128 = arith.constant 128 : index
    %1 = vector.load %arg4[%c0_1, %c128] : memref<1x3072xf32, #tpu.memory_space<vmem>>, vector<1x2048xf32>
    %c0_2 = arith.constant 0 : index
    %c2176 = arith.constant 2176 : index
    %2 = vector.load %arg4[%c0_2, %c2176] : memref<1x3072xf32, #tpu.memory_space<vmem>>, vector<1x128xf32>
    %c0_3 = arith.constant 0 : index
    %c2304 = arith.constant 2304 : index
    %3 = vector.load %arg4[%c0_3, %c2304] : memref<1x3072xf32, #tpu.memory_space<vmem>>, vector<1x32xf32>
    %c0_4 = arith.constant 0 : index
    %c2432 = arith.constant 2432 : index
    %4 = vector.load %arg4[%c0_4, %c2432] : memref<1x3072xf32, #tpu.memory_space<vmem>>, vector<1x32xf32>
    %c0_5 = arith.constant 0 : index
    %c2560 = arith.constant 2560 : index
    %5 = vector.load %arg4[%c0_5, %c2560] : memref<1x3072xf32, #tpu.memory_space<vmem>>, vector<1x32xf32>
    %c0_6 = arith.constant 0 : index
    %c2688 = arith.constant 2688 : index
    %6 = vector.load %arg4[%c0_6, %c2688] : memref<1x3072xf32, #tpu.memory_space<vmem>>, vector<1x32xf32>
    %c0_7 = arith.constant 0 : index
    %c2816 = arith.constant 2816 : index
    %7 = vector.load %arg4[%c0_7, %c2816] : memref<1x3072xf32, #tpu.memory_space<vmem>>, vector<1x32xf32>
    %c0_8 = arith.constant 0 : index
    %c2944 = arith.constant 2944 : index
    %8 = vector.load %arg4[%c0_8, %c2944] : memref<1x3072xf32, #tpu.memory_space<vmem>>, vector<1x32xf32>
    %9 = tpu.iota {dimensions = array<i32: 1>} : vector<16x128xi32>
    %10 = tpu.iota {dimensions = array<i32: 0>} : vector<16x128xi32>
    %c0_9 = arith.constant 0 : index
    %c0_10 = arith.constant 0 : index
    %11 = vector.load %arg0[%c0_9, %c0_10] : memref<16x8xi32, #tpu.memory_space<vmem>>, vector<16x1xi32>
    %c0_11 = arith.constant 0 : index
    %c1 = arith.constant 1 : index
    %12 = vector.load %arg0[%c0_11, %c1] : memref<16x8xi32, #tpu.memory_space<vmem>>, vector<16x1xi32>
    %c16_i32 = arith.constant 16 : i32
    %13 = vector.broadcast %c16_i32 : i32 to vector<16x1xi32>
    %14 = arith.addi %12, %13 : vector<16x1xi32>
    %c8_i32 = arith.constant 8 : i32
    %c0_i32 = arith.constant 0 : i32
    %15 = arith.cmpi eq, %c8_i32, %c0_i32 : i32
    %c1_i32 = arith.constant 1 : i32
    %16 = arith.select %15, %c1_i32, %c8_i32 : i32
    %17 = vector.broadcast %16 : i32 to vector<16x128xi32>
    %18 = arith.remsi %10, %17 : vector<16x128xi32>
    %c0_i32_12 = arith.constant 0 : i32
    %19 = vector.broadcast %c0_i32_12 : i32 to vector<16x128xi32>
    %20 = arith.cmpi ne, %18, %19 : vector<16x128xi32>
    %c0_i32_13 = arith.constant 0 : i32
    %21 = vector.broadcast %c0_i32_13 : i32 to vector<16x128xi32>
    %22 = arith.cmpi slt, %18, %21 : vector<16x128xi32>
    %c0_i32_14 = arith.constant 0 : i32
    %23 = arith.cmpi slt, %16, %c0_i32_14 : i32
    %24 = vector.broadcast %23 : i1 to vector<16x128xi1>
    %25 = vector.broadcast %24 : vector<16x128xi1> to vector<16x128xi1>
    %26 = arith.xori %22, %25 : vector<16x128xi1>
    %27 = arith.andi %26, %20 : vector<16x128xi1>
    %28 = vector.broadcast %16 : i32 to vector<16x128xi32>
    %29 = arith.addi %18, %28 : vector<16x128xi32>
    %30 = arith.select %27, %29, %18 : vector<16x128xi1>, vector<16x128xi32>
    %c18_i32 = arith.constant 18 : i32
    %31 = vector.broadcast %c18_i32 : i32 to vector<16x128xi32>
    %32 = arith.addi %30, %31 : vector<16x128xi32>
    %33 = vector.broadcast %11 : vector<16x1xi32> to vector<16x128xi32>
    %34 = arith.cmpi eq, %9, %33 : vector<16x128xi32>
    %35 = vector.broadcast %14 : vector<16x1xi32> to vector<16x128xi32>
    %36 = arith.cmpi eq, %9, %35 : vector<16x128xi32>
    %37 = arith.ori %34, %36 : vector<16x128xi1>
    %38 = arith.cmpi eq, %9, %32 : vector<16x128xi32>
    %39 = arith.ori %37, %38 : vector<16x128xi1>
    %40 = arith.extui %39 : vector<16x128xi1> to vector<16x128xi32>
    %41 = arith.sitofp %40 : vector<16x128xi32> to vector<16x128xf32>
    %42 = arith.truncf %41 : vector<16x128xf32> to vector<16x128xbf16>
    %c0_15 = arith.constant 0 : index
    %c0_16 = arith.constant 0 : index
    %43 = vector.load %arg1[%c0_15, %c0_16] : memref<128x32xbf16, #tpu.memory_space<vmem>>, vector<128x32xbf16>
    %cst = arith.constant dense<0.000000e+00> : vector<16x32xf32>
    %44 = tpu.matmul %42, %43, %cst {dimension_numbers = #tpu.dot_dimension_numbers<[1], [0], [0], [1], [0, 0, 1, 1], [], []>} : vector<16x128xbf16>, vector<128x32xbf16>, vector<16x32xf32> -> vector<16x32xf32>
    %45 = arith.truncf %44 : vector<16x32xf32> to vector<16x32xbf16>
    %c0_17 = arith.constant 0 : index
    %c0_18 = arith.constant 0 : index
    %46 = vector.load %arg2[%c0_17, %c0_18] : memref<32x2432xbf16, #tpu.memory_space<vmem>>, vector<32x128xbf16>
    %cst_19 = arith.constant dense<0.000000e+00> : vector<16x128xf32>
    %47 = tpu.matmul %45, %46, %cst_19 {dimension_numbers = #tpu.dot_dimension_numbers<[1], [0], [0], [1], [0, 0, 1, 1], [], []>} : vector<16x32xbf16>, vector<32x128xbf16>, vector<16x128xf32> -> vector<16x128xf32>
    %48 = vector.broadcast %0 : vector<1x128xf32> to vector<16x128xf32>
    %49 = arith.addf %47, %48 : vector<16x128xf32>
    %50 = tpu.iota {dimensions = array<i32: 0>} : vector<16x16xi32>
    %51 = tpu.iota {dimensions = array<i32: 1>} : vector<16x16xi32>
    %c8_i32_20 = arith.constant 8 : i32
    %c0_i32_21 = arith.constant 0 : i32
    %52 = arith.cmpi eq, %c8_i32_20, %c0_i32_21 : i32
    %c1_i32_22 = arith.constant 1 : i32
    %53 = arith.select %52, %c1_i32_22, %c8_i32_20 : i32
    %54 = vector.broadcast %53 : i32 to vector<16x16xi32>
    %55 = arith.remsi %50, %54 : vector<16x16xi32>
    %c0_i32_23 = arith.constant 0 : i32
    %56 = vector.broadcast %c0_i32_23 : i32 to vector<16x16xi32>
    %57 = arith.cmpi ne, %55, %56 : vector<16x16xi32>
    %c0_i32_24 = arith.constant 0 : i32
    %58 = vector.broadcast %c0_i32_24 : i32 to vector<16x16xi32>
    %59 = arith.cmpi slt, %55, %58 : vector<16x16xi32>
    %c0_i32_25 = arith.constant 0 : i32
    %60 = arith.cmpi slt, %53, %c0_i32_25 : i32
    %61 = vector.broadcast %60 : i1 to vector<16x16xi1>
    %62 = vector.broadcast %61 : vector<16x16xi1> to vector<16x16xi1>
    %63 = arith.xori %59, %62 : vector<16x16xi1>
    %64 = arith.andi %63, %57 : vector<16x16xi1>
    %65 = vector.broadcast %53 : i32 to vector<16x16xi32>
    %66 = arith.addi %55, %65 : vector<16x16xi32>
    %67 = arith.select %64, %66, %55 : vector<16x16xi1>, vector<16x16xi32>
    %c8_i32_26 = arith.constant 8 : i32
    %c0_i32_27 = arith.constant 0 : i32
    %68 = arith.cmpi eq, %c8_i32_26, %c0_i32_27 : i32
    %c1_i32_28 = arith.constant 1 : i32
    %69 = arith.select %68, %c1_i32_28, %c8_i32_26 : i32
    %70 = vector.broadcast %69 : i32 to vector<16x16xi32>
    %71 = arith.remsi %51, %70 : vector<16x16xi32>
    %c0_i32_29 = arith.constant 0 : i32
    %72 = vector.broadcast %c0_i32_29 : i32 to vector<16x16xi32>
    %73 = arith.cmpi ne, %71, %72 : vector<16x16xi32>
    %c0_i32_30 = arith.constant 0 : i32
    %74 = vector.broadcast %c0_i32_30 : i32 to vector<16x16xi32>
    %75 = arith.cmpi slt, %71, %74 : vector<16x16xi32>
    %c0_i32_31 = arith.constant 0 : i32
    %76 = arith.cmpi slt, %69, %c0_i32_31 : i32
    %77 = vector.broadcast %76 : i1 to vector<16x16xi1>
    %78 = vector.broadcast %77 : vector<16x16xi1> to vector<16x16xi1>
    %79 = arith.xori %75, %78 : vector<16x16xi1>
    %80 = arith.andi %79, %73 : vector<16x16xi1>
    %81 = vector.broadcast %69 : i32 to vector<16x16xi32>
    %82 = arith.addi %71, %81 : vector<16x16xi32>
    %83 = arith.select %80, %82, %71 : vector<16x16xi1>, vector<16x16xi32>
    %84 = arith.cmpi eq, %67, %83 : vector<16x16xi32>
    %cst_32 = arith.constant 0.000000e+00 : f32
    %cst_33 = arith.constant -1.000000e+30 : f32
    %85 = vector.broadcast %cst_32 : f32 to vector<16x16xf32>
    %86 = vector.broadcast %cst_33 : f32 to vector<16x16xf32>
    %87 = arith.select %84, %85, %86 : vector<16x16xi1>, vector<16x16xf32>
    %88 = vector.extract_strided_slice %49 {offsets = [0, 0], sizes = [16, 8], strides = [1, 1]} : vector<16x128xf32> to vector<16x8xf32>
    %89 = vector.extract_strided_slice %49 {offsets = [0, 32], sizes = [16, 8], strides = [1, 1]} : vector<16x128xf32> to vector<16x8xf32>
    %90 = vector.extract_strided_slice %49 {offsets = [0, 64], sizes = [16, 8], strides = [1, 1]} : vector<16x128xf32> to vector<16x8xf32>
    %91 = tpu.transpose %89, [1, 0] : vector<16x8xf32> -> vector<8x16xf32>
    %cst_34 = arith.constant dense<0.000000e+00> : vector<16x16xf32>
    %92 = tpu.matmul %88, %91, %cst_34 {dimension_numbers = #tpu.dot_dimension_numbers<[1], [0], [0], [1], [0, 0, 1, 1], [], []>} : vector<16x8xf32>, vector<8x16xf32>, vector<16x16xf32> -> vector<16x16xf32>
    %cst_35 = arith.constant 0.353553385 : f32
    %93 = vector.broadcast %cst_35 : f32 to vector<16x16xf32>
    %94 = arith.mulf %92, %93 : vector<16x16xf32>
    %95 = arith.addf %94, %87 : vector<16x16xf32>
    %cst_36 = arith.constant dense<0xFF800000> : vector<16xf32>
    %96 = vector.multi_reduction <maximumf>, %95, %cst_36 [1] : vector<16x16xf32> to vector<16xf32>
    %97 = vector.shape_cast %96 : vector<16xf32> to vector<16x1xf32>
    %98 = vector.broadcast %97 : vector<16x1xf32> to vector<16x16xf32>
    %99 = arith.subf %95, %98 : vector<16x16xf32>
    %100 = math.exp %99 : vector<16x16xf32>
    %cst_37 = arith.constant dense<0.000000e+00> : vector<16xf32>
    %101 = vector.multi_reduction <add>, %100, %cst_37 [1] : vector<16x16xf32> to vector<16xf32>
    %102 = vector.shape_cast %101 : vector<16xf32> to vector<16x1xf32>
    %103 = tpu.reciprocal %102 {approx = true} : vector<16x1xf32> -> vector<16x1xf32>
    %104 = vector.broadcast %103 : vector<16x1xf32> to vector<16x16xf32>
    %105 = arith.mulf %100, %104 : vector<16x16xf32>
    %cst_38 = arith.constant dense<0.000000e+00> : vector<16x8xf32>
    %106 = tpu.matmul %105, %90, %cst_38 {dimension_numbers = #tpu.dot_dimension_numbers<[1], [0], [0], [1], [0, 0, 1, 1], [], []>} : vector<16x16xf32>, vector<16x8xf32>, vector<16x8xf32> -> vector<16x8xf32>
    %107 = vector.extract_strided_slice %49 {offsets = [0, 8], sizes = [16, 8], strides = [1, 1]} : vector<16x128xf32> to vector<16x8xf32>
    %108 = vector.extract_strided_slice %49 {offsets = [0, 40], sizes = [16, 8], strides = [1, 1]} : vector<16x128xf32> to vector<16x8xf32>
    %109 = vector.extract_strided_slice %49 {offsets = [0, 72], sizes = [16, 8], strides = [1, 1]} : vector<16x128xf32> to vector<16x8xf32>
    %110 = tpu.transpose %108, [1, 0] : vector<16x8xf32> -> vector<8x16xf32>
    %cst_39 = arith.constant dense<0.000000e+00> : vector<16x16xf32>
    %111 = tpu.matmul %107, %110, %cst_39 {dimension_numbers = #tpu.dot_dimension_numbers<[1], [0], [0], [1], [0, 0, 1, 1], [], []>} : vector<16x8xf32>, vector<8x16xf32>, vector<16x16xf32> -> vector<16x16xf32>
    %cst_40 = arith.constant 0.353553385 : f32
    %112 = vector.broadcast %cst_40 : f32 to vector<16x16xf32>
    %113 = arith.mulf %111, %112 : vector<16x16xf32>
    %114 = arith.addf %113, %87 : vector<16x16xf32>
    %cst_41 = arith.constant dense<0xFF800000> : vector<16xf32>
    %115 = vector.multi_reduction <maximumf>, %114, %cst_41 [1] : vector<16x16xf32> to vector<16xf32>
    %116 = vector.shape_cast %115 : vector<16xf32> to vector<16x1xf32>
    %117 = vector.broadcast %116 : vector<16x1xf32> to vector<16x16xf32>
    %118 = arith.subf %114, %117 : vector<16x16xf32>
    %119 = math.exp %118 : vector<16x16xf32>
    %cst_42 = arith.constant dense<0.000000e+00> : vector<16xf32>
    %120 = vector.multi_reduction <add>, %119, %cst_42 [1] : vector<16x16xf32> to vector<16xf32>
    %121 = vector.shape_cast %120 : vector<16xf32> to vector<16x1xf32>
    %122 = tpu.reciprocal %121 {approx = true} : vector<16x1xf32> -> vector<16x1xf32>
    %123 = vector.broadcast %122 : vector<16x1xf32> to vector<16x16xf32>
    %124 = arith.mulf %119, %123 : vector<16x16xf32>
    %cst_43 = arith.constant dense<0.000000e+00> : vector<16x8xf32>
    %125 = tpu.matmul %124, %109, %cst_43 {dimension_numbers = #tpu.dot_dimension_numbers<[1], [0], [0], [1], [0, 0, 1, 1], [], []>} : vector<16x16xf32>, vector<16x8xf32>, vector<16x8xf32> -> vector<16x8xf32>
    %126 = vector.extract_strided_slice %49 {offsets = [0, 16], sizes = [16, 8], strides = [1, 1]} : vector<16x128xf32> to vector<16x8xf32>
    %127 = vector.extract_strided_slice %49 {offsets = [0, 48], sizes = [16, 8], strides = [1, 1]} : vector<16x128xf32> to vector<16x8xf32>
    %128 = vector.extract_strided_slice %49 {offsets = [0, 80], sizes = [16, 8], strides = [1, 1]} : vector<16x128xf32> to vector<16x8xf32>
    %129 = tpu.transpose %127, [1, 0] : vector<16x8xf32> -> vector<8x16xf32>
    %cst_44 = arith.constant dense<0.000000e+00> : vector<16x16xf32>
    %130 = tpu.matmul %126, %129, %cst_44 {dimension_numbers = #tpu.dot_dimension_numbers<[1], [0], [0], [1], [0, 0, 1, 1], [], []>} : vector<16x8xf32>, vector<8x16xf32>, vector<16x16xf32> -> vector<16x16xf32>
    %cst_45 = arith.constant 0.353553385 : f32
    %131 = vector.broadcast %cst_45 : f32 to vector<16x16xf32>
    %132 = arith.mulf %130, %131 : vector<16x16xf32>
    %133 = arith.addf %132, %87 : vector<16x16xf32>
    %cst_46 = arith.constant dense<0xFF800000> : vector<16xf32>
    %134 = vector.multi_reduction <maximumf>, %133, %cst_46 [1] : vector<16x16xf32> to vector<16xf32>
    %135 = vector.shape_cast %134 : vector<16xf32> to vector<16x1xf32>
    %136 = vector.broadcast %135 : vector<16x1xf32> to vector<16x16xf32>
    %137 = arith.subf %133, %136 : vector<16x16xf32>
    %138 = math.exp %137 : vector<16x16xf32>
    %cst_47 = arith.constant dense<0.000000e+00> : vector<16xf32>
    %139 = vector.multi_reduction <add>, %138, %cst_47 [1] : vector<16x16xf32> to vector<16xf32>
    %140 = vector.shape_cast %139 : vector<16xf32> to vector<16x1xf32>
    %141 = tpu.reciprocal %140 {approx = true} : vector<16x1xf32> -> vector<16x1xf32>
    %142 = vector.broadcast %141 : vector<16x1xf32> to vector<16x16xf32>
    %143 = arith.mulf %138, %142 : vector<16x16xf32>
    %cst_48 = arith.constant dense<0.000000e+00> : vector<16x8xf32>
    %144 = tpu.matmul %143, %128, %cst_48 {dimension_numbers = #tpu.dot_dimension_numbers<[1], [0], [0], [1], [0, 0, 1, 1], [], []>} : vector<16x16xf32>, vector<16x8xf32>, vector<16x8xf32> -> vector<16x8xf32>
    %145 = vector.extract_strided_slice %49 {offsets = [0, 24], sizes = [16, 8], strides = [1, 1]} : vector<16x128xf32> to vector<16x8xf32>
    %146 = vector.extract_strided_slice %49 {offsets = [0, 56], sizes = [16, 8], strides = [1, 1]} : vector<16x128xf32> to vector<16x8xf32>
    %147 = vector.extract_strided_slice %49 {offsets = [0, 88], sizes = [16, 8], strides = [1, 1]} : vector<16x128xf32> to vector<16x8xf32>
    %148 = tpu.transpose %146, [1, 0] : vector<16x8xf32> -> vector<8x16xf32>
    %cst_49 = arith.constant dense<0.000000e+00> : vector<16x16xf32>
    %149 = tpu.matmul %145, %148, %cst_49 {dimension_numbers = #tpu.dot_dimension_numbers<[1], [0], [0], [1], [0, 0, 1, 1], [], []>} : vector<16x8xf32>, vector<8x16xf32>, vector<16x16xf32> -> vector<16x16xf32>
    %cst_50 = arith.constant 0.353553385 : f32
    %150 = vector.broadcast %cst_50 : f32 to vector<16x16xf32>
    %151 = arith.mulf %149, %150 : vector<16x16xf32>
    %152 = arith.addf %151, %87 : vector<16x16xf32>
    %cst_51 = arith.constant dense<0xFF800000> : vector<16xf32>
    %153 = vector.multi_reduction <maximumf>, %152, %cst_51 [1] : vector<16x16xf32> to vector<16xf32>
    %154 = vector.shape_cast %153 : vector<16xf32> to vector<16x1xf32>
    %155 = vector.broadcast %154 : vector<16x1xf32> to vector<16x16xf32>
    %156 = arith.subf %152, %155 : vector<16x16xf32>
    %157 = math.exp %156 : vector<16x16xf32>
    %cst_52 = arith.constant dense<0.000000e+00> : vector<16xf32>
    %158 = vector.multi_reduction <add>, %157, %cst_52 [1] : vector<16x16xf32> to vector<16xf32>
    %159 = vector.shape_cast %158 : vector<16xf32> to vector<16x1xf32>
    %160 = tpu.reciprocal %159 {approx = true} : vector<16x1xf32> -> vector<16x1xf32>
    %161 = vector.broadcast %160 : vector<16x1xf32> to vector<16x16xf32>
    %162 = arith.mulf %157, %161 : vector<16x16xf32>
    %cst_53 = arith.constant dense<0.000000e+00> : vector<16x8xf32>
    %163 = tpu.matmul %162, %147, %cst_53 {dimension_numbers = #tpu.dot_dimension_numbers<[1], [0], [0], [1], [0, 0, 1, 1], [], []>} : vector<16x16xf32>, vector<16x8xf32>, vector<16x8xf32> -> vector<16x8xf32>
    %164 = tpu.concatenate %106, %125, %144, %163 in 1 : vector<16x8xf32>, vector<16x8xf32>, vector<16x8xf32>, vector<16x8xf32> -> vector<16x32xf32>
    %c0_54 = arith.constant 0 : index
    %c2304_55 = arith.constant 2304 : index
    %165 = vector.load %arg2[%c0_54, %c2304_55] : memref<32x2432xbf16, #tpu.memory_space<vmem>>, vector<32x32xbf16>
    %166 = arith.truncf %164 : vector<16x32xf32> to vector<16x32xbf16>
    %cst_56 = arith.constant dense<0.000000e+00> : vector<16x32xf32>
    %167 = tpu.matmul %166, %165, %cst_56 {dimension_numbers = #tpu.dot_dimension_numbers<[1], [0], [0], [1], [0, 0, 1, 1], [], []>} : vector<16x32xbf16>, vector<32x32xbf16>, vector<16x32xf32> -> vector<16x32xf32>
    %168 = vector.broadcast %3 : vector<1x32xf32> to vector<16x32xf32>
    %169 = arith.addf %167, %168 : vector<16x32xf32>
    %170 = arith.addf %44, %169 : vector<16x32xf32>
    %cst_57 = arith.constant dense<0.000000e+00> : vector<16xf32>
    %171 = vector.multi_reduction <add>, %170, %cst_57 [1] : vector<16x32xf32> to vector<16xf32>
    %172 = vector.shape_cast %171 : vector<16xf32> to vector<16x1xf32>
    %cst_58 = arith.constant 3.200000e+01 : f32
    %173 = vector.broadcast %cst_58 : f32 to vector<16x1xf32>
    %174 = arith.divf %172, %173 : vector<16x1xf32>
    %175 = vector.broadcast %174 : vector<16x1xf32> to vector<16x32xf32>
    %176 = arith.subf %170, %175 : vector<16x32xf32>
    %177 = arith.mulf %176, %176 : vector<16x32xf32>
    %cst_59 = arith.constant dense<0.000000e+00> : vector<16xf32>
    %178 = vector.multi_reduction <add>, %177, %cst_59 [1] : vector<16x32xf32> to vector<16xf32>
    %179 = vector.shape_cast %178 : vector<16xf32> to vector<16x1xf32>
    %cst_60 = arith.constant 3.200000e+01 : f32
    %180 = vector.broadcast %cst_60 : f32 to vector<16x1xf32>
    %181 = arith.divf %179, %180 : vector<16x1xf32>
    %182 = vector.broadcast %174 : vector<16x1xf32> to vector<16x32xf32>
    %183 = arith.subf %170, %182 : vector<16x32xf32>
    %cst_61 = arith.constant 9.99999974E-6 : f32
    %184 = vector.broadcast %cst_61 : f32 to vector<16x1xf32>
    %185 = arith.addf %181, %184 : vector<16x1xf32>
    %186 = math.rsqrt %185 : vector<16x1xf32>
    %187 = vector.broadcast %186 : vector<16x1xf32> to vector<16x32xf32>
    %188 = arith.mulf %183, %187 : vector<16x32xf32>
    %189 = vector.broadcast %4 : vector<1x32xf32> to vector<16x32xf32>
    %190 = arith.mulf %188, %189 : vector<16x32xf32>
    %191 = vector.broadcast %5 : vector<1x32xf32> to vector<16x32xf32>
    %192 = arith.addf %190, %191 : vector<16x32xf32>
    %193 = arith.truncf %192 : vector<16x32xf32> to vector<16x32xbf16>
    %c0_62 = arith.constant 0 : index
    %c128_63 = arith.constant 128 : index
    %194 = vector.load %arg2[%c0_62, %c128_63] : memref<32x2432xbf16, #tpu.memory_space<vmem>>, vector<32x2048xbf16>
    %cst_64 = arith.constant dense<0.000000e+00> : vector<16x2048xf32>
    %195 = tpu.matmul %193, %194, %cst_64 {dimension_numbers = #tpu.dot_dimension_numbers<[1], [0], [0], [1], [0, 0, 1, 1], [], []>} : vector<16x32xbf16>, vector<32x2048xbf16>, vector<16x2048xf32> -> vector<16x2048xf32>
    %196 = vector.broadcast %1 : vector<1x2048xf32> to vector<16x2048xf32>
    %197 = arith.addf %195, %196 : vector<16x2048xf32>
    %cst_65 = arith.constant 0.000000e+00 : f32
    %198 = vector.broadcast %cst_65 : f32 to vector<16x2048xf32>
    %199 = arith.maximumf %197, %198 : vector<16x2048xf32>
    %200 = arith.truncf %199 : vector<16x2048xf32> to vector<16x2048xbf16>
    %c0_66 = arith.constant 0 : index
    %c0_67 = arith.constant 0 : index
    %201 = vector.load %arg3[%c0_66, %c0_67] : memref<2048x32xbf16, #tpu.memory_space<vmem>>, vector<2048x32xbf16>
    %cst_68 = arith.constant dense<0.000000e+00> : vector<16x32xf32>
    %202 = tpu.matmul %200, %201, %cst_68 {dimension_numbers = #tpu.dot_dimension_numbers<[1], [0], [0], [1], [0, 0, 1, 1], [], []>} : vector<16x2048xbf16>, vector<2048x32xbf16>, vector<16x32xf32> -> vector<16x32xf32>
    %203 = vector.broadcast %8 : vector<1x32xf32> to vector<16x32xf32>
    %204 = arith.addf %202, %203 : vector<16x32xf32>
    %205 = arith.addf %192, %204 : vector<16x32xf32>
    %cst_69 = arith.constant dense<0.000000e+00> : vector<16xf32>
    %206 = vector.multi_reduction <add>, %205, %cst_69 [1] : vector<16x32xf32> to vector<16xf32>
    %207 = vector.shape_cast %206 : vector<16xf32> to vector<16x1xf32>
    %cst_70 = arith.constant 3.200000e+01 : f32
    %208 = vector.broadcast %cst_70 : f32 to vector<16x1xf32>
    %209 = arith.divf %207, %208 : vector<16x1xf32>
    %210 = vector.broadcast %209 : vector<16x1xf32> to vector<16x32xf32>
    %211 = arith.subf %205, %210 : vector<16x32xf32>
    %212 = arith.mulf %211, %211 : vector<16x32xf32>
    %cst_71 = arith.constant dense<0.000000e+00> : vector<16xf32>
    %213 = vector.multi_reduction <add>, %212, %cst_71 [1] : vector<16x32xf32> to vector<16xf32>
    %214 = vector.shape_cast %213 : vector<16xf32> to vector<16x1xf32>
    %cst_72 = arith.constant 3.200000e+01 : f32
    %215 = vector.broadcast %cst_72 : f32 to vector<16x1xf32>
    %216 = arith.divf %214, %215 : vector<16x1xf32>
    %217 = vector.broadcast %209 : vector<16x1xf32> to vector<16x32xf32>
    %218 = arith.subf %205, %217 : vector<16x32xf32>
    %cst_73 = arith.constant 9.99999974E-6 : f32
    %219 = vector.broadcast %cst_73 : f32 to vector<16x1xf32>
    %220 = arith.addf %216, %219 : vector<16x1xf32>
    %221 = math.rsqrt %220 : vector<16x1xf32>
    %222 = vector.broadcast %221 : vector<16x1xf32> to vector<16x32xf32>
    %223 = arith.mulf %218, %222 : vector<16x32xf32>
    %224 = vector.broadcast %6 : vector<1x32xf32> to vector<16x32xf32>
    %225 = arith.mulf %223, %224 : vector<16x32xf32>
    %226 = vector.broadcast %7 : vector<1x32xf32> to vector<16x32xf32>
    %227 = arith.addf %225, %226 : vector<16x32xf32>
    %228 = arith.truncf %227 : vector<16x32xf32> to vector<16x32xbf16>
    %c0_74 = arith.constant 0 : index
    %c2176_75 = arith.constant 2176 : index
    %229 = vector.load %arg2[%c0_74, %c2176_75] : memref<32x2432xbf16, #tpu.memory_space<vmem>>, vector<32x128xbf16>
    %cst_76 = arith.constant dense<0.000000e+00> : vector<16x128xf32>
    %230 = tpu.matmul %228, %229, %cst_76 {dimension_numbers = #tpu.dot_dimension_numbers<[1], [0], [0], [1], [0, 0, 1, 1], [], []>} : vector<16x32xbf16>, vector<32x128xbf16>, vector<16x128xf32> -> vector<16x128xf32>
    %231 = vector.broadcast %2 : vector<1x128xf32> to vector<16x128xf32>
    %232 = arith.addf %230, %231 : vector<16x128xf32>
    %c0_77 = arith.constant 0 : index
    %c0_78 = arith.constant 0 : index
    %233 = vector.load %arg5[%c0_77, %c0_78] : memref<16x128xf32, #tpu.memory_space<vmem>>, vector<16x128xf32>
    tpu.vector_store %arg5[%c0_77, %c0_78], %232 {strides = array<i32>} : memref<16x128xf32, #tpu.memory_space<vmem>>, vector<16x128xf32>,
    return
  }
}

</mosaic_0001>

<llo_original>
// kernel: minimal_transformer_forward.1
$region0: #{minimal_transformer_forward.1}
  #allocation0 [shape = 'u32[]', space=smem, size = 0x4, offset = 0x4, fixed_abs, tag = 'smem constant byte address 0x4 - core index']
  #allocation1 [shape = 'u32[144,128]{1,0:T(1,128)}', space=vmem, size = 0x12000, scoped, tag = 'internal scratch']
  %s0 = inlined_call_operand.vmem [shape: s32[16,8], index: 0, kind: input, shape index: {}]
  %s1 = inlined_call_operand.vmem [shape: bf16[128,32], index: 1, kind: input, shape index: {}]
  %s2 = inlined_call_operand.vmem [shape: bf16[32,2432], index: 2, kind: input, shape index: {}]
  %s3 = inlined_call_operand.vmem [shape: bf16[2048,32], index: 3, kind: input, shape index: {}]
  %s4 = inlined_call_operand.vmem [shape: f32[1,3072], index: 4, kind: input, shape index: {}]
  %s5 = inlined_call_operand.vmem [shape: f32[16,128], index: 5, kind: output, shape index: {}]
  %s6 = sld [smem:[#allocation0]]
  $region30: #{minimal_transformer_forward.1} parent=0
    _
  %s8 = ssub.s32 1, %s6
  %s9 = scalar_select 0, %s8, %s6
  // Predicated region
  $region2: #{minimal_transformer_forward.1} parent=0 // pred_check
    _
  $region3: #{minimal_transformer_forward.1} parent=0 // pred_check_branch
    %11 = sbr.rel (0) target = $region5
  $region4: #{minimal_transformer_forward.1} parent=0 // pred_region
    _
  $region5: #{minimal_transformer_forward.1} parent=0 // pred_fallthru
    _
  // Predicated region
  $region6: #{minimal_transformer_forward.1} parent=0 // pred_check
    _
  $region7: #{minimal_transformer_forward.1} parent=0 // pred_check_branch
    %13 = sbr.rel (0) target = $region9
  $region8: #{minimal_transformer_forward.1} parent=0 // pred_region
    _
  $region9: #{minimal_transformer_forward.1} parent=0 // pred_fallthru
    _
  // Predicated region
  $region10: #{minimal_transformer_forward.1} parent=0 // pred_check
    _
  $region11: #{minimal_transformer_forward.1} parent=0 // pred_check_branch
    %15 = sbr.rel (0) target = $region13
  $region12: #{minimal_transformer_forward.1} parent=0 // pred_region
    _
  $region13: #{minimal_transformer_forward.1} parent=0 // pred_fallthru
    _
  // Predicated region
  $region14: #{minimal_transformer_forward.1} parent=0 // pred_check
    _
  $region15: #{minimal_transformer_forward.1} parent=0 // pred_check_branch
    %17 = sbr.rel (0) target = $region17
  $region16: #{minimal_transformer_forward.1} parent=0 // pred_region
    _
  $region17: #{minimal_transformer_forward.1} parent=0 // pred_fallthru
    _
  // Predicated region
  $region18: #{minimal_transformer_forward.1} parent=0 // pred_check
    _
  $region19: #{minimal_transformer_forward.1} parent=0 // pred_check_branch
    %19 = sbr.rel (0) target = $region21
  $region20: #{minimal_transformer_forward.1} parent=0 // pred_region
    _
  $region21: #{minimal_transformer_forward.1} parent=0 // pred_fallthru
    _
  %v21 = vld [vmem:[%s4] sm:$0x1]
  %v22 = vld [vmem:[%s4 + $0x1] sm:$0xff]
  %v23 = vld [vmem:[%s4 + $0x9] sm:$0xff]
  %v24 = vld [vmem:[%s4 + $0x11] sm:$0x1]
  %v25 = vld [vmem:[%s4 + $0x12] sm:$0x1]
  %v26 = vld [vmem:[%s4 + $0x13] sm:$0x1]
  %v27 = vld [vmem:[%s4 + $0x14] sm:$0x1]
  %v28 = vld [vmem:[%s4 + $0x15] sm:$0x1]
  %v29 = vld [vmem:[%s4 + $0x16] sm:$0x1]
  %v30 = vld [vmem:[%s4 + $0x17] sm:$0x1]
  %v31 = vlaneseq
  %v32 = vand.u32 %v31, 127
  %v33 = vlaneseq
  %v34 = vshrl.u32 %v33, 7
  %v35 = vadd.s32 %v34, 8
  %v36 = vld [vmem:[%s0] sm:$0xff]
  %v37 = vld [vmem:[%s0 + $0x8] sm:$0xff]
  %v38 = vadd.s32 %v36, 16
  %v39 = vadd.s32 %v37, 16
  %vm40 = vcmp.lt.s32.totalorder %v34, 0
  %v41 = vsub.s32 0, %v34
  %v42 = vsel %vm40, %v41, %v34
  %v43 = vshrl.u32 %v42, 3
  %v44 = vand.u32 %v42, 7
  %v45 = vsub.s32 0, %v44
  %v46 = vsel %vm40, %v45, %v44
  %vm47 = vcmp.lt.s32.totalorder %v35, 0
  %v48 = vsub.s32 0, %v35
  %v49 = vsel %vm47, %v48, %v35
  %v50 = vshrl.u32 %v49, 3
  %v51 = vand.u32 %v49, 7
  %v52 = vsub.s32 0, %v51
  %v53 = vsel %vm47, %v52, %v51
  %vm54 = vcmp.ne.s32.totalorder %v46, 0
  %vm55 = vcmp.ne.s32.totalorder %v53, 0
  %vm56 = vcmp.lt.s32.totalorder %v46, 0
  %vm57 = vcmp.lt.s32.totalorder %v53, 0
  %vm58 = vmand %vm56, %vm54
  %vm59 = vmand %vm57, %vm55
  %v60 = vadd.s32 %v46, 8
  %v61 = vadd.s32 %v53, 8
  %v62 = vsel %vm58, %v60, %v46
  %v63 = vsel %vm59, %v61, %v53
  %v64 = vadd.s32 %v62, 18
  %v65 = vadd.s32 %v63, 18
  %66 = vset.pattern.permute.xlu0 0
  %67 = vperm.xlu0 %66, %v36
  %v68 = vpop.permute.xlu0 %67
  %69 = vset.pattern.permute.xlu0 0
  %70 = vperm.xlu0 %69, %v37
  %v71 = vpop.permute.xlu0 %70
  %vm72 = vcmp.eq.s32.totalorder %v32, %v68
  %vm73 = vcmp.eq.s32.totalorder %v32, %v71
  %74 = vset.pattern.permute.xlu0 1
  %75 = vperm.xlu0 %74, %v38
  %v76 = vpop.permute.xlu0 %75
  %77 = vset.pattern.permute.xlu0 1
  %78 = vperm.xlu0 %77, %v39
  %v79 = vpop.permute.xlu0 %78
  %vm80 = vcmp.eq.s32.totalorder %v32, %v76
  %vm81 = vcmp.eq.s32.totalorder %v32, %v79
  %vm82 = vmor %vm72, %vm80
  %vm83 = vmor %vm73, %vm81
  %vm84 = vcmp.eq.s32.totalorder %v32, %v64
  %vm85 = vcmp.eq.s32.totalorder %v32, %v65
  %vm86 = vmor %vm82, %vm84
  %vm87 = vmor %vm83, %vm85
  %v88 = vsel %vm86, 1, 0
  %v89 = vsel %vm87, 1, 0
  %v90 = vcvt.s32.f32 %v88
  %v91 = vcvt.s32.f32 %v89
  %v92 = vpack.c.bf16 %v91, %v90
  %v93 = vld [vmem:[%s1] sm:$0xf]
  %v94 = vld [vmem:[%s1 + $0x4] sm:$0xf]
  %v95 = vld [vmem:[%s1 + $0x8] sm:$0xf]
  %v96 = vld [vmem:[%s1 + $0xc] sm:$0xf]
  %v97 = vld [vmem:[%s1 + $0x10] sm:$0xf]
  %v98 = vld [vmem:[%s1 + $0x14] sm:$0xf]
  %v99 = vld [vmem:[%s1 + $0x18] sm:$0xf]
  %v100 = vld [vmem:[%s1 + $0x1c] sm:$0xf]
  %v101 = vld [vmem:[%s1 + $0x20] sm:$0xf]
  %v102 = vld [vmem:[%s1 + $0x24] sm:$0xf]
  %v103 = vld [vmem:[%s1 + $0x28] sm:$0xf]
  %v104 = vld [vmem:[%s1 + $0x2c] sm:$0xf]
  %v105 = vld [vmem:[%s1 + $0x30] sm:$0xf]
  %v106 = vld [vmem:[%s1 + $0x34] sm:$0xf]
  %v107 = vld [vmem:[%s1 + $0x38] sm:$0xf]
  %v108 = vld [vmem:[%s1 + $0x3c] sm:$0xf]
  %v125 = vunpack.c.l.b16 %v93
  %v126 = vunpack.c.l.b16 %v94
  %v127 = vunpack.c.l.b16 %v95
  %v128 = vunpack.c.l.b16 %v96
  %v129 = vunpack.c.l.b16 %v97
  %v130 = vunpack.c.l.b16 %v98
  %v131 = vunpack.c.l.b16 %v99
  %v132 = vunpack.c.l.b16 %v100
  %v133 = vunpack.c.l.b16 %v101
  %v134 = vunpack.c.l.b16 %v102
  %v135 = vunpack.c.l.b16 %v103
  %v136 = vunpack.c.l.b16 %v104
  %v137 = vunpack.c.l.b16 %v105
  %v138 = vunpack.c.l.b16 %v106
  %v139 = vunpack.c.l.b16 %v107
  %v140 = vunpack.c.l.b16 %v108
  %v141 = vpack.c.b16 %v126, %v125
  %v142 = vpack.c.b16 %v128, %v127
  %v143 = vpack.c.b16 %v130, %v129
  %v144 = vpack.c.b16 %v132, %v131
  %v145 = vpack.c.b16 %v134, %v133
  %v146 = vpack.c.b16 %v136, %v135
  %v147 = vpack.c.b16 %v138, %v137
  %v148 = vpack.c.b16 %v140, %v139
  %157 = vmatprep.subr.bf16.mxu0 0
  %158 = vmatpush1.bf16.msra.mxu0 %v141
  %159 = vmatprep.subr.bf16.mxu0 0
  %160 = vmatpush1.bf16.msra.mxu0 %v142
  %161 = vmatprep.subr.bf16.mxu0 0
  %162 = vmatpush1.bf16.msra.mxu0 %v143
  %163 = vmatprep.subr.bf16.mxu0 0
  %164 = vmatpush1.bf16.msra.mxu0 %v144
  %165 = vmatprep.subr.bf16.mxu0 0
  %166 = vmatpush1.bf16.msra.mxu0 %v145
  %167 = vmatprep.subr.bf16.mxu0 0
  %168 = vmatpush1.bf16.msra.mxu0 %v146
  %169 = vmatprep.subr.bf16.mxu0 0
  %170 = vmatpush1.bf16.msra.mxu0 %v147
  %171 = vmatprep.subr.bf16.mxu0 0
  %172 = vmatpush1.bf16.msra.mxu0 %v148
  %173 = vmatprep.subr.bf16.mxu0 0
  %174 = vmatpush1.bf16.msra.mxu0 0
  %175 = vmatprep.subr.bf16.mxu0 0
  %176 = vmatpush1.bf16.msra.mxu0 0
  %177 = vmatprep.subr.bf16.mxu0 0
  %178 = vmatpush1.bf16.msra.mxu0 0
  %179 = vmatprep.subr.bf16.mxu0 0
  %180 = vmatpush1.bf16.msra.mxu0 0
  %181 = vmatprep.subr.bf16.mxu0 0
  %182 = vmatpush1.bf16.msra.mxu0 0
  %183 = vmatprep.subr.bf16.mxu0 0
  %184 = vmatpush1.bf16.msra.mxu0 0
  %185 = vmatprep.subr.bf16.mxu0 0
  %186 = vmatpush1.bf16.msra.mxu0 0
  %187 = vmatprep.subr.bf16.mxu0 0
  %188 = vmatpush1.bf16.msra.mxu0 0
  %189 = vmatprep.mubr.bf16.mxu0 0
  %190 = vmatmul.mubr.bf16.gmra.mrb[0].mxu0 %v92
  %v191 = vpop.f32.mrb[0].mxu0
  %v192 = vadd.f32 0.0, %v191
  %v193 = vpop.f32.mrb[0].mxu0
  %v194 = vpop.f32.mrb[0].mxu0
  %v195 = vadd.f32 0.0, %v194
  %v196 = vpop.f32.mrb[0].mxu0
  %197 = vdwg.mxu0
  %v198 = vpack.c.bf16 %v195, %v192
  %v199 = vld [vmem:[%s2] sm:$0xf]
  %v200 = vld [vmem:[%s2 + $0x4c] sm:$0xf]
  %v201 = vld [vmem:[%s2 + $0x98] sm:$0xf]
  %v202 = vld [vmem:[%s2 + $0xe4] sm:$0xf]
  %v204 = vlaneseq
  %v205 = vshrl.u32 %v204, 7
  %v206 = vsub.s32 0, %v205
  %v207 = vrot.slane %v21, %v206
  %v213 = vunpack.c.l.b16 %v199
  %v214 = vunpack.c.l.b16 %v200
  %v215 = vunpack.c.l.b16 %v201
  %v216 = vunpack.c.l.b16 %v202
  %v217 = vpack.c.b16 %v214, %v213
  %v218 = vpack.c.b16 %v216, %v215
  %vm221 = vcmask 261120
  %v223 = vsel %vm221, %v198, 0
  %225 = vmatprep.subr.bf16.mxu0 0
  %226 = vmatpush1.bf16.msra.mxu0 %v217
  %227 = vmatprep.subr.bf16.mxu0 0
  %228 = vmatpush1.bf16.msra.mxu0 %v218
  %229 = vmatprep.subr.bf16.mxu0 0
  %230 = vmatpush1.bf16.msra.mxu0 0
  %231 = vmatprep.subr.bf16.mxu0 0
  %232 = vmatpush1.bf16.msra.mxu0 0
  %233 = vmatprep.subr.bf16.mxu0 0
  %234 = vmatpush1.bf16.msra.mxu0 0
  %235 = vmatprep.subr.bf16.mxu0 0
  %236 = vmatpush1.bf16.msra.mxu0 0
  %237 = vmatprep.subr.bf16.mxu0 0
  %238 = vmatpush1.bf16.msra.mxu0 0
  %239 = vmatprep.subr.bf16.mxu0 0
  %240 = vmatpush1.bf16.msra.mxu0 0
  %241 = vmatprep.subr.bf16.mxu0 0
  %242 = vmatpush1.bf16.msra.mxu0 0
  %243 = vmatprep.subr.bf16.mxu0 0
  %244 = vmatpush1.bf16.msra.mxu0 0
  %245 = vmatprep.subr.bf16.mxu0 0
  %246 = vmatpush1.bf16.msra.mxu0 0
  %247 = vmatprep.subr.bf16.mxu0 0
  %248 = vmatpush1.bf16.msra.mxu0 0
  %249 = vmatprep.subr.bf16.mxu0 0
  %250 = vmatpush1.bf16.msra.mxu0 0
  %251 = vmatprep.subr.bf16.mxu0 0
  %252 = vmatpush1.bf16.msra.mxu0 0
  %253 = vmatprep.subr.bf16.mxu0 0
  %254 = vmatpush1.bf16.msra.mxu0 0
  %255 = vmatprep.subr.bf16.mxu0 0
  %256 = vmatpush1.bf16.msra.mxu0 0
  %257 = vmatprep.mubr.bf16.mxu0 0
  %258 = vmatmul.mubr.bf16.gmra.mrb[0].mxu0 %v223
  %v259 = vpop.f32.mrb[0].mxu0
  %v260 = vadd.f32 %v207, %v259
  %v261 = vpop.f32.mrb[0].mxu0
  %v262 = vpop.f32.mrb[0].mxu0
  %v263 = vadd.f32 %v207, %v262
  %v264 = vpop.f32.mrb[0].mxu0
  %265 = vdwg.mxu0
  %vm266 = vcmp.lt.s32.totalorder %v32, 0
  %v267 = vsub.s32 0, %v32
  %v268 = vsel %vm266, %v267, %v32
  %v269 = vshrl.u32 %v268, 3
  %v270 = vand.u32 %v268, 7
  %v271 = vsub.s32 0, %v270
  %v272 = vsel %vm266, %v271, %v270
  %vm273 = vcmp.ne.s32.totalorder %v272, 0
  %vm274 = vcmp.lt.s32.totalorder %v272, 0
  %vm275 = vmand %vm274, %vm273
  %v276 = vadd.s32 %v272, 8
  %v277 = vsel %vm275, %v276, %v272
  %vm278 = vcmp.eq.s32.totalorder %v62, %v277
  %vm279 = vcmp.eq.s32.totalorder %v63, %v277
  %v280 = vsel %vm278, 0.0, -1e+30
  %v281 = vsel %vm279, 0.0, -1e+30
  %284 = vrot.lane.b32.xlu0 %v260, 96
  %v285 = vpop.permute.xlu0 %284
  %286 = vrot.lane.b32.xlu0 %v263, 96
  %v287 = vpop.permute.xlu0 %286
  %vm288 = vcmask 64512
  %v289 = vsel %vm288, %v260, 0
  %v291 = vsel %vm288, %v263, 0
  %v293 = vsel %vm288, %v285, 0
  %v295 = vsel %vm288, %v287, 0
  %297 = vmatprep.subr.mxu0 0.0
  %298 = vmatpush1.xpose.msra.mxu0 %v293
  %299 = vmatprep.subr.mxu0 0.0
  %300 = vmatpush1.xpose.msra.mxu0 %v295
  %301 = vmatprep.subr.mxu0 0.0
  %302 = vmatpush1.xpose.msra.mxu0 0.0
  %303 = vmatprep.subr.mxu0 0.0
  %304 = vmatpush1.xpose.msra.mxu0 0.0
  %305 = vmatprep.subr.mxu0 0.0
  %306 = vmatpush1.xpose.msra.mxu0 0.0
  %307 = vmatprep.subr.mxu0 0.0
  %308 = vmatpush1.xpose.msra.mxu0 0.0
  %309 = vmatprep.subr.mxu0 0.0
  %310 = vmatpush1.xpose.msra.mxu0 0.0
  %311 = vmatprep.subr.mxu0 0.0
  %312 = vmatpush1.xpose.msra.mxu0 0.0
  %313 = vmatprep.subr.mxu0 0.0
  %314 = vmatpush1.xpose.msra.mxu0 0.0
  %315 = vmatprep.subr.mxu0 0.0
  %316 = vmatpush1.xpose.msra.mxu0 0.0
  %317 = vmatprep.subr.mxu0 0.0
  %318 = vmatpush1.xpose.msra.mxu0 0.0
  %319 = vmatprep.subr.mxu0 0.0
  %320 = vmatpush1.xpose.msra.mxu0 0.0
  %321 = vmatprep.subr.mxu0 0.0
  %322 = vmatpush1.xpose.msra.mxu0 0.0
  %323 = vmatprep.subr.mxu0 0.0
  %324 = vmatpush1.xpose.msra.mxu0 0.0
  %325 = vmatprep.subr.mxu0 0.0
  %326 = vmatpush1.xpose.msra.mxu0 0.0
  %327 = vmatprep.subr.mxu0 0.0
  %328 = vmatpush1.xpose.msra.mxu0 0.0
  %329 = vmatprep.subr.mxu0 0.0
  %330 = vmatpush1.xpose.msra.mxu0 0.0
  %331 = vmatprep.subr.mxu0 0.0
  %332 = vmatpush1.xpose.msra.mxu0 0.0
  %333 = vmatprep.subr.mxu0 0.0
  %334 = vmatpush1.xpose.msra.mxu0 0.0
  %335 = vmatprep.subr.mxu0 0.0
  %336 = vmatpush1.xpose.msra.mxu0 0.0
  %337 = vmatprep.subr.mxu0 0.0
  %338 = vmatpush1.xpose.msra.mxu0 0.0
  %339 = vmatprep.subr.mxu0 0.0
  %340 = vmatpush1.xpose.msra.mxu0 0.0
  %341 = vmatprep.subr.mxu0 0.0
  %342 = vmatpush1.xpose.msra.mxu0 0.0
  %343 = vmatprep.subr.mxu0 0.0
  %344 = vmatpush1.xpose.msra.mxu0 0.0
  %345 = vmatprep.subr.mxu0 0.0
  %346 = vmatpush1.xpose.msra.mxu0 0.0
  %347 = vmatprep.subr.mxu0 0.0
  %348 = vmatpush1.xpose.msra.mxu0 0.0
  %349 = vmatprep.subr.mxu0 0.0
  %350 = vmatpush1.xpose.msra.mxu0 0.0
  %351 = vmatprep.subr.mxu0 0.0
  %352 = vmatpush1.xpose.msra.mxu0 0.0
  %353 = vmatprep.subr.mxu0 0.0
  %354 = vmatpush1.xpose.msra.mxu0 0.0
  %355 = vmatprep.subr.mxu0 0.0
  %356 = vmatpush1.xpose.msra.mxu0 0.0
  %357 = vmatprep.subr.mxu0 0.0
  %358 = vmatpush1.xpose.msra.mxu0 0.0
  %359 = vmatprep.subr.mxu0 0.0
  %360 = vmatpush1.xpose.msra.mxu0 0.0
  %361 = vmatprep.mubr.f32.mxu0 0.0
  %362 = vmatmul.mubr.f32.gmra.mrb[0].mxu0 %v289
  %v363 = vpop.f32.mrb[0].mxu0
  %v364 = vadd.f32 0.0, %v363
  %v365 = vpop.f32.mrb[0].mxu0
  %366 = vmatprep.mubr.f32.mxu0 0.0
  %367 = vmatmul.mubr.f32.gmra.mrb[0].mxu0 %v291
  %v368 = vpop.f32.mrb[0].mxu0
  %v369 = vadd.f32 0.0, %v368
  %v370 = vpop.f32.mrb[0].mxu0
  %371 = vdwg.mxu0
  %v372 = vmul.f32 %v364, 0.35355338
  %v373 = vmul.f32 %v369, 0.35355338
  %v374 = vadd.f32 %v372, %v280
  %v375 = vadd.f32 %v373, %v281
  %vm376 = vcmask 130048
  %v377 = vsel %vm376, %v374, -inf
  %378 = vmax.xlane.f32.xlu0 %v377
  %v379 = vpop.xlane.xlu0 %378
  %v380 = vsel %vm376, %v375, -inf
  %381 = vmax.xlane.f32.xlu0 %v380
  %v382 = vpop.xlane.xlu0 %381
  %v383 = vsub.f32 %v374, %v379
  %v384 = vsub.f32 %v375, %v382
  %v385 = vmul.f32 %v383, 1.442695
  %v386 = vpow.pop %v385
  %v387 = vmul.f32 %v384, 1.442695
  %v388 = vpow.pop %v387
  %v389 = vsel %vm376, %v386, 0.0
  %390 = vadd.xlane.f32.xlu0 %v389
  %v391 = vpop.xlane.xlu0 %390
  %v392 = vsel %vm376, %v388, 0.0
  %393 = vadd.xlane.f32.xlu0 %v392
  %v394 = vpop.xlane.xlu0 %393
  %v395 = vrcp.pop %v391
  %v396 = vrcp.pop %v394
  %v397 = vmul.f32 %v386, %v395
  %v398 = vmul.f32 %v388, %v396
  %399 = vrot.lane.b32.xlu0 %v260, 64
  %v400 = vpop.permute.xlu0 %399
  %401 = vrot.lane.b32.xlu0 %v263, 64
  %v402 = vpop.permute.xlu0 %401
  %v406 = vsel %vm376, %v397, 0
  %v409 = vsel %vm376, %v398, 0
  %411 = vmatprep.subr.mxu0 0.0
  %412 = vmatpush1.msra.mxu0 %v400
  %413 = vmatprep.subr.mxu0 0.0
  %414 = vmatpush1.msra.mxu0 %v402
  %415 = vmatprep.subr.mxu0 0.0
  %416 = vmatpush1.msra.mxu0 0.0
  %417 = vmatprep.subr.mxu0 0.0
  %418 = vmatpush1.msra.mxu0 0.0
  %419 = vmatprep.subr.mxu0 0.0
  %420 = vmatpush1.msra.mxu0 0.0
  %421 = vmatprep.subr.mxu0 0.0
  %422 = vmatpush1.msra.mxu0 0.0
  %423 = vmatprep.subr.mxu0 0.0
  %424 = vmatpush1.msra.mxu0 0.0
  %425 = vmatprep.subr.mxu0 0.0
  %426 = vmatpush1.msra.mxu0 0.0
  %427 = vmatprep.subr.mxu0 0.0
  %428 = vmatpush1.msra.mxu0 0.0
  %429 = vmatprep.subr.mxu0 0.0
  %430 = vmatpush1.msra.mxu0 0.0
  %431 = vmatprep.subr.mxu0 0.0
  %432 = vmatpush1.msra.mxu0 0.0
  %433 = vmatprep.subr.mxu0 0.0
  %434 = vmatpush1.msra.mxu0 0.0
  %435 = vmatprep.subr.mxu0 0.0
  %436 = vmatpush1.msra.mxu0 0.0
  %437 = vmatprep.subr.mxu0 0.0
  %438 = vmatpush1.msra.mxu0 0.0
  %439 = vmatprep.subr.mxu0 0.0
  %440 = vmatpush1.msra.mxu0 0.0
  %441 = vmatprep.subr.mxu0 0.0
  %442 = vmatpush1.msra.mxu0 0.0
  %443 = vmatprep.subr.mxu0 0.0
  %444 = vmatpush1.msra.mxu0 0.0
  %445 = vmatprep.subr.mxu0 0.0
  %446 = vmatpush1.msra.mxu0 0.0
  %447 = vmatprep.subr.mxu0 0.0
  %448 = vmatpush1.msra.mxu0 0.0
  %449 = vmatprep.subr.mxu0 0.0
  %450 = vmatpush1.msra.mxu0 0.0
  %451 = vmatprep.subr.mxu0 0.0
  %452 = vmatpush1.msra.mxu0 0.0
  %453 = vmatprep.subr.mxu0 0.0
  %454 = vmatpush1.msra.mxu0 0.0
  %455 = vmatprep.subr.mxu0 0.0
  %456 = vmatpush1.msra.mxu0 0.0
  %457 = vmatprep.subr.mxu0 0.0
  %458 = vmatpush1.msra.mxu0 0.0
  %459 = vmatprep.subr.mxu0 0.0
  %460 = vmatpush1.msra.mxu0 0.0
  %461 = vmatprep.subr.mxu0 0.0
  %462 = vmatpush1.msra.mxu0 0.0
  %463 = vmatprep.subr.mxu0 0.0
  %464 = vmatpush1.msra.mxu0 0.0
  %465 = vmatprep.subr.mxu0 0.0
  %466 = vmatpush1.msra.mxu0 0.0
  %467 = vmatprep.subr.mxu0 0.0
  %468 = vmatpush1.msra.mxu0 0.0
  %469 = vmatprep.subr.mxu0 0.0
  %470 = vmatpush1.msra.mxu0 0.0
  %471 = vmatprep.subr.mxu0 0.0
  %472 = vmatpush1.msra.mxu0 0.0
  %473 = vmatprep.subr.mxu0 0.0
  %474 = vmatpush1.msra.mxu0 0.0
  %475 = vmatprep.mubr.f32.mxu0 0.0
  %476 = vmatmul.mubr.f32.gmra.mrb[0].mxu0 %v406
  %v477 = vpop.f32.mrb[0].mxu0
  %v478 = vadd.f32 0.0, %v477
  %v479 = vpop.f32.mrb[0].mxu0
  %480 = vmatprep.mubr.f32.mxu0 0.0
  %481 = vmatmul.mubr.f32.gmra.mrb[0].mxu0 %v409
  %v482 = vpop.f32.mrb[0].mxu0
  %v483 = vadd.f32 0.0, %v482
  %v484 = vpop.f32.mrb[0].mxu0
  %485 = vdwg.mxu0
  %486 = vrot.lane.b32.xlu0 %v260, 120
  %v487 = vpop.permute.xlu0 %486
  %488 = vrot.lane.b32.xlu0 %v263, 120
  %v489 = vpop.permute.xlu0 %488
  %490 = vrot.lane.b32.xlu0 %v260, 88
  %v491 = vpop.permute.xlu0 %490
  %492 = vrot.lane.b32.xlu0 %v263, 88
  %v493 = vpop.permute.xlu0 %492
  %v494 = vsel %vm288, %v487, 0
  %v496 = vsel %vm288, %v489, 0
  %v498 = vsel %vm288, %v491, 0
  %v500 = vsel %vm288, %v493, 0
  %502 = vmatprep.subr.mxu0 0.0
  %503 = vmatpush1.xpose.msra.mxu0 %v498
  %504 = vmatprep.subr.mxu0 0.0
  %505 = vmatpush1.xpose.msra.mxu0 %v500
  %506 = vmatprep.subr.mxu0 0.0
  %507 = vmatpush1.xpose.msra.mxu0 0.0
  %508 = vmatprep.subr.mxu0 0.0
  %509 = vmatpush1.xpose.msra.mxu0 0.0
  %510 = vmatprep.subr.mxu0 0.0
  %511 = vmatpush1.xpose.msra.mxu0 0.0
  %512 = vmatprep.subr.mxu0 0.0
  %513 = vmatpush1.xpose.msra.mxu0 0.0
  %514 = vmatprep.subr.mxu0 0.0
  %515 = vmatpush1.xpose.msra.mxu0 0.0
  %516 = vmatprep.subr.mxu0 0.0
  %517 = vmatpush1.xpose.msra.mxu0 0.0
  %518 = vmatprep.subr.mxu0 0.0
  %519 = vmatpush1.xpose.msra.mxu0 0.0
  %520 = vmatprep.subr.mxu0 0.0
  %521 = vmatpush1.xpose.msra.mxu0 0.0
  %522 = vmatprep.subr.mxu0 0.0
  %523 = vmatpush1.xpose.msra.mxu0 0.0
  %524 = vmatprep.subr.mxu0 0.0
  %525 = vmatpush1.xpose.msra.mxu0 0.0
  %526 = vmatprep.subr.mxu0 0.0
  %527 = vmatpush1.xpose.msra.mxu0 0.0
  %528 = vmatprep.subr.mxu0 0.0
  %529 = vmatpush1.xpose.msra.mxu0 0.0
  %530 = vmatprep.subr.mxu0 0.0
  %531 = vmatpush1.xpose.msra.mxu0 0.0
  %532 = vmatprep.subr.mxu0 0.0
  %533 = vmatpush1.xpose.msra.mxu0 0.0
  %534 = vmatprep.subr.mxu0 0.0
  %535 = vmatpush1.xpose.msra.mxu0 0.0
  %536 = vmatprep.subr.mxu0 0.0
  %537 = vmatpush1.xpose.msra.mxu0 0.0
  %538 = vmatprep.subr.mxu0 0.0
  %539 = vmatpush1.xpose.msra.mxu0 0.0
  %540 = vmatprep.subr.mxu0 0.0
  %541 = vmatpush1.xpose.msra.mxu0 0.0
  %542 = vmatprep.subr.mxu0 0.0
  %543 = vmatpush1.xpose.msra.mxu0 0.0
  %544 = vmatprep.subr.mxu0 0.0
  %545 = vmatpush1.xpose.msra.mxu0 0.0
  %546 = vmatprep.subr.mxu0 0.0
  %547 = vmatpush1.xpose.msra.mxu0 0.0
  %548 = vmatprep.subr.mxu0 0.0
  %549 = vmatpush1.xpose.msra.mxu0 0.0
  %550 = vmatprep.subr.mxu0 0.0
  %551 = vmatpush1.xpose.msra.mxu0 0.0
  %552 = vmatprep.subr.mxu0 0.0
  %553 = vmatpush1.xpose.msra.mxu0 0.0
  %554 = vmatprep.subr.mxu0 0.0
  %555 = vmatpush1.xpose.msra.mxu0 0.0
  %556 = vmatprep.subr.mxu0 0.0
  %557 = vmatpush1.xpose.msra.mxu0 0.0
  %558 = vmatprep.subr.mxu0 0.0
  %559 = vmatpush1.xpose.msra.mxu0 0.0
  %560 = vmatprep.subr.mxu0 0.0
  %561 = vmatpush1.xpose.msra.mxu0 0.0
  %562 = vmatprep.subr.mxu0 0.0
  %563 = vmatpush1.xpose.msra.mxu0 0.0
  %564 = vmatprep.subr.mxu0 0.0
  %565 = vmatpush1.xpose.msra.mxu0 0.0
  %566 = vmatprep.mubr.f32.mxu0 0.0
  %567 = vmatmul.mubr.f32.gmra.mrb[0].mxu0 %v494
  %v568 = vpop.f32.mrb[0].mxu0
  %v569 = vadd.f32 0.0, %v568
  %v570 = vpop.f32.mrb[0].mxu0
  %571 = vmatprep.mubr.f32.mxu0 0.0
  %572 = vmatmul.mubr.f32.gmra.mrb[0].mxu0 %v496
  %v573 = vpop.f32.mrb[0].mxu0
  %v574 = vadd.f32 0.0, %v573
  %v575 = vpop.f32.mrb[0].mxu0
  %576 = vdwg.mxu0
  %v577 = vmul.f32 %v569, 0.35355338
  %v578 = vmul.f32 %v574, 0.35355338
  %v579 = vadd.f32 %v577, %v280
  %v580 = vadd.f32 %v578, %v281
  %v581 = vsel %vm376, %v579, -inf
  %582 = vmax.xlane.f32.xlu0 %v581
  %v583 = vpop.xlane.xlu0 %582
  %v584 = vsel %vm376, %v580, -inf
  %585 = vmax.xlane.f32.xlu0 %v584
  %v586 = vpop.xlane.xlu0 %585
  %v587 = vsub.f32 %v579, %v583
  %v588 = vsub.f32 %v580, %v586
  %v589 = vmul.f32 %v587, 1.442695
  %v590 = vpow.pop %v589
  %v591 = vmul.f32 %v588, 1.442695
  %v592 = vpow.pop %v591
  %v593 = vsel %vm376, %v590, 0.0
  %594 = vadd.xlane.f32.xlu0 %v593
  %v595 = vpop.xlane.xlu0 %594
  %v596 = vsel %vm376, %v592, 0.0
  %597 = vadd.xlane.f32.xlu0 %v596
  %v598 = vpop.xlane.xlu0 %597
  %v599 = vrcp.pop %v595
  %v600 = vrcp.pop %v598
  %v601 = vmul.f32 %v590, %v599
  %v602 = vmul.f32 %v592, %v600
  %603 = vrot.lane.b32.xlu0 %v260, 56
  %v604 = vpop.permute.xlu0 %603
  %605 = vrot.lane.b32.xlu0 %v263, 56
  %v606 = vpop.permute.xlu0 %605
  %v610 = vsel %vm376, %v601, 0
  %v613 = vsel %vm376, %v602, 0
  %615 = vmatprep.subr.mxu0 0.0
  %616 = vmatpush1.msra.mxu0 %v604
  %617 = vmatprep.subr.mxu0 0.0
  %618 = vmatpush1.msra.mxu0 %v606
  %619 = vmatprep.subr.mxu0 0.0
  %620 = vmatpush1.msra.mxu0 0.0
  %621 = vmatprep.subr.mxu0 0.0
  %622 = vmatpush1.msra.mxu0 0.0
  %623 = vmatprep.subr.mxu0 0.0
  %624 = vmatpush1.msra.mxu0 0.0
  %625 = vmatprep.subr.mxu0 0.0
  %626 = vmatpush1.msra.mxu0 0.0
  %627 = vmatprep.subr.mxu0 0.0
  %628 = vmatpush1.msra.mxu0 0.0
  %629 = vmatprep.subr.mxu0 0.0
  %630 = vmatpush1.msra.mxu0 0.0
  %631 = vmatprep.subr.mxu0 0.0
  %632 = vmatpush1.msra.mxu0 0.0
  %633 = vmatprep.subr.mxu0 0.0
  %634 = vmatpush1.msra.mxu0 0.0
  %635 = vmatprep.subr.mxu0 0.0
  %636 = vmatpush1.msra.mxu0 0.0
  %637 = vmatprep.subr.mxu0 0.0
  %638 = vmatpush1.msra.mxu0 0.0
  %639 = vmatprep.subr.mxu0 0.0
  %640 = vmatpush1.msra.mxu0 0.0
  %641 = vmatprep.subr.mxu0 0.0
  %642 = vmatpush1.msra.mxu0 0.0
  %643 = vmatprep.subr.mxu0 0.0
  %644 = vmatpush1.msra.mxu0 0.0
  %645 = vmatprep.subr.mxu0 0.0
  %646 = vmatpush1.msra.mxu0 0.0
  %647 = vmatprep.subr.mxu0 0.0
  %648 = vmatpush1.msra.mxu0 0.0
  %649 = vmatprep.subr.mxu0 0.0
  %650 = vmatpush1.msra.mxu0 0.0
  %651 = vmatprep.subr.mxu0 0.0
  %652 = vmatpush1.msra.mxu0 0.0
  %653 = vmatprep.subr.mxu0 0.0
  %654 = vmatpush1.msra.mxu0 0.0
  %655 = vmatprep.subr.mxu0 0.0
  %656 = vmatpush1.msra.mxu0 0.0
  %657 = vmatprep.subr.mxu0 0.0
  %658 = vmatpush1.msra.mxu0 0.0
  %659 = vmatprep.subr.mxu0 0.0
  %660 = vmatpush1.msra.mxu0 0.0
  %661 = vmatprep.subr.mxu0 0.0
  %662 = vmatpush1.msra.mxu0 0.0
  %663 = vmatprep.subr.mxu0 0.0
  %664 = vmatpush1.msra.mxu0 0.0
  %665 = vmatprep.subr.mxu0 0.0
  %666 = vmatpush1.msra.mxu0 0.0
  %667 = vmatprep.subr.mxu0 0.0
  %668 = vmatpush1.msra.mxu0 0.0
  %669 = vmatprep.subr.mxu0 0.0
  %670 = vmatpush1.msra.mxu0 0.0
  %671 = vmatprep.subr.mxu0 0.0
  %672 = vmatpush1.msra.mxu0 0.0
  %673 = vmatprep.subr.mxu0 0.0
  %674 = vmatpush1.msra.mxu0 0.0
  %675 = vmatprep.subr.mxu0 0.0
  %676 = vmatpush1.msra.mxu0 0.0
  %677 = vmatprep.subr.mxu0 0.0
  %678 = vmatpush1.msra.mxu0 0.0
  %679 = vmatprep.mubr.f32.mxu0 0.0
  %680 = vmatmul.mubr.f32.gmra.mrb[0].mxu0 %v610
  %v681 = vpop.f32.mrb[0].mxu0
  %v682 = vadd.f32 0.0, %v681
  %v683 = vpop.f32.mrb[0].mxu0
  %684 = vmatprep.mubr.f32.mxu0 0.0
  %685 = vmatmul.mubr.f32.gmra.mrb[0].mxu0 %v613
  %v686 = vpop.f32.mrb[0].mxu0
  %v687 = vadd.f32 0.0, %v686
  %v688 = vpop.f32.mrb[0].mxu0
  %689 = vdwg.mxu0
  %690 = vrot.lane.b32.xlu0 %v260, 112
  %v691 = vpop.permute.xlu0 %690
  %692 = vrot.lane.b32.xlu0 %v263, 112
  %v693 = vpop.permute.xlu0 %692
  %694 = vrot.lane.b32.xlu0 %v260, 80
  %v695 = vpop.permute.xlu0 %694
  %696 = vrot.lane.b32.xlu0 %v263, 80
  %v697 = vpop.permute.xlu0 %696
  %v698 = vsel %vm288, %v691, 0
  %v700 = vsel %vm288, %v693, 0
  %v702 = vsel %vm288, %v695, 0
  %v704 = vsel %vm288, %v697, 0
  %706 = vmatprep.subr.mxu0 0.0
  %707 = vmatpush1.xpose.msra.mxu0 %v702
  %708 = vmatprep.subr.mxu0 0.0
  %709 = vmatpush1.xpose.msra.mxu0 %v704
  %710 = vmatprep.subr.mxu0 0.0
  %711 = vmatpush1.xpose.msra.mxu0 0.0
  %712 = vmatprep.subr.mxu0 0.0
  %713 = vmatpush1.xpose.msra.mxu0 0.0
  %714 = vmatprep.subr.mxu0 0.0
  %715 = vmatpush1.xpose.msra.mxu0 0.0
  %716 = vmatprep.subr.mxu0 0.0
  %717 = vmatpush1.xpose.msra.mxu0 0.0
  %718 = vmatprep.subr.mxu0 0.0
  %719 = vmatpush1.xpose.msra.mxu0 0.0
  %720 = vmatprep.subr.mxu0 0.0
  %721 = vmatpush1.xpose.msra.mxu0 0.0
  %722 = vmatprep.subr.mxu0 0.0
  %723 = vmatpush1.xpose.msra.mxu0 0.0
  %724 = vmatprep.subr.mxu0 0.0
  %725 = vmatpush1.xpose.msra.mxu0 0.0
  %726 = vmatprep.subr.mxu0 0.0
  %727 = vmatpush1.xpose.msra.mxu0 0.0
  %728 = vmatprep.subr.mxu0 0.0
  %729 = vmatpush1.xpose.msra.mxu0 0.0
  %730 = vmatprep.subr.mxu0 0.0
  %731 = vmatpush1.xpose.msra.mxu0 0.0
  %732 = vmatprep.subr.mxu0 0.0
  %733 = vmatpush1.xpose.msra.mxu0 0.0
  %734 = vmatprep.subr.mxu0 0.0
  %735 = vmatpush1.xpose.msra.mxu0 0.0
  %736 = vmatprep.subr.mxu0 0.0
  %737 = vmatpush1.xpose.msra.mxu0 0.0
  %738 = vmatprep.subr.mxu0 0.0
  %739 = vmatpush1.xpose.msra.mxu0 0.0
  %740 = vmatprep.subr.mxu0 0.0
  %741 = vmatpush1.xpose.msra.mxu0 0.0
  %742 = vmatprep.subr.mxu0 0.0
  %743 = vmatpush1.xpose.msra.mxu0 0.0
  %744 = vmatprep.subr.mxu0 0.0
  %745 = vmatpush1.xpose.msra.mxu0 0.0
  %746 = vmatprep.subr.mxu0 0.0
  %747 = vmatpush1.xpose.msra.mxu0 0.0
  %748 = vmatprep.subr.mxu0 0.0
  %749 = vmatpush1.xpose.msra.mxu0 0.0
  %750 = vmatprep.subr.mxu0 0.0
  %751 = vmatpush1.xpose.msra.mxu0 0.0
  %752 = vmatprep.subr.mxu0 0.0
  %753 = vmatpush1.xpose.msra.mxu0 0.0
  %754 = vmatprep.subr.mxu0 0.0
  %755 = vmatpush1.xpose.msra.mxu0 0.0
  %756 = vmatprep.subr.mxu0 0.0
  %757 = vmatpush1.xpose.msra.mxu0 0.0
  %758 = vmatprep.subr.mxu0 0.0
  %759 = vmatpush1.xpose.msra.mxu0 0.0
  %760 = vmatprep.subr.mxu0 0.0
  %761 = vmatpush1.xpose.msra.mxu0 0.0
  %762 = vmatprep.subr.mxu0 0.0
  %763 = vmatpush1.xpose.msra.mxu0 0.0
  %764 = vmatprep.subr.mxu0 0.0
  %765 = vmatpush1.xpose.msra.mxu0 0.0
  %766 = vmatprep.subr.mxu0 0.0
  %767 = vmatpush1.xpose.msra.mxu0 0.0
  %768 = vmatprep.subr.mxu0 0.0
  %769 = vmatpush1.xpose.msra.mxu0 0.0
  %770 = vmatprep.mubr.f32.mxu0 0.0
  %771 = vmatmul.mubr.f32.gmra.mrb[0].mxu0 %v698
  %v772 = vpop.f32.mrb[0].mxu0
  %v773 = vadd.f32 0.0, %v772
  %v774 = vpop.f32.mrb[0].mxu0
  %775 = vmatprep.mubr.f32.mxu0 0.0
  %776 = vmatmul.mubr.f32.gmra.mrb[0].mxu0 %v700
  %v777 = vpop.f32.mrb[0].mxu0
  %v778 = vadd.f32 0.0, %v777
  %v779 = vpop.f32.mrb[0].mxu0
  %780 = vdwg.mxu0
  %v781 = vmul.f32 %v773, 0.35355338
  %v782 = vmul.f32 %v778, 0.35355338
  %v783 = vadd.f32 %v781, %v280
  %v784 = vadd.f32 %v782, %v281
  %v785 = vsel %vm376, %v783, -inf
  %786 = vmax.xlane.f32.xlu0 %v785
  %v787 = vpop.xlane.xlu0 %786
  %v788 = vsel %vm376, %v784, -inf
  %789 = vmax.xlane.f32.xlu0 %v788
  %v790 = vpop.xlane.xlu0 %789
  %v791 = vsub.f32 %v783, %v787
  %v792 = vsub.f32 %v784, %v790
  %v793 = vmul.f32 %v791, 1.442695
  %v794 = vpow.pop %v793
  %v795 = vmul.f32 %v792, 1.442695
  %v796 = vpow.pop %v795
  %v797 = vsel %vm376, %v794, 0.0
  %798 = vadd.xlane.f32.xlu0 %v797
  %v799 = vpop.xlane.xlu0 %798
  %v800 = vsel %vm376, %v796, 0.0
  %801 = vadd.xlane.f32.xlu0 %v800
  %v802 = vpop.xlane.xlu0 %801
  %v803 = vrcp.pop %v799
  %v804 = vrcp.pop %v802
  %v805 = vmul.f32 %v794, %v803
  %v806 = vmul.f32 %v796, %v804
  %807 = vrot.lane.b32.xlu0 %v260, 48
  %v808 = vpop.permute.xlu0 %807
  %809 = vrot.lane.b32.xlu0 %v263, 48
  %v810 = vpop.permute.xlu0 %809
  %v814 = vsel %vm376, %v805, 0
  %v817 = vsel %vm376, %v806, 0
  %819 = vmatprep.subr.mxu0 0.0
  %820 = vmatpush1.msra.mxu0 %v808
  %821 = vmatprep.subr.mxu0 0.0
  %822 = vmatpush1.msra.mxu0 %v810
  %823 = vmatprep.subr.mxu0 0.0
  %824 = vmatpush1.msra.mxu0 0.0
  %825 = vmatprep.subr.mxu0 0.0
  %826 = vmatpush1.msra.mxu0 0.0
  %827 = vmatprep.subr.mxu0 0.0
  %828 = vmatpush1.msra.mxu0 0.0
  %829 = vmatprep.subr.mxu0 0.0
  %830 = vmatpush1.msra.mxu0 0.0
  %831 = vmatprep.subr.mxu0 0.0
  %832 = vmatpush1.msra.mxu0 0.0
  %833 = vmatprep.subr.mxu0 0.0
  %834 = vmatpush1.msra.mxu0 0.0
  %835 = vmatprep.subr.mxu0 0.0
  %836 = vmatpush1.msra.mxu0 0.0
  %837 = vmatprep.subr.mxu0 0.0
  %838 = vmatpush1.msra.mxu0 0.0
  %839 = vmatprep.subr.mxu0 0.0
  %840 = vmatpush1.msra.mxu0 0.0
  %841 = vmatprep.subr.mxu0 0.0
  %842 = vmatpush1.msra.mxu0 0.0
  %843 = vmatprep.subr.mxu0 0.0
  %844 = vmatpush1.msra.mxu0 0.0
  %845 = vmatprep.subr.mxu0 0.0
  %846 = vmatpush1.msra.mxu0 0.0
  %847 = vmatprep.subr.mxu0 0.0
  %848 = vmatpush1.msra.mxu0 0.0
  %849 = vmatprep.subr.mxu0 0.0
  %850 = vmatpush1.msra.mxu0 0.0
  %851 = vmatprep.subr.mxu0 0.0
  %852 = vmatpush1.msra.mxu0 0.0
  %853 = vmatprep.subr.mxu0 0.0
  %854 = vmatpush1.msra.mxu0 0.0
  %855 = vmatprep.subr.mxu0 0.0
  %856 = vmatpush1.msra.mxu0 0.0
  %857 = vmatprep.subr.mxu0 0.0
  %858 = vmatpush1.msra.mxu0 0.0
  %859 = vmatprep.subr.mxu0 0.0
  %860 = vmatpush1.msra.mxu0 0.0
  %861 = vmatprep.subr.mxu0 0.0
  %862 = vmatpush1.msra.mxu0 0.0
  %863 = vmatprep.subr.mxu0 0.0
  %864 = vmatpush1.msra.mxu0 0.0
  %865 = vmatprep.subr.mxu0 0.0
  %866 = vmatpush1.msra.mxu0 0.0
  %867 = vmatprep.subr.mxu0 0.0
  %868 = vmatpush1.msra.mxu0 0.0
  %869 = vmatprep.subr.mxu0 0.0
  %870 = vmatpush1.msra.mxu0 0.0
  %871 = vmatprep.subr.mxu0 0.0
  %872 = vmatpush1.msra.mxu0 0.0
  %873 = vmatprep.subr.mxu0 0.0
  %874 = vmatpush1.msra.mxu0 0.0
  %875 = vmatprep.subr.mxu0 0.0
  %876 = vmatpush1.msra.mxu0 0.0
  %877 = vmatprep.subr.mxu0 0.0
  %878 = vmatpush1.msra.mxu0 0.0
  %879 = vmatprep.subr.mxu0 0.0
  %880 = vmatpush1.msra.mxu0 0.0
  %881 = vmatprep.subr.mxu0 0.0
  %882 = vmatpush1.msra.mxu0 0.0
  %883 = vmatprep.mubr.f32.mxu0 0.0
  %884 = vmatmul.mubr.f32.gmra.mrb[0].mxu0 %v814
  %v885 = vpop.f32.mrb[0].mxu0
  %v886 = vadd.f32 0.0, %v885
  %v887 = vpop.f32.mrb[0].mxu0
  %888 = vmatprep.mubr.f32.mxu0 0.0
  %889 = vmatmul.mubr.f32.gmra.mrb[0].mxu0 %v817
  %v890 = vpop.f32.mrb[0].mxu0
  %v891 = vadd.f32 0.0, %v890
  %v892 = vpop.f32.mrb[0].mxu0
  %893 = vdwg.mxu0
  %894 = vrot.lane.b32.xlu0 %v260, 104
  %v895 = vpop.permute.xlu0 %894
  %896 = vrot.lane.b32.xlu0 %v263, 104
  %v897 = vpop.permute.xlu0 %896
  %898 = vrot.lane.b32.xlu0 %v260, 72
  %v899 = vpop.permute.xlu0 %898
  %900 = vrot.lane.b32.xlu0 %v263, 72
  %v901 = vpop.permute.xlu0 %900
  %v902 = vsel %vm288, %v895, 0
  %v904 = vsel %vm288, %v897, 0
  %v906 = vsel %vm288, %v899, 0
  %v908 = vsel %vm288, %v901, 0
  %910 = vmatprep.subr.mxu0 0.0
  %911 = vmatpush1.xpose.msra.mxu0 %v906
  %912 = vmatprep.subr.mxu0 0.0
  %913 = vmatpush1.xpose.msra.mxu0 %v908
  %914 = vmatprep.subr.mxu0 0.0
  %915 = vmatpush1.xpose.msra.mxu0 0.0
  %916 = vmatprep.subr.mxu0 0.0
  %917 = vmatpush1.xpose.msra.mxu0 0.0
  %918 = vmatprep.subr.mxu0 0.0
  %919 = vmatpush1.xpose.msra.mxu0 0.0
  %920 = vmatprep.subr.mxu0 0.0
  %921 = vmatpush1.xpose.msra.mxu0 0.0
  %922 = vmatprep.subr.mxu0 0.0
  %923 = vmatpush1.xpose.msra.mxu0 0.0
  %924 = vmatprep.subr.mxu0 0.0
  %925 = vmatpush1.xpose.msra.mxu0 0.0
  %926 = vmatprep.subr.mxu0 0.0
  %927 = vmatpush1.xpose.msra.mxu0 0.0
  %928 = vmatprep.subr.mxu0 0.0
  %929 = vmatpush1.xpose.msra.mxu0 0.0
  %930 = vmatprep.subr.mxu0 0.0
  %931 = vmatpush1.xpose.msra.mxu0 0.0
  %932 = vmatprep.subr.mxu0 0.0
  %933 = vmatpush1.xpose.msra.mxu0 0.0
  %934 = vmatprep.subr.mxu0 0.0
  %935 = vmatpush1.xpose.msra.mxu0 0.0
  %936 = vmatprep.subr.mxu0 0.0
  %937 = vmatpush1.xpose.msra.mxu0 0.0
  %938 = vmatprep.subr.mxu0 0.0
  %939 = vmatpush1.xpose.msra.mxu0 0.0
  %940 = vmatprep.subr.mxu0 0.0
  %941 = vmatpush1.xpose.msra.mxu0 0.0
  %942 = vmatprep.subr.mxu0 0.0
  %943 = vmatpush1.xpose.msra.mxu0 0.0
  %944 = vmatprep.subr.mxu0 0.0
  %945 = vmatpush1.xpose.msra.mxu0 0.0
  %946 = vmatprep.subr.mxu0 0.0
  %947 = vmatpush1.xpose.msra.mxu0 0.0
  %948 = vmatprep.subr.mxu0 0.0
  %949 = vmatpush1.xpose.msra.mxu0 0.0
  %950 = vmatprep.subr.mxu0 0.0
  %951 = vmatpush1.xpose.msra.mxu0 0.0
  %952 = vmatprep.subr.mxu0 0.0
  %953 = vmatpush1.xpose.msra.mxu0 0.0
  %954 = vmatprep.subr.mxu0 0.0
  %955 = vmatpush1.xpose.msra.mxu0 0.0
  %956 = vmatprep.subr.mxu0 0.0
  %957 = vmatpush1.xpose.msra.mxu0 0.0
  %958 = vmatprep.subr.mxu0 0.0
  %959 = vmatpush1.xpose.msra.mxu0 0.0
  %960 = vmatprep.subr.mxu0 0.0
  %961 = vmatpush1.xpose.msra.mxu0 0.0
  %962 = vmatprep.subr.mxu0 0.0
  %963 = vmatpush1.xpose.msra.mxu0 0.0
  %964 = vmatprep.subr.mxu0 0.0
  %965 = vmatpush1.xpose.msra.mxu0 0.0
  %966 = vmatprep.subr.mxu0 0.0
  %967 = vmatpush1.xpose.msra.mxu0 0.0
  %968 = vmatprep.subr.mxu0 0.0
  %969 = vmatpush1.xpose.msra.mxu0 0.0
  %970 = vmatprep.subr.mxu0 0.0
  %971 = vmatpush1.xpose.msra.mxu0 0.0
  %972 = vmatprep.subr.mxu0 0.0
  %973 = vmatpush1.xpose.msra.mxu0 0.0
  %974 = vmatprep.mubr.f32.mxu0 0.0
  %975 = vmatmul.mubr.f32.gmra.mrb[0].mxu0 %v902
  %v976 = vpop.f32.mrb[0].mxu0
  %v977 = vadd.f32 0.0, %v976
  %v978 = vpop.f32.mrb[0].mxu0
  %979 = vmatprep.mubr.f32.mxu0 0.0
  %980 = vmatmul.mubr.f32.gmra.mrb[0].mxu0 %v904
  %v981 = vpop.f32.mrb[0].mxu0
  %v982 = vadd.f32 0.0, %v981
  %v983 = vpop.f32.mrb[0].mxu0
  %984 = vdwg.mxu0
  %v985 = vmul.f32 %v977, 0.35355338
  %v986 = vmul.f32 %v982, 0.35355338
  %v987 = vadd.f32 %v985, %v280
  %v988 = vadd.f32 %v986, %v281
  %v989 = vsel %vm376, %v987, -inf
  %990 = vmax.xlane.f32.xlu0 %v989
  %v991 = vpop.xlane.xlu0 %990
  %v992 = vsel %vm376, %v988, -inf
  %993 = vmax.xlane.f32.xlu0 %v992
  %v994 = vpop.xlane.xlu0 %993
  %v995 = vsub.f32 %v987, %v991
  %v996 = vsub.f32 %v988, %v994
  %v997 = vmul.f32 %v995, 1.442695
  %v998 = vpow.pop %v997
  %v999 = vmul.f32 %v996, 1.442695
  %v1000 = vpow.pop %v999
  %v1001 = vsel %vm376, %v998, 0.0
  %1002 = vadd.xlane.f32.xlu0 %v1001
  %v1003 = vpop.xlane.xlu0 %1002
  %v1004 = vsel %vm376, %v1000, 0.0
  %1005 = vadd.xlane.f32.xlu0 %v1004
  %v1006 = vpop.xlane.xlu0 %1005
  %v1007 = vrcp.pop %v1003
  %v1008 = vrcp.pop %v1006
  %v1009 = vmul.f32 %v998, %v1007
  %v1010 = vmul.f32 %v1000, %v1008
  %1011 = vrot.lane.b32.xlu0 %v260, 40
  %v1012 = vpop.permute.xlu0 %1011
  %1013 = vrot.lane.b32.xlu0 %v263, 40
  %v1014 = vpop.permute.xlu0 %1013
  %v1018 = vsel %vm376, %v1009, 0
  %v1021 = vsel %vm376, %v1010, 0
  %1023 = vmatprep.subr.mxu0 0.0
  %1024 = vmatpush1.msra.mxu0 %v1012
  %1025 = vmatprep.subr.mxu0 0.0
  %1026 = vmatpush1.msra.mxu0 %v1014
  %1027 = vmatprep.subr.mxu0 0.0
  %1028 = vmatpush1.msra.mxu0 0.0
  %1029 = vmatprep.subr.mxu0 0.0
  %1030 = vmatpush1.msra.mxu0 0.0
  %1031 = vmatprep.subr.mxu0 0.0
  %1032 = vmatpush1.msra.mxu0 0.0
  %1033 = vmatprep.subr.mxu0 0.0
  %1034 = vmatpush1.msra.mxu0 0.0
  %1035 = vmatprep.subr.mxu0 0.0
  %1036 = vmatpush1.msra.mxu0 0.0
  %1037 = vmatprep.subr.mxu0 0.0
  %1038 = vmatpush1.msra.mxu0 0.0
  %1039 = vmatprep.subr.mxu0 0.0
  %1040 = vmatpush1.msra.mxu0 0.0
  %1041 = vmatprep.subr.mxu0 0.0
  %1042 = vmatpush1.msra.mxu0 0.0
  %1043 = vmatprep.subr.mxu0 0.0
  %1044 = vmatpush1.msra.mxu0 0.0
  %1045 = vmatprep.subr.mxu0 0.0
  %1046 = vmatpush1.msra.mxu0 0.0
  %1047 = vmatprep.subr.mxu0 0.0
  %1048 = vmatpush1.msra.mxu0 0.0
  %1049 = vmatprep.subr.mxu0 0.0
  %1050 = vmatpush1.msra.mxu0 0.0
  %1051 = vmatprep.subr.mxu0 0.0
  %1052 = vmatpush1.msra.mxu0 0.0
  %1053 = vmatprep.subr.mxu0 0.0
  %1054 = vmatpush1.msra.mxu0 0.0
  %1055 = vmatprep.subr.mxu0 0.0
  %1056 = vmatpush1.msra.mxu0 0.0
  %1057 = vmatprep.subr.mxu0 0.0
  %1058 = vmatpush1.msra.mxu0 0.0
  %1059 = vmatprep.subr.mxu0 0.0
  %1060 = vmatpush1.msra.mxu0 0.0
  %1061 = vmatprep.subr.mxu0 0.0
  %1062 = vmatpush1.msra.mxu0 0.0
  %1063 = vmatprep.subr.mxu0 0.0
  %1064 = vmatpush1.msra.mxu0 0.0
  %1065 = vmatprep.subr.mxu0 0.0
  %1066 = vmatpush1.msra.mxu0 0.0
  %1067 = vmatprep.subr.mxu0 0.0
  %1068 = vmatpush1.msra.mxu0 0.0
  %1069 = vmatprep.subr.mxu0 0.0
  %1070 = vmatpush1.msra.mxu0 0.0
  %1071 = vmatprep.subr.mxu0 0.0
  %1072 = vmatpush1.msra.mxu0 0.0
  %1073 = vmatprep.subr.mxu0 0.0
  %1074 = vmatpush1.msra.mxu0 0.0
  %1075 = vmatprep.subr.mxu0 0.0
  %1076 = vmatpush1.msra.mxu0 0.0
  %1077 = vmatprep.subr.mxu0 0.0
  %1078 = vmatpush1.msra.mxu0 0.0
  %1079 = vmatprep.subr.mxu0 0.0
  %1080 = vmatpush1.msra.mxu0 0.0
  %1081 = vmatprep.subr.mxu0 0.0
  %1082 = vmatpush1.msra.mxu0 0.0
  %1083 = vmatprep.subr.mxu0 0.0
  %1084 = vmatpush1.msra.mxu0 0.0
  %1085 = vmatprep.subr.mxu0 0.0
  %1086 = vmatpush1.msra.mxu0 0.0
  %1087 = vmatprep.mubr.f32.mxu0 0.0
  %1088 = vmatmul.mubr.f32.gmra.mrb[0].mxu0 %v1018
  %v1089 = vpop.f32.mrb[0].mxu0
  %v1090 = vadd.f32 0.0, %v1089
  %v1091 = vpop.f32.mrb[0].mxu0
  %1092 = vmatprep.mubr.f32.mxu0 0.0
  %1093 = vmatmul.mubr.f32.gmra.mrb[0].mxu0 %v1021
  %v1094 = vpop.f32.mrb[0].mxu0
  %v1095 = vadd.f32 0.0, %v1094
  %v1096 = vpop.f32.mrb[0].mxu0
  %1097 = vdwg.mxu0
  %1100 = vrot.lane.b32.xlu0 %v682, 8
  %v1101 = vpop.permute.xlu0 %1100
  %1102 = vrot.lane.b32.xlu0 %v687, 8
  %v1103 = vpop.permute.xlu0 %1102
  %1108 = vrot.lane.b32.xlu0 %v886, 16
  %v1109 = vpop.permute.xlu0 %1108
  %1110 = vrot.lane.b32.xlu0 %v891, 16
  %v1111 = vpop.permute.xlu0 %1110
  %1116 = vrot.lane.b32.xlu0 %v1090, 24
  %v1117 = vpop.permute.xlu0 %1116
  %1118 = vrot.lane.b32.xlu0 %v1095, 24
  %v1119 = vpop.permute.xlu0 %1118
  %v1122 = vsel %vm288, %v478, %v1101
  %v1123 = vsel %vm288, %v483, %v1103
  %v1124 = vsel %vm376, %v1122, %v1109
  %v1125 = vsel %vm376, %v1123, %v1111
  %vm1126 = vcmask 195584
  %v1127 = vsel %vm1126, %v1124, %v1117
  %v1128 = vsel %vm1126, %v1125, %v1119
  %v1129 = vld [vmem:[%s2 + $0x48] sm:$0xf]
  %v1130 = vld [vmem:[%s2 + $0x94] sm:$0xf]
  %v1131 = vld [vmem:[%s2 + $0xe0] sm:$0xf]
  %v1132 = vld [vmem:[%s2 + $0x12c] sm:$0xf]
  %v1133 = vpack.c.bf16 %v1128, %v1127
  %v1135 = vlaneseq
  %v1136 = vshrl.u32 %v1135, 7
  %v1137 = vsub.s32 0, %v1136
  %v1138 = vrot.slane %v25, %v1137
  %v1144 = vunpack.c.l.b16 %v1129
  %v1145 = vunpack.c.l.b16 %v1130
  %v1146 = vunpack.c.l.b16 %v1131
  %v1147 = vunpack.c.l.b16 %v1132
  %v1148 = vpack.c.b16 %v1145, %v1144
  %v1149 = vpack.c.b16 %v1147, %v1146
  %v1153 = vsel %vm221, %v1133, 0
  %1155 = vmatprep.subr.bf16.mxu0 0
  %1156 = vmatpush1.bf16.msra.mxu0 %v1148
  %1157 = vmatprep.subr.bf16.mxu0 0
  %1158 = vmatpush1.bf16.msra.mxu0 %v1149
  %1159 = vmatprep.subr.bf16.mxu0 0
  %1160 = vmatpush1.bf16.msra.mxu0 0
  %1161 = vmatprep.subr.bf16.mxu0 0
  %1162 = vmatpush1.bf16.msra.mxu0 0
  %1163 = vmatprep.subr.bf16.mxu0 0
  %1164 = vmatpush1.bf16.msra.mxu0 0
  %1165 = vmatprep.subr.bf16.mxu0 0
  %1166 = vmatpush1.bf16.msra.mxu0 0
  %1167 = vmatprep.subr.bf16.mxu0 0
  %1168 = vmatpush1.bf16.msra.mxu0 0
  %1169 = vmatprep.subr.bf16.mxu0 0
  %1170 = vmatpush1.bf16.msra.mxu0 0
  %1171 = vmatprep.subr.bf16.mxu0 0
  %1172 = vmatpush1.bf16.msra.mxu0 0
  %1173 = vmatprep.subr.bf16.mxu0 0
  %1174 = vmatpush1.bf16.msra.mxu0 0
  %1175 = vmatprep.subr.bf16.mxu0 0
  %1176 = vmatpush1.bf16.msra.mxu0 0
  %1177 = vmatprep.subr.bf16.mxu0 0
  %1178 = vmatpush1.bf16.msra.mxu0 0
  %1179 = vmatprep.subr.bf16.mxu0 0
  %1180 = vmatpush1.bf16.msra.mxu0 0
  %1181 = vmatprep.subr.bf16.mxu0 0
  %1182 = vmatpush1.bf16.msra.mxu0 0
  %1183 = vmatprep.subr.bf16.mxu0 0
  %1184 = vmatpush1.bf16.msra.mxu0 0
  %1185 = vmatprep.subr.bf16.mxu0 0
  %1186 = vmatpush1.bf16.msra.mxu0 0
  %1187 = vmatprep.mubr.bf16.mxu0 0
  %1188 = vmatmul.mubr.bf16.gmra.mrb[0].mxu0 %v1153
  %v1189 = vpop.f32.mrb[0].mxu0
  %v1190 = vadd.f32 %v1138, %v1189
  %v1191 = vpop.f32.mrb[0].mxu0
  %v1192 = vpop.f32.mrb[0].mxu0
  %v1193 = vadd.f32 %v1138, %v1192
  %v1194 = vpop.f32.mrb[0].mxu0
  %1195 = vdwg.mxu0
  %v1196 = vadd.f32 %v192, %v1190
  %v1197 = vadd.f32 %v195, %v1193
  %v1198 = vsel %vm221, %v1196, 0.0
  %1199 = vadd.xlane.f32.xlu0 %v1198
  %v1200 = vpop.xlane.xlu0 %1199
  %v1201 = vsel %vm221, %v1197, 0.0
  %1202 = vadd.xlane.f32.xlu0 %v1201
  %v1203 = vpop.xlane.xlu0 %1202
  %v1204 = vrcp.pop 32.0
  %v1205 = vmul.f32 %v1200, %v1204
  %v1206 = vmul.f32 %v1203, %v1204
  %v1207 = vsub.f32 %v1196, %v1205
  %v1208 = vsub.f32 %v1197, %v1206
  %v1209 = vmul.f32 %v1207, %v1207
  %v1210 = vmul.f32 %v1208, %v1208
  %v1211 = vsel %vm221, %v1209, 0.0
  %1212 = vadd.xlane.f32.xlu0 %v1211
  %v1213 = vpop.xlane.xlu0 %1212
  %v1214 = vsel %vm221, %v1210, 0.0
  %1215 = vadd.xlane.f32.xlu0 %v1214
  %v1216 = vpop.xlane.xlu0 %1215
  %v1217 = vmul.f32 %v1213, %v1204
  %v1218 = vmul.f32 %v1216, %v1204
  %v1219 = vadd.f32 %v1217, 1e-05
  %v1220 = vadd.f32 %v1218, 1e-05
  %v1221 = vrsqrt.pop %v1219
  %v1222 = vrsqrt.pop %v1220
  %v1223 = vmul.f32 %v1207, %v1221
  %v1224 = vmul.f32 %v1208, %v1222
  %v1226 = vlaneseq
  %v1227 = vshrl.u32 %v1226, 7
  %v1228 = vsub.s32 0, %v1227
  %v1229 = vrot.slane %v26, %v1228
  %v1231 = vmul.f32 %v1223, %v1229
  %v1232 = vmul.f32 %v1224, %v1229
  %v1234 = vlaneseq
  %v1235 = vshrl.u32 %v1234, 7
  %v1236 = vsub.s32 0, %v1235
  %v1237 = vrot.slane %v27, %v1236
  %v1239 = vadd.f32 %v1231, %v1237
  %v1240 = vadd.f32 %v1232, %v1237
  %v1241 = vpack.c.bf16 %v1240, %v1239
  %v1242 = vld [vmem:[%s2 + $0x4] sm:$0xff]
  %v1243 = vld [vmem:[%s2 + $0xc] sm:$0xff]
  %v1244 = vld [vmem:[%s2 + $0x14] sm:$0xff]
  %v1245 = vld [vmem:[%s2 + $0x1c] sm:$0xff]
  %v1246 = vld [vmem:[%s2 + $0x24] sm:$0xff]
  %v1247 = vld [vmem:[%s2 + $0x2c] sm:$0xff]
  %v1248 = vld [vmem:[%s2 + $0x34] sm:$0xff]
  %v1249 = vld [vmem:[%s2 + $0x3c] sm:$0xff]
  %v1250 = vld [vmem:[%s2 + $0x50] sm:$0xff]
  %v1251 = vld [vmem:[%s2 + $0x58] sm:$0xff]
  %v1252 = vld [vmem:[%s2 + $0x60] sm:$0xff]
  %v1253 = vld [vmem:[%s2 + $0x68] sm:$0xff]
  %v1254 = vld [vmem:[%s2 + $0x70] sm:$0xff]
  %v1255 = vld [vmem:[%s2 + $0x78] sm:$0xff]
  %v1256 = vld [vmem:[%s2 + $0x80] sm:$0xff]
  %v1257 = vld [vmem:[%s2 + $0x88] sm:$0xff]
  %v1258 = vld [vmem:[%s2 + $0x9c] sm:$0xff]
  %v1259 = vld [vmem:[%s2 + $0xa4] sm:$0xff]
  %v1260 = vld [vmem:[%s2 + $0xac] sm:$0xff]
  %v1261 = vld [vmem:[%s2 + $0xb4] sm:$0xff]
  %v1262 = vld [vmem:[%s2 + $0xbc] sm:$0xff]
  %v1263 = vld [vmem:[%s2 + $0xc4] sm:$0xff]
  %v1264 = vld [vmem:[%s2 + $0xcc] sm:$0xff]
  %v1265 = vld [vmem:[%s2 + $0xd4] sm:$0xff]
  %v1266 = vld [vmem:[%s2 + $0xe8] sm:$0xff]
  %v1267 = vld [vmem:[%s2 + $0xf0] sm:$0xff]
  %v1268 = vld [vmem:[%s2 + $0xf8] sm:$0xff]
  %v1269 = vld [vmem:[%s2 + $0x100] sm:$0xff]
  %v1270 = vld [vmem:[%s2 + $0x108] sm:$0xff]
  %v1271 = vld [vmem:[%s2 + $0x110] sm:$0xff]
  %v1272 = vld [vmem:[%s2 + $0x118] sm:$0xff]
  %v1273 = vld [vmem:[%s2 + $0x120] sm:$0xff]
  %v1276 = vlaneseq
  %v1277 = vshrl.u32 %v1276, 7
  %v1278 = vsub.s32 0, %v1277
  %v1279 = vrot.slane %v22, %v1278
  %v1280 = vlaneseq
  %v1281 = vshrl.u32 %v1280, 7
  %v1282 = vsub.s32 1, %v1281
  %v1283 = vrot.slane %v22, %v1282
  %v1284 = vlaneseq
  %v1285 = vshrl.u32 %v1284, 7
  %v1286 = vsub.s32 2, %v1285
  %v1287 = vrot.slane %v22, %v1286
  %v1288 = vlaneseq
  %v1289 = vshrl.u32 %v1288, 7
  %v1290 = vsub.s32 3, %v1289
  %v1291 = vrot.slane %v22, %v1290
  %v1292 = vlaneseq
  %v1293 = vshrl.u32 %v1292, 7
  %v1294 = vsub.s32 4, %v1293
  %v1295 = vrot.slane %v22, %v1294
  %v1296 = vlaneseq
  %v1297 = vshrl.u32 %v1296, 7
  %v1298 = vsub.s32 5, %v1297
  %v1299 = vrot.slane %v22, %v1298
  %v1300 = vlaneseq
  %v1301 = vshrl.u32 %v1300, 7
  %v1302 = vsub.s32 6, %v1301
  %v1303 = vrot.slane %v22, %v1302
  %v1304 = vlaneseq
  %v1305 = vshrl.u32 %v1304, 7
  %v1306 = vsub.s32 7, %v1305
  %v1307 = vrot.slane %v22, %v1306
  %v1308 = vlaneseq
  %v1309 = vshrl.u32 %v1308, 7
  %v1310 = vsub.s32 0, %v1309
  %v1311 = vrot.slane %v23, %v1310
  %v1312 = vlaneseq
  %v1313 = vshrl.u32 %v1312, 7
  %v1314 = vsub.s32 1, %v1313
  %v1315 = vrot.slane %v23, %v1314
  %v1316 = vlaneseq
  %v1317 = vshrl.u32 %v1316, 7
  %v1318 = vsub.s32 2, %v1317
  %v1319 = vrot.slane %v23, %v1318
  %v1320 = vlaneseq
  %v1321 = vshrl.u32 %v1320, 7
  %v1322 = vsub.s32 3, %v1321
  %v1323 = vrot.slane %v23, %v1322
  %v1324 = vlaneseq
  %v1325 = vshrl.u32 %v1324, 7
  %v1326 = vsub.s32 4, %v1325
  %v1327 = vrot.slane %v23, %v1326
  %v1328 = vlaneseq
  %v1329 = vshrl.u32 %v1328, 7
  %v1330 = vsub.s32 5, %v1329
  %v1331 = vrot.slane %v23, %v1330
  %v1332 = vlaneseq
  %v1333 = vshrl.u32 %v1332, 7
  %v1334 = vsub.s32 6, %v1333
  %v1335 = vrot.slane %v23, %v1334
  %v1336 = vlaneseq
  %v1337 = vshrl.u32 %v1336, 7
  %v1338 = vsub.s32 7, %v1337
  %v1339 = vrot.slane %v23, %v1338
  %v1388 = vunpack.c.l.b16 %v1242
  %v1389 = vunpack.c.h.b16 %v1242
  %v1390 = vunpack.c.l.b16 %v1243
  %v1391 = vunpack.c.h.b16 %v1243
  %v1392 = vunpack.c.l.b16 %v1244
  %v1393 = vunpack.c.h.b16 %v1244
  %v1394 = vunpack.c.l.b16 %v1245
  %v1395 = vunpack.c.h.b16 %v1245
  %v1396 = vunpack.c.l.b16 %v1246
  %v1397 = vunpack.c.h.b16 %v1246
  %v1398 = vunpack.c.l.b16 %v1247
  %v1399 = vunpack.c.h.b16 %v1247
  %v1400 = vunpack.c.l.b16 %v1248
  %v1401 = vunpack.c.h.b16 %v1248
  %v1402 = vunpack.c.l.b16 %v1249
  %v1403 = vunpack.c.h.b16 %v1249
  %v1404 = vunpack.c.l.b16 %v1250
  %v1405 = vunpack.c.h.b16 %v1250
  %v1406 = vunpack.c.l.b16 %v1251
  %v1407 = vunpack.c.h.b16 %v1251
  %v1408 = vunpack.c.l.b16 %v1252
  %v1409 = vunpack.c.h.b16 %v1252
  %v1410 = vunpack.c.l.b16 %v1253
  %v1411 = vunpack.c.h.b16 %v1253
  %v1412 = vunpack.c.l.b16 %v1254
  %v1413 = vunpack.c.h.b16 %v1254
  %v1414 = vunpack.c.l.b16 %v1255
  %v1415 = vunpack.c.h.b16 %v1255
  %v1416 = vunpack.c.l.b16 %v1256
  %v1417 = vunpack.c.h.b16 %v1256
  %v1418 = vunpack.c.l.b16 %v1257
  %v1419 = vunpack.c.h.b16 %v1257
  %v1420 = vunpack.c.l.b16 %v1258
  %v1421 = vunpack.c.h.b16 %v1258
  %v1422 = vunpack.c.l.b16 %v1259
  %v1423 = vunpack.c.h.b16 %v1259
  %v1424 = vunpack.c.l.b16 %v1260
  %v1425 = vunpack.c.h.b16 %v1260
  %v1426 = vunpack.c.l.b16 %v1261
  %v1427 = vunpack.c.h.b16 %v1261
  %v1428 = vunpack.c.l.b16 %v1262
  %v1429 = vunpack.c.h.b16 %v1262
  %v1430 = vunpack.c.l.b16 %v1263
  %v1431 = vunpack.c.h.b16 %v1263
  %v1432 = vunpack.c.l.b16 %v1264
  %v1433 = vunpack.c.h.b16 %v1264
  %v1434 = vunpack.c.l.b16 %v1265
  %v1435 = vunpack.c.h.b16 %v1265
  %v1436 = vunpack.c.l.b16 %v1266
  %v1437 = vunpack.c.h.b16 %v1266
  %v1438 = vunpack.c.l.b16 %v1267
  %v1439 = vunpack.c.h.b16 %v1267
  %v1440 = vunpack.c.l.b16 %v1268
  %v1441 = vunpack.c.h.b16 %v1268
  %v1442 = vunpack.c.l.b16 %v1269
  %v1443 = vunpack.c.h.b16 %v1269
  %v1444 = vunpack.c.l.b16 %v1270
  %v1445 = vunpack.c.h.b16 %v1270
  %v1446 = vunpack.c.l.b16 %v1271
  %v1447 = vunpack.c.h.b16 %v1271
  %v1448 = vunpack.c.l.b16 %v1272
  %v1449 = vunpack.c.h.b16 %v1272
  %v1450 = vunpack.c.l.b16 %v1273
  %v1451 = vunpack.c.h.b16 %v1273
  %v1452 = vpack.c.b16 %v1404, %v1388
  %v1453 = vpack.c.b16 %v1405, %v1389
  %v1454 = vpack.c.b16 %v1406, %v1390
  %v1455 = vpack.c.b16 %v1407, %v1391
  %v1456 = vpack.c.b16 %v1408, %v1392
  %v1457 = vpack.c.b16 %v1409, %v1393
  %v1458 = vpack.c.b16 %v1410, %v1394
  %v1459 = vpack.c.b16 %v1411, %v1395
  %v1460 = vpack.c.b16 %v1412, %v1396
  %v1461 = vpack.c.b16 %v1413, %v1397
  %v1462 = vpack.c.b16 %v1414, %v1398
  %v1463 = vpack.c.b16 %v1415, %v1399
  %v1464 = vpack.c.b16 %v1416, %v1400
  %v1465 = vpack.c.b16 %v1417, %v1401
  %v1466 = vpack.c.b16 %v1418, %v1402
  %v1467 = vpack.c.b16 %v1419, %v1403
  %v1468 = vpack.c.b16 %v1436, %v1420
  %v1469 = vpack.c.b16 %v1437, %v1421
  %v1470 = vpack.c.b16 %v1438, %v1422
  %v1471 = vpack.c.b16 %v1439, %v1423
  %v1472 = vpack.c.b16 %v1440, %v1424
  %v1473 = vpack.c.b16 %v1441, %v1425
  %v1474 = vpack.c.b16 %v1442, %v1426
  %v1475 = vpack.c.b16 %v1443, %v1427
  %v1476 = vpack.c.b16 %v1444, %v1428
  %v1477 = vpack.c.b16 %v1445, %v1429
  %v1478 = vpack.c.b16 %v1446, %v1430
  %v1479 = vpack.c.b16 %v1447, %v1431
  %v1480 = vpack.c.b16 %v1448, %v1432
  %v1481 = vpack.c.b16 %v1449, %v1433
  %v1482 = vpack.c.b16 %v1450, %v1434
  %v1483 = vpack.c.b16 %v1451, %v1435
  %v1517 = vsel %vm221, %v1241, 0
  %1519 = vmatprep.subr.bf16.mxu0 %v1453
  %1520 = vmatpush1.bf16.msra.mxu0 %v1452
  %1521 = vmatprep.subr.bf16.mxu0 %v1469
  %1522 = vmatpush1.bf16.msra.mxu0 %v1468
  %1523 = vmatprep.subr.bf16.mxu0 0
  %1524 = vmatpush1.bf16.msra.mxu0 0
  %1525 = vmatprep.subr.bf16.mxu0 0
  %1526 = vmatpush1.bf16.msra.mxu0 0
  %1527 = vmatprep.subr.bf16.mxu0 0
  %1528 = vmatpush1.bf16.msra.mxu0 0
  %1529 = vmatprep.subr.bf16.mxu0 0
  %1530 = vmatpush1.bf16.msra.mxu0 0
  %1531 = vmatprep.subr.bf16.mxu0 0
  %1532 = vmatpush1.bf16.msra.mxu0 0
  %1533 = vmatprep.subr.bf16.mxu0 0
  %1534 = vmatpush1.bf16.msra.mxu0 0
  %1535 = vmatprep.subr.bf16.mxu0 0
  %1536 = vmatpush1.bf16.msra.mxu0 0
  %1537 = vmatprep.subr.bf16.mxu0 0
  %1538 = vmatpush1.bf16.msra.mxu0 0
  %1539 = vmatprep.subr.bf16.mxu0 0
  %1540 = vmatpush1.bf16.msra.mxu0 0
  %1541 = vmatprep.subr.bf16.mxu0 0
  %1542 = vmatpush1.bf16.msra.mxu0 0
  %1543 = vmatprep.subr.bf16.mxu0 0
  %1544 = vmatpush1.bf16.msra.mxu0 0
  %1545 = vmatprep.subr.bf16.mxu0 0
  %1546 = vmatpush1.bf16.msra.mxu0 0
  %1547 = vmatprep.subr.bf16.mxu0 0
  %1548 = vmatpush1.bf16.msra.mxu0 0
  %1549 = vmatprep.subr.bf16.mxu0 0
  %1550 = vmatpush1.bf16.msra.mxu0 0
  %1551 = vmatprep.mubr.bf16.mxu0 0
  %1552 = vmatmul.mubr.bf16.gmra.mrb[0].mxu0 %v1517
  %v1553 = vpop.f32.mrb[0].mxu0
  %v1554 = vadd.f32 %v1279, %v1553
  %v1555 = vpop.f32.mrb[0].mxu0
  %v1556 = vadd.f32 %v1283, %v1555
  %v1557 = vpop.f32.mrb[0].mxu0
  %v1558 = vadd.f32 %v1279, %v1557
  %v1559 = vpop.f32.mrb[0].mxu0
  %v1560 = vadd.f32 %v1283, %v1559
  %1561 = vdwg.mxu0
  %1562 = vmatprep.subr.bf16.mxu0 %v1455
  %1563 = vmatpush1.bf16.msra.mxu0 %v1454
  %1564 = vmatprep.subr.bf16.mxu0 %v1471
  %1565 = vmatpush1.bf16.msra.mxu0 %v1470
  %1566 = vmatprep.subr.bf16.mxu0 0
  %1567 = vmatpush1.bf16.msra.mxu0 0
  %1568 = vmatprep.subr.bf16.mxu0 0
  %1569 = vmatpush1.bf16.msra.mxu0 0
  %1570 = vmatprep.subr.bf16.mxu0 0
  %1571 = vmatpush1.bf16.msra.mxu0 0
  %1572 = vmatprep.subr.bf16.mxu0 0
  %1573 = vmatpush1.bf16.msra.mxu0 0
  %1574 = vmatprep.subr.bf16.mxu0 0
  %1575 = vmatpush1.bf16.msra.mxu0 0
  %1576 = vmatprep.subr.bf16.mxu0 0
  %1577 = vmatpush1.bf16.msra.mxu0 0
  %1578 = vmatprep.subr.bf16.mxu0 0
  %1579 = vmatpush1.bf16.msra.mxu0 0
  %1580 = vmatprep.subr.bf16.mxu0 0
  %1581 = vmatpush1.bf16.msra.mxu0 0
  %1582 = vmatprep.subr.bf16.mxu0 0
  %1583 = vmatpush1.bf16.msra.mxu0 0
  %1584 = vmatprep.subr.bf16.mxu0 0
  %1585 = vmatpush1.bf16.msra.mxu0 0
  %1586 = vmatprep.subr.bf16.mxu0 0
  %1587 = vmatpush1.bf16.msra.mxu0 0
  %1588 = vmatprep.subr.bf16.mxu0 0
  %1589 = vmatpush1.bf16.msra.mxu0 0
  %1590 = vmatprep.subr.bf16.mxu0 0
  %1591 = vmatpush1.bf16.msra.mxu0 0
  %1592 = vmatprep.subr.bf16.mxu0 0
  %1593 = vmatpush1.bf16.msra.mxu0 0
  %1594 = vmatprep.mubr.bf16.mxu0 0
  %1595 = vmatmul.mubr.bf16.gmra.mrb[0].mxu0 %v1517
  %v1596 = vpop.f32.mrb[0].mxu0
  %v1597 = vadd.f32 %v1287, %v1596
  %v1598 = vpop.f32.mrb[0].mxu0
  %v1599 = vadd.f32 %v1291, %v1598
  %v1600 = vpop.f32.mrb[0].mxu0
  %v1601 = vadd.f32 %v1287, %v1600
  %v1602 = vpop.f32.mrb[0].mxu0
  %v1603 = vadd.f32 %v1291, %v1602
  %1604 = vdwg.mxu0
  %1605 = vmatprep.subr.bf16.mxu0 %v1457
  %1606 = vmatpush1.bf16.msra.mxu0 %v1456
  %1607 = vmatprep.subr.bf16.mxu0 %v1473
  %1608 = vmatpush1.bf16.msra.mxu0 %v1472
  %1609 = vmatprep.subr.bf16.mxu0 0
  %1610 = vmatpush1.bf16.msra.mxu0 0
  %1611 = vmatprep.subr.bf16.mxu0 0
  %1612 = vmatpush1.bf16.msra.mxu0 0
  %1613 = vmatprep.subr.bf16.mxu0 0
  %1614 = vmatpush1.bf16.msra.mxu0 0
  %1615 = vmatprep.subr.bf16.mxu0 0
  %1616 = vmatpush1.bf16.msra.mxu0 0
  %1617 = vmatprep.subr.bf16.mxu0 0
  %1618 = vmatpush1.bf16.msra.mxu0 0
  %1619 = vmatprep.subr.bf16.mxu0 0
  %1620 = vmatpush1.bf16.msra.mxu0 0
  %1621 = vmatprep.subr.bf16.mxu0 0
  %1622 = vmatpush1.bf16.msra.mxu0 0
  %1623 = vmatprep.subr.bf16.mxu0 0
  %1624 = vmatpush1.bf16.msra.mxu0 0
  %1625 = vmatprep.subr.bf16.mxu0 0
  %1626 = vmatpush1.bf16.msra.mxu0 0
  %1627 = vmatprep.subr.bf16.mxu0 0
  %1628 = vmatpush1.bf16.msra.mxu0 0
  %1629 = vmatprep.subr.bf16.mxu0 0
  %1630 = vmatpush1.bf16.msra.mxu0 0
  %1631 = vmatprep.subr.bf16.mxu0 0
  %1632 = vmatpush1.bf16.msra.mxu0 0
  %1633 = vmatprep.subr.bf16.mxu0 0
  %1634 = vmatpush1.bf16.msra.mxu0 0
  %1635 = vmatprep.subr.bf16.mxu0 0
  %1636 = vmatpush1.bf16.msra.mxu0 0
  %1637 = vmatprep.mubr.bf16.mxu0 0
  %1638 = vmatmul.mubr.bf16.gmra.mrb[0].mxu0 %v1517
  %v1639 = vpop.f32.mrb[0].mxu0
  %v1640 = vadd.f32 %v1295, %v1639
  %v1641 = vpop.f32.mrb[0].mxu0
  %v1642 = vadd.f32 %v1299, %v1641
  %v1643 = vpop.f32.mrb[0].mxu0
  %v1644 = vadd.f32 %v1295, %v1643
  %v1645 = vpop.f32.mrb[0].mxu0
  %v1646 = vadd.f32 %v1299, %v1645
  %1647 = vdwg.mxu0
  %1648 = vmatprep.subr.bf16.mxu0 %v1459
  %1649 = vmatpush1.bf16.msra.mxu0 %v1458
  %1650 = vmatprep.subr.bf16.mxu0 %v1475
  %1651 = vmatpush1.bf16.msra.mxu0 %v1474
  %1652 = vmatprep.subr.bf16.mxu0 0
  %1653 = vmatpush1.bf16.msra.mxu0 0
  %1654 = vmatprep.subr.bf16.mxu0 0
  %1655 = vmatpush1.bf16.msra.mxu0 0
  %1656 = vmatprep.subr.bf16.mxu0 0
  %1657 = vmatpush1.bf16.msra.mxu0 0
  %1658 = vmatprep.subr.bf16.mxu0 0
  %1659 = vmatpush1.bf16.msra.mxu0 0
  %1660 = vmatprep.subr.bf16.mxu0 0
  %1661 = vmatpush1.bf16.msra.mxu0 0
  %1662 = vmatprep.subr.bf16.mxu0 0
  %1663 = vmatpush1.bf16.msra.mxu0 0
  %1664 = vmatprep.subr.bf16.mxu0 0
  %1665 = vmatpush1.bf16.msra.mxu0 0
  %1666 = vmatprep.subr.bf16.mxu0 0
  %1667 = vmatpush1.bf16.msra.mxu0 0
  %1668 = vmatprep.subr.bf16.mxu0 0
  %1669 = vmatpush1.bf16.msra.mxu0 0
  %1670 = vmatprep.subr.bf16.mxu0 0
  %1671 = vmatpush1.bf16.msra.mxu0 0
  %1672 = vmatprep.subr.bf16.mxu0 0
  %1673 = vmatpush1.bf16.msra.mxu0 0
  %1674 = vmatprep.subr.bf16.mxu0 0
  %1675 = vmatpush1.bf16.msra.mxu0 0
  %1676 = vmatprep.subr.bf16.mxu0 0
  %1677 = vmatpush1.bf16.msra.mxu0 0
  %1678 = vmatprep.subr.bf16.mxu0 0
  %1679 = vmatpush1.bf16.msra.mxu0 0
  %1680 = vmatprep.mubr.bf16.mxu0 0
  %1681 = vmatmul.mubr.bf16.gmra.mrb[0].mxu0 %v1517
  %v1682 = vpop.f32.mrb[0].mxu0
  %v1683 = vadd.f32 %v1303, %v1682
  %v1684 = vpop.f32.mrb[0].mxu0
  %v1685 = vadd.f32 %v1307, %v1684
  %v1686 = vpop.f32.mrb[0].mxu0
  %v1687 = vadd.f32 %v1303, %v1686
  %v1688 = vpop.f32.mrb[0].mxu0
  %v1689 = vadd.f32 %v1307, %v1688
  %1690 = vdwg.mxu0
  %1691 = vmatprep.subr.bf16.mxu0 %v1461
  %1692 = vmatpush1.bf16.msra.mxu0 %v1460
  %1693 = vmatprep.subr.bf16.mxu0 %v1477
  %1694 = vmatpush1.bf16.msra.mxu0 %v1476
  %1695 = vmatprep.subr.bf16.mxu0 0
  %1696 = vmatpush1.bf16.msra.mxu0 0
  %1697 = vmatprep.subr.bf16.mxu0 0
  %1698 = vmatpush1.bf16.msra.mxu0 0
  %1699 = vmatprep.subr.bf16.mxu0 0
  %1700 = vmatpush1.bf16.msra.mxu0 0
  %1701 = vmatprep.subr.bf16.mxu0 0
  %1702 = vmatpush1.bf16.msra.mxu0 0
  %1703 = vmatprep.subr.bf16.mxu0 0
  %1704 = vmatpush1.bf16.msra.mxu0 0
  %1705 = vmatprep.subr.bf16.mxu0 0
  %1706 = vmatpush1.bf16.msra.mxu0 0
  %1707 = vmatprep.subr.bf16.mxu0 0
  %1708 = vmatpush1.bf16.msra.mxu0 0
  %1709 = vmatprep.subr.bf16.mxu0 0
  %1710 = vmatpush1.bf16.msra.mxu0 0
  %1711 = vmatprep.subr.bf16.mxu0 0
  %1712 = vmatpush1.bf16.msra.mxu0 0
  %1713 = vmatprep.subr.bf16.mxu0 0
  %1714 = vmatpush1.bf16.msra.mxu0 0
  %1715 = vmatprep.subr.bf16.mxu0 0
  %1716 = vmatpush1.bf16.msra.mxu0 0
  %1717 = vmatprep.subr.bf16.mxu0 0
  %1718 = vmatpush1.bf16.msra.mxu0 0
  %1719 = vmatprep.subr.bf16.mxu0 0
  %1720 = vmatpush1.bf16.msra.mxu0 0
  %1721 = vmatprep.subr.bf16.mxu0 0
  %1722 = vmatpush1.bf16.msra.mxu0 0
  %1723 = vmatprep.mubr.bf16.mxu0 0
  %1724 = vmatmul.mubr.bf16.gmra.mrb[0].mxu0 %v1517
  %v1725 = vpop.f32.mrb[0].mxu0
  %v1726 = vadd.f32 %v1311, %v1725
  %v1727 = vpop.f32.mrb[0].mxu0
  %v1728 = vadd.f32 %v1315, %v1727
  %v1729 = vpop.f32.mrb[0].mxu0
  %v1730 = vadd.f32 %v1311, %v1729
  %v1731 = vpop.f32.mrb[0].mxu0
  %v1732 = vadd.f32 %v1315, %v1731
  %1733 = vdwg.mxu0
  %1734 = vmatprep.subr.bf16.mxu0 %v1463
  %1735 = vmatpush1.bf16.msra.mxu0 %v1462
  %1736 = vmatprep.subr.bf16.mxu0 %v1479
  %1737 = vmatpush1.bf16.msra.mxu0 %v1478
  %1738 = vmatprep.subr.bf16.mxu0 0
  %1739 = vmatpush1.bf16.msra.mxu0 0
  %1740 = vmatprep.subr.bf16.mxu0 0
  %1741 = vmatpush1.bf16.msra.mxu0 0
  %1742 = vmatprep.subr.bf16.mxu0 0
  %1743 = vmatpush1.bf16.msra.mxu0 0
  %1744 = vmatprep.subr.bf16.mxu0 0
  %1745 = vmatpush1.bf16.msra.mxu0 0
  %1746 = vmatprep.subr.bf16.mxu0 0
  %1747 = vmatpush1.bf16.msra.mxu0 0
  %1748 = vmatprep.subr.bf16.mxu0 0
  %1749 = vmatpush1.bf16.msra.mxu0 0
  %1750 = vmatprep.subr.bf16.mxu0 0
  %1751 = vmatpush1.bf16.msra.mxu0 0
  %1752 = vmatprep.subr.bf16.mxu0 0
  %1753 = vmatpush1.bf16.msra.mxu0 0
  %1754 = vmatprep.subr.bf16.mxu0 0
  %1755 = vmatpush1.bf16.msra.mxu0 0
  %1756 = vmatprep.subr.bf16.mxu0 0
  %1757 = vmatpush1.bf16.msra.mxu0 0
  %1758 = vmatprep.subr.bf16.mxu0 0
  %1759 = vmatpush1.bf16.msra.mxu0 0
  %1760 = vmatprep.subr.bf16.mxu0 0
  %1761 = vmatpush1.bf16.msra.mxu0 0
  %1762 = vmatprep.subr.bf16.mxu0 0
  %1763 = vmatpush1.bf16.msra.mxu0 0
  %1764 = vmatprep.subr.bf16.mxu0 0
  %1765 = vmatpush1.bf16.msra.mxu0 0
  %1766 = vmatprep.mubr.bf16.mxu0 0
  %1767 = vmatmul.mubr.bf16.gmra.mrb[0].mxu0 %v1517
  %v1768 = vpop.f32.mrb[0].mxu0
  %v1769 = vadd.f32 %v1319, %v1768
  %v1770 = vpop.f32.mrb[0].mxu0
  %v1771 = vadd.f32 %v1323, %v1770
  %v1772 = vpop.f32.mrb[0].mxu0
  %v1773 = vadd.f32 %v1319, %v1772
  %v1774 = vpop.f32.mrb[0].mxu0
  %v1775 = vadd.f32 %v1323, %v1774
  %1776 = vdwg.mxu0
  %1777 = vmatprep.subr.bf16.mxu0 %v1465
  %1778 = vmatpush1.bf16.msra.mxu0 %v1464
  %1779 = vmatprep.subr.bf16.mxu0 %v1481
  %1780 = vmatpush1.bf16.msra.mxu0 %v1480
  %1781 = vmatprep.subr.bf16.mxu0 0
  %1782 = vmatpush1.bf16.msra.mxu0 0
  %1783 = vmatprep.subr.bf16.mxu0 0
  %1784 = vmatpush1.bf16.msra.mxu0 0
  %1785 = vmatprep.subr.bf16.mxu0 0
  %1786 = vmatpush1.bf16.msra.mxu0 0
  %1787 = vmatprep.subr.bf16.mxu0 0
  %1788 = vmatpush1.bf16.msra.mxu0 0
  %1789 = vmatprep.subr.bf16.mxu0 0
  %1790 = vmatpush1.bf16.msra.mxu0 0
  %1791 = vmatprep.subr.bf16.mxu0 0
  %1792 = vmatpush1.bf16.msra.mxu0 0
  %1793 = vmatprep.subr.bf16.mxu0 0
  %1794 = vmatpush1.bf16.msra.mxu0 0
  %1795 = vmatprep.subr.bf16.mxu0 0
  %1796 = vmatpush1.bf16.msra.mxu0 0
  %1797 = vmatprep.subr.bf16.mxu0 0
  %1798 = vmatpush1.bf16.msra.mxu0 0
  %1799 = vmatprep.subr.bf16.mxu0 0
  %1800 = vmatpush1.bf16.msra.mxu0 0
  %1801 = vmatprep.subr.bf16.mxu0 0
  %1802 = vmatpush1.bf16.msra.mxu0 0
  %1803 = vmatprep.subr.bf16.mxu0 0
  %1804 = vmatpush1.bf16.msra.mxu0 0
  %1805 = vmatprep.subr.bf16.mxu0 0
  %1806 = vmatpush1.bf16.msra.mxu0 0
  %1807 = vmatprep.subr.bf16.mxu0 0
  %1808 = vmatpush1.bf16.msra.mxu0 0
  %1809 = vmatprep.mubr.bf16.mxu0 0
  %1810 = vmatmul.mubr.bf16.gmra.mrb[0].mxu0 %v1517
  %v1811 = vpop.f32.mrb[0].mxu0
  %v1812 = vadd.f32 %v1327, %v1811
  %v1813 = vpop.f32.mrb[0].mxu0
  %v1814 = vadd.f32 %v1331, %v1813
  %v1815 = vpop.f32.mrb[0].mxu0
  %v1816 = vadd.f32 %v1327, %v1815
  %v1817 = vpop.f32.mrb[0].mxu0
  %v1818 = vadd.f32 %v1331, %v1817
  %1819 = vdwg.mxu0
  %1820 = vmatprep.subr.bf16.mxu0 %v1467
  %1821 = vmatpush1.bf16.msra.mxu0 %v1466
  %1822 = vmatprep.subr.bf16.mxu0 %v1483
  %1823 = vmatpush1.bf16.msra.mxu0 %v1482
  %1824 = vmatprep.subr.bf16.mxu0 0
  %1825 = vmatpush1.bf16.msra.mxu0 0
  %1826 = vmatprep.subr.bf16.mxu0 0
  %1827 = vmatpush1.bf16.msra.mxu0 0
  %1828 = vmatprep.subr.bf16.mxu0 0
  %1829 = vmatpush1.bf16.msra.mxu0 0
  %1830 = vmatprep.subr.bf16.mxu0 0
  %1831 = vmatpush1.bf16.msra.mxu0 0
  %1832 = vmatprep.subr.bf16.mxu0 0
  %1833 = vmatpush1.bf16.msra.mxu0 0
  %1834 = vmatprep.subr.bf16.mxu0 0
  %1835 = vmatpush1.bf16.msra.mxu0 0
  %1836 = vmatprep.subr.bf16.mxu0 0
  %1837 = vmatpush1.bf16.msra.mxu0 0
  %1838 = vmatprep.subr.bf16.mxu0 0
  %1839 = vmatpush1.bf16.msra.mxu0 0
  %1840 = vmatprep.subr.bf16.mxu0 0
  %1841 = vmatpush1.bf16.msra.mxu0 0
  %1842 = vmatprep.subr.bf16.mxu0 0
  %1843 = vmatpush1.bf16.msra.mxu0 0
  %1844 = vmatprep.subr.bf16.mxu0 0
  %1845 = vmatpush1.bf16.msra.mxu0 0
  %1846 = vmatprep.subr.bf16.mxu0 0
  %1847 = vmatpush1.bf16.msra.mxu0 0
  %1848 = vmatprep.subr.bf16.mxu0 0
  %1849 = vmatpush1.bf16.msra.mxu0 0
  %1850 = vmatprep.subr.bf16.mxu0 0
  %1851 = vmatpush1.bf16.msra.mxu0 0
  %1852 = vmatprep.mubr.bf16.mxu0 0
  %1853 = vmatmul.mubr.bf16.gmra.mrb[0].mxu0 %v1517
  %v1854 = vpop.f32.mrb[0].mxu0
  %v1855 = vadd.f32 %v1335, %v1854
  %v1856 = vpop.f32.mrb[0].mxu0
  %v1857 = vadd.f32 %v1339, %v1856
  %v1858 = vpop.f32.mrb[0].mxu0
  %v1859 = vadd.f32 %v1335, %v1858
  %v1860 = vpop.f32.mrb[0].mxu0
  %v1861 = vadd.f32 %v1339, %v1860
  %1862 = vdwg.mxu0
  %v1863 = vmax.f32 %v1554, 0.0
  %v1864 = vmax.f32 %v1556, 0.0
  %v1865 = vmax.f32 %v1597, 0.0
  %v1866 = vmax.f32 %v1599, 0.0
  %v1867 = vmax.f32 %v1640, 0.0
  %v1868 = vmax.f32 %v1642, 0.0
  %v1869 = vmax.f32 %v1683, 0.0
  %v1870 = vmax.f32 %v1685, 0.0
  %v1871 = vmax.f32 %v1726, 0.0
  %v1872 = vmax.f32 %v1728, 0.0
  %v1873 = vmax.f32 %v1769, 0.0
  %v1874 = vmax.f32 %v1771, 0.0
  %v1875 = vmax.f32 %v1812, 0.0
  %v1876 = vmax.f32 %v1814, 0.0
  %v1877 = vmax.f32 %v1855, 0.0
  %v1878 = vmax.f32 %v1857, 0.0
  %v1879 = vmax.f32 %v1558, 0.0
  %v1880 = vmax.f32 %v1560, 0.0
  %v1881 = vmax.f32 %v1601, 0.0
  %v1882 = vmax.f32 %v1603, 0.0
  %v1883 = vmax.f32 %v1644, 0.0
  %v1884 = vmax.f32 %v1646, 0.0
  %v1885 = vmax.f32 %v1687, 0.0
  %v1886 = vmax.f32 %v1689, 0.0
  %v1887 = vmax.f32 %v1730, 0.0
  %v1888 = vmax.f32 %v1732, 0.0
  %v1889 = vmax.f32 %v1773, 0.0
  %v1890 = vmax.f32 %v1775, 0.0
  %v1891 = vmax.f32 %v1816, 0.0
  %v1892 = vmax.f32 %v1818, 0.0
  %v1893 = vmax.f32 %v1859, 0.0
  %v1894 = vmax.f32 %v1861, 0.0
  %v1895 = vpack.c.bf16 %v1879, %v1863
  %v1896 = vpack.c.bf16 %v1880, %v1864
  %v1897 = vpack.c.bf16 %v1881, %v1865
  %v1898 = vpack.c.bf16 %v1882, %v1866
  %v1899 = vpack.c.bf16 %v1883, %v1867
  %v1900 = vpack.c.bf16 %v1884, %v1868
  %v1901 = vpack.c.bf16 %v1885, %v1869
  %v1902 = vpack.c.bf16 %v1886, %v1870
  %v1903 = vpack.c.bf16 %v1887, %v1871
  %v1904 = vpack.c.bf16 %v1888, %v1872
  %v1905 = vpack.c.bf16 %v1889, %v1873
  %v1906 = vpack.c.bf16 %v1890, %v1874
  %v1907 = vpack.c.bf16 %v1891, %v1875
  %v1908 = vpack.c.bf16 %v1892, %v1876
  %v1909 = vpack.c.bf16 %v1893, %v1877
  %v1910 = vpack.c.bf16 %v1894, %v1878
  %v1911 = vld [vmem:[%s3] sm:$0xf]
  %v1912 = vld [vmem:[%s3 + $0x4] sm:$0xf]
  %v1913 = vld [vmem:[%s3 + $0x8] sm:$0xf]
  %v1914 = vld [vmem:[%s3 + $0xc] sm:$0xf]
  %v1915 = vld [vmem:[%s3 + $0x10] sm:$0xf]
  %v1916 = vld [vmem:[%s3 + $0x14] sm:$0xf]
  %v1917 = vld [vmem:[%s3 + $0x18] sm:$0xf]
  %v1918 = vld [vmem:[%s3 + $0x1c] sm:$0xf]
  %v1919 = vld [vmem:[%s3 + $0x20] sm:$0xf]
  %v1920 = vld [vmem:[%s3 + $0x24] sm:$0xf]
  %v1921 = vld [vmem:[%s3 + $0x28] sm:$0xf]
  %v1922 = vld [vmem:[%s3 + $0x2c] sm:$0xf]
  %v1923 = vld [vmem:[%s3 + $0x30] sm:$0xf]
  %v1924 = vld [vmem:[%s3 + $0x34] sm:$0xf]
  %v1925 = vld [vmem:[%s3 + $0x38] sm:$0xf]
  %v1926 = vld [vmem:[%s3 + $0x3c] sm:$0xf]
  %v1927 = vld [vmem:[%s3 + $0x40] sm:$0xf]
  %v1928 = vld [vmem:[%s3 + $0x44] sm:$0xf]
  %v1929 = vld [vmem:[%s3 + $0x48] sm:$0xf]
  %v1930 = vld [vmem:[%s3 + $0x4c] sm:$0xf]
  %v1931 = vld [vmem:[%s3 + $0x50] sm:$0xf]
  %v1932 = vld [vmem:[%s3 + $0x54] sm:$0xf]
  %v1933 = vld [vmem:[%s3 + $0x58] sm:$0xf]
  %v1934 = vld [vmem:[%s3 + $0x5c] sm:$0xf]
  %v1935 = vld [vmem:[%s3 + $0x60] sm:$0xf]
  %v1936 = vld [vmem:[%s3 + $0x64] sm:$0xf]
  %v1937 = vld [vmem:[%s3 + $0x68] sm:$0xf]
  %v1938 = vld [vmem:[%s3 + $0x6c] sm:$0xf]
  %v1939 = vld [vmem:[%s3 + $0x70] sm:$0xf]
  %v1940 = vld [vmem:[%s3 + $0x74] sm:$0xf]
  %v1941 = vld [vmem:[%s3 + $0x78] sm:$0xf]
  %v1942 = vld [vmem:[%s3 + $0x7c] sm:$0xf]
  %v1943 = vld [vmem:[%s3 + $0x80] sm:$0xf]
  %v1944 = vld [vmem:[%s3 + $0x84] sm:$0xf]
  %v1945 = vld [vmem:[%s3 + $0x88] sm:$0xf]
  %v1946 = vld [vmem:[%s3 + $0x8c] sm:$0xf]
  %v1947 = vld [vmem:[%s3 + $0x90] sm:$0xf]
  %v1948 = vld [vmem:[%s3 + $0x94] sm:$0xf]
  %v1949 = vld [vmem:[%s3 + $0x98] sm:$0xf]
  %v1950 = vld [vmem:[%s3 + $0x9c] sm:$0xf]
  %v1951 = vld [vmem:[%s3 + $0xa0] sm:$0xf]
  %v1952 = vld [vmem:[%s3 + $0xa4] sm:$0xf]
  %v1953 = vld [vmem:[%s3 + $0xa8] sm:$0xf]
  %v1954 = vld [vmem:[%s3 + $0xac] sm:$0xf]
  %v1955 = vld [vmem:[%s3 + $0xb0] sm:$0xf]
  %v1956 = vld [vmem:[%s3 + $0xb4] sm:$0xf]
  %v1957 = vld [vmem:[%s3 + $0xb8] sm:$0xf]
  %v1958 = vld [vmem:[%s3 + $0xbc] sm:$0xf]
  %v1959 = vld [vmem:[%s3 + $0xc0] sm:$0xf]
  %v1960 = vld [vmem:[%s3 + $0xc4] sm:$0xf]
  %v1961 = vld [vmem:[%s3 + $0xc8] sm:$0xf]
  %v1962 = vld [vmem:[%s3 + $0xcc] sm:$0xf]
  %v1963 = vld [vmem:[%s3 + $0xd0] sm:$0xf]
  %v1964 = vld [vmem:[%s3 + $0xd4] sm:$0xf]
  %v1965 = vld [vmem:[%s3 + $0xd8] sm:$0xf]
  %v1966 = vld [vmem:[%s3 + $0xdc] sm:$0xf]
  %v1967 = vld [vmem:[%s3 + $0xe0] sm:$0xf]
  %v1968 = vld [vmem:[%s3 + $0xe4] sm:$0xf]
  %v1969 = vld [vmem:[%s3 + $0xe8] sm:$0xf]
  %v1970 = vld [vmem:[%s3 + $0xec] sm:$0xf]
  %v1971 = vld [vmem:[%s3 + $0xf0] sm:$0xf]
  %v1972 = vld [vmem:[%s3 + $0xf4] sm:$0xf]
  %v1973 = vld [vmem:[%s3 + $0xf8] sm:$0xf]
  %v1974 = vld [vmem:[%s3 + $0xfc] sm:$0xf]
  %v1975 = vld [vmem:[%s3 + $0x100] sm:$0xf]
  %v1976 = vld [vmem:[%s3 + $0x104] sm:$0xf]
  %v1977 = vld [vmem:[%s3 + $0x108] sm:$0xf]
  %v1978 = vld [vmem:[%s3 + $0x10c] sm:$0xf]
  %v1979 = vld [vmem:[%s3 + $0x110] sm:$0xf]
  %v1980 = vld [vmem:[%s3 + $0x114] sm:$0xf]
  %v1981 = vld [vmem:[%s3 + $0x118] sm:$0xf]
  %v1982 = vld [vmem:[%s3 + $0x11c] sm:$0xf]
  %v1983 = vld [vmem:[%s3 + $0x120] sm:$0xf]
  %v1984 = vld [vmem:[%s3 + $0x124] sm:$0xf]
  %v1985 = vld [vmem:[%s3 + $0x128] sm:$0xf]
  %v1986 = vld [vmem:[%s3 + $0x12c] sm:$0xf]
  %v1987 = vld [vmem:[%s3 + $0x130] sm:$0xf]
  %v1988 = vld [vmem:[%s3 + $0x134] sm:$0xf]
  %v1989 = vld [vmem:[%s3 + $0x138] sm:$0xf]
  %v1990 = vld [vmem:[%s3 + $0x13c] sm:$0xf]
  %v1991 = vld [vmem:[%s3 + $0x140] sm:$0xf]
  %v1992 = vld [vmem:[%s3 + $0x144] sm:$0xf]
  %v1993 = vld [vmem:[%s3 + $0x148] sm:$0xf]
  %v1994 = vld [vmem:[%s3 + $0x14c] sm:$0xf]
  %v1995 = vld [vmem:[%s3 + $0x150] sm:$0xf]
  %v1996 = vld [vmem:[%s3 + $0x154] sm:$0xf]
  %v1997 = vld [vmem:[%s3 + $0x158] sm:$0xf]
  %v1998 = vld [vmem:[%s3 + $0x15c] sm:$0xf]
  %v1999 = vld [vmem:[%s3 + $0x160] sm:$0xf]
  %v2000 = vld [vmem:[%s3 + $0x164] sm:$0xf]
  %v2001 = vld [vmem:[%s3 + $0x168] sm:$0xf]
  %v2002 = vld [vmem:[%s3 + $0x16c] sm:$0xf]
  %v2003 = vld [vmem:[%s3 + $0x170] sm:$0xf]
  %v2004 = vld [vmem:[%s3 + $0x174] sm:$0xf]
  %v2005 = vld [vmem:[%s3 + $0x178] sm:$0xf]
  %v2006 = vld [vmem:[%s3 + $0x17c] sm:$0xf]
  %v2007 = vld [vmem:[%s3 + $0x180] sm:$0xf]
  %v2008 = vld [vmem:[%s3 + $0x184] sm:$0xf]
  %v2009 = vld [vmem:[%s3 + $0x188] sm:$0xf]
  %v2010 = vld [vmem:[%s3 + $0x18c] sm:$0xf]
  %v2011 = vld [vmem:[%s3 + $0x190] sm:$0xf]
  %v2012 = vld [vmem:[%s3 + $0x194] sm:$0xf]
  %v2013 = vld [vmem:[%s3 + $0x198] sm:$0xf]
  %v2014 = vld [vmem:[%s3 + $0x19c] sm:$0xf]
  %v2015 = vld [vmem:[%s3 + $0x1a0] sm:$0xf]
  %v2016 = vld [vmem:[%s3 + $0x1a4] sm:$0xf]
  %v2017 = vld [vmem:[%s3 + $0x1a8] sm:$0xf]
  %v2018 = vld [vmem:[%s3 + $0x1ac] sm:$0xf]
  %v2019 = vld [vmem:[%s3 + $0x1b0] sm:$0xf]
  %v2020 = vld [vmem:[%s3 + $0x1b4] sm:$0xf]
  %v2021 = vld [vmem:[%s3 + $0x1b8] sm:$0xf]
  %v2022 = vld [vmem:[%s3 + $0x1bc] sm:$0xf]
  %v2023 = vld [vmem:[%s3 + $0x1c0] sm:$0xf]
  %v2024 = vld [vmem:[%s3 + $0x1c4] sm:$0xf]
  %v2025 = vld [vmem:[%s3 + $0x1c8] sm:$0xf]
  %v2026 = vld [vmem:[%s3 + $0x1cc] sm:$0xf]
  %v2027 = vld [vmem:[%s3 + $0x1d0] sm:$0xf]
  %v2028 = vld [vmem:[%s3 + $0x1d4] sm:$0xf]
  %v2029 = vld [vmem:[%s3 + $0x1d8] sm:$0xf]
  %v2030 = vld [vmem:[%s3 + $0x1dc] sm:$0xf]
  %v2031 = vld [vmem:[%s3 + $0x1e0] sm:$0xf]
  %v2032 = vld [vmem:[%s3 + $0x1e4] sm:$0xf]
  %v2033 = vld [vmem:[%s3 + $0x1e8] sm:$0xf]
  %v2034 = vld [vmem:[%s3 + $0x1ec] sm:$0xf]
  %v2035 = vld [vmem:[%s3 + $0x1f0] sm:$0xf]
  %v2036 = vld [vmem:[%s3 + $0x1f4] sm:$0xf]
  %v2037 = vld [vmem:[%s3 + $0x1f8] sm:$0xf]
  %v2038 = vld [vmem:[%s3 + $0x1fc] sm:$0xf]
  %v2039 = vld [vmem:[%s3 + $0x200] sm:$0xf]
  %v2040 = vld [vmem:[%s3 + $0x204] sm:$0xf]
  %v2041 = vld [vmem:[%s3 + $0x208] sm:$0xf]
  %v2042 = vld [vmem:[%s3 + $0x20c] sm:$0xf]
  %v2043 = vld [vmem:[%s3 + $0x210] sm:$0xf]
  %v2044 = vld [vmem:[%s3 + $0x214] sm:$0xf]
  %v2045 = vld [vmem:[%s3 + $0x218] sm:$0xf]
  %v2046 = vld [vmem:[%s3 + $0x21c] sm:$0xf]
  %v2047 = vld [vmem:[%s3 + $0x220] sm:$0xf]
  %v2048 = vld [vmem:[%s3 + $0x224] sm:$0xf]
  %v2049 = vld [vmem:[%s3 + $0x228] sm:$0xf]
  %v2050 = vld [vmem:[%s3 + $0x22c] sm:$0xf]
  %v2051 = vld [vmem:[%s3 + $0x230] sm:$0xf]
  %v2052 = vld [vmem:[%s3 + $0x234] sm:$0xf]
  %v2053 = vld [vmem:[%s3 + $0x238] sm:$0xf]
  %v2054 = vld [vmem:[%s3 + $0x23c] sm:$0xf]
  %v2055 = vld [vmem:[%s3 + $0x240] sm:$0xf]
  %v2056 = vld [vmem:[%s3 + $0x244] sm:$0xf]
  %v2057 = vld [vmem:[%s3 + $0x248] sm:$0xf]
  %v2058 = vld [vmem:[%s3 + $0x24c] sm:$0xf]
  %v2059 = vld [vmem:[%s3 + $0x250] sm:$0xf]
  %v2060 = vld [vmem:[%s3 + $0x254] sm:$0xf]
  %v2061 = vld [vmem:[%s3 + $0x258] sm:$0xf]
  %v2062 = vld [vmem:[%s3 + $0x25c] sm:$0xf]
  %v2063 = vld [vmem:[%s3 + $0x260] sm:$0xf]
  %v2064 = vld [vmem:[%s3 + $0x264] sm:$0xf]
  %v2065 = vld [vmem:[%s3 + $0x268] sm:$0xf]
  %v2066 = vld [vmem:[%s3 + $0x26c] sm:$0xf]
  %v2067 = vld [vmem:[%s3 + $0x270] sm:$0xf]
  %v2068 = vld [vmem:[%s3 + $0x274] sm:$0xf]
  %v2069 = vld [vmem:[%s3 + $0x278] sm:$0xf]
  %v2070 = vld [vmem:[%s3 + $0x27c] sm:$0xf]
  %v2071 = vld [vmem:[%s3 + $0x280] sm:$0xf]
  %v2072 = vld [vmem:[%s3 + $0x284] sm:$0xf]
  %v2073 = vld [vmem:[%s3 + $0x288] sm:$0xf]
  %v2074 = vld [vmem:[%s3 + $0x28c] sm:$0xf]
  %v2075 = vld [vmem:[%s3 + $0x290] sm:$0xf]
  %v2076 = vld [vmem:[%s3 + $0x294] sm:$0xf]
  %v2077 = vld [vmem:[%s3 + $0x298] sm:$0xf]
  %v2078 = vld [vmem:[%s3 + $0x29c] sm:$0xf]
  %v2079 = vld [vmem:[%s3 + $0x2a0] sm:$0xf]
  %v2080 = vld [vmem:[%s3 + $0x2a4] sm:$0xf]
  %v2081 = vld [vmem:[%s3 + $0x2a8] sm:$0xf]
  %v2082 = vld [vmem:[%s3 + $0x2ac] sm:$0xf]
  %v2083 = vld [vmem:[%s3 + $0x2b0] sm:$0xf]
  %v2084 = vld [vmem:[%s3 + $0x2b4] sm:$0xf]
  %v2085 = vld [vmem:[%s3 + $0x2b8] sm:$0xf]
  %v2086 = vld [vmem:[%s3 + $0x2bc] sm:$0xf]
  %v2087 = vld [vmem:[%s3 + $0x2c0] sm:$0xf]
  %v2088 = vld [vmem:[%s3 + $0x2c4] sm:$0xf]
  %v2089 = vld [vmem:[%s3 + $0x2c8] sm:$0xf]
  %v2090 = vld [vmem:[%s3 + $0x2cc] sm:$0xf]
  %v2091 = vld [vmem:[%s3 + $0x2d0] sm:$0xf]
  %v2092 = vld [vmem:[%s3 + $0x2d4] sm:$0xf]
  %v2093 = vld [vmem:[%s3 + $0x2d8] sm:$0xf]
  %v2094 = vld [vmem:[%s3 + $0x2dc] sm:$0xf]
  %v2095 = vld [vmem:[%s3 + $0x2e0] sm:$0xf]
  %v2096 = vld [vmem:[%s3 + $0x2e4] sm:$0xf]
  %v2097 = vld [vmem:[%s3 + $0x2e8] sm:$0xf]
  %v2098 = vld [vmem:[%s3 + $0x2ec] sm:$0xf]
  %v2099 = vld [vmem:[%s3 + $0x2f0] sm:$0xf]
  %v2100 = vld [vmem:[%s3 + $0x2f4] sm:$0xf]
  %v2101 = vld [vmem:[%s3 + $0x2f8] sm:$0xf]
  %v2102 = vld [vmem:[%s3 + $0x2fc] sm:$0xf]
  %v2103 = vld [vmem:[%s3 + $0x300] sm:$0xf]
  %v2104 = vld [vmem:[%s3 + $0x304] sm:$0xf]
  %v2105 = vld [vmem:[%s3 + $0x308] sm:$0xf]
  %v2106 = vld [vmem:[%s3 + $0x30c] sm:$0xf]
  %v2107 = vld [vmem:[%s3 + $0x310] sm:$0xf]
  %v2108 = vld [vmem:[%s3 + $0x314] sm:$0xf]
  %v2109 = vld [vmem:[%s3 + $0x318] sm:$0xf]
  %v2110 = vld [vmem:[%s3 + $0x31c] sm:$0xf]
  %v2111 = vld [vmem:[%s3 + $0x320] sm:$0xf]
  %v2112 = vld [vmem:[%s3 + $0x324] sm:$0xf]
  %v2113 = vld [vmem:[%s3 + $0x328] sm:$0xf]
  %v2114 = vld [vmem:[%s3 + $0x32c] sm:$0xf]
  %v2115 = vld [vmem:[%s3 + $0x330] sm:$0xf]
  %v2116 = vld [vmem:[%s3 + $0x334] sm:$0xf]
  %v2117 = vld [vmem:[%s3 + $0x338] sm:$0xf]
  %v2118 = vld [vmem:[%s3 + $0x33c] sm:$0xf]
  %v2119 = vld [vmem:[%s3 + $0x340] sm:$0xf]
  %v2120 = vld [vmem:[%s3 + $0x344] sm:$0xf]
  %v2121 = vld [vmem:[%s3 + $0x348] sm:$0xf]
  %v2122 = vld [vmem:[%s3 + $0x34c] sm:$0xf]
  %v2123 = vld [vmem:[%s3 + $0x350] sm:$0xf]
  %v2124 = vld [vmem:[%s3 + $0x354] sm:$0xf]
  %v2125 = vld [vmem:[%s3 + $0x358] sm:$0xf]
  %v2126 = vld [vmem:[%s3 + $0x35c] sm:$0xf]
  %v2127 = vld [vmem:[%s3 + $0x360] sm:$0xf]
  %v2128 = vld [vmem:[%s3 + $0x364] sm:$0xf]
  %v2129 = vld [vmem:[%s3 + $0x368] sm:$0xf]
  %v2130 = vld [vmem:[%s3 + $0x36c] sm:$0xf]
  %v2131 = vld [vmem:[%s3 + $0x370] sm:$0xf]
  %v2132 = vld [vmem:[%s3 + $0x374] sm:$0xf]
  %v2133 = vld [vmem:[%s3 + $0x378] sm:$0xf]
  %v2134 = vld [vmem:[%s3 + $0x37c] sm:$0xf]
  %v2135 = vld [vmem:[%s3 + $0x380] sm:$0xf]
  %v2136 = vld [vmem:[%s3 + $0x384] sm:$0xf]
  %v2137 = vld [vmem:[%s3 + $0x388] sm:$0xf]
  %v2138 = vld [vmem:[%s3 + $0x38c] sm:$0xf]
  %v2139 = vld [vmem:[%s3 + $0x390] sm:$0xf]
  %v2140 = vld [vmem:[%s3 + $0x394] sm:$0xf]
  %v2141 = vld [vmem:[%s3 + $0x398] sm:$0xf]
  %v2142 = vld [vmem:[%s3 + $0x39c] sm:$0xf]
  %v2143 = vld [vmem:[%s3 + $0x3a0] sm:$0xf]
  %v2144 = vld [vmem:[%s3 + $0x3a4] sm:$0xf]
  %v2145 = vld [vmem:[%s3 + $0x3a8] sm:$0xf]
  %v2146 = vld [vmem:[%s3 + $0x3ac] sm:$0xf]
  %v2147 = vld [vmem:[%s3 + $0x3b0] sm:$0xf]
  %v2148 = vld [vmem:[%s3 + $0x3b4] sm:$0xf]
  %v2149 = vld [vmem:[%s3 + $0x3b8] sm:$0xf]
  %v2150 = vld [vmem:[%s3 + $0x3bc] sm:$0xf]
  %v2151 = vld [vmem:[%s3 + $0x3c0] sm:$0xf]
  %v2152 = vld [vmem:[%s3 + $0x3c4] sm:$0xf]
  %v2153 = vld [vmem:[%s3 + $0x3c8] sm:$0xf]
  %v2154 = vld [vmem:[%s3 + $0x3cc] sm:$0xf]
  %v2155 = vld [vmem:[%s3 + $0x3d0] sm:$0xf]
  %v2156 = vld [vmem:[%s3 + $0x3d4] sm:$0xf]
  %v2157 = vld [vmem:[%s3 + $0x3d8] sm:$0xf]
  %v2158 = vld [vmem:[%s3 + $0x3dc] sm:$0xf]
  %v2159 = vld [vmem:[%s3 + $0x3e0] sm:$0xf]
  %v2160 = vld [vmem:[%s3 + $0x3e4] sm:$0xf]
  %v2161 = vld [vmem:[%s3 + $0x3e8] sm:$0xf]
  %v2162 = vld [vmem:[%s3 + $0x3ec] sm:$0xf]
  %v2163 = vld [vmem:[%s3 + $0x3f0] sm:$0xf]
  %v2164 = vld [vmem:[%s3 + $0x3f4] sm:$0xf]
  %v2165 = vld [vmem:[%s3 + $0x3f8] sm:$0xf]
  %v2166 = vld [vmem:[%s3 + $0x3fc] sm:$0xf]
  %v2168 = vlaneseq
  %v2169 = vshrl.u32 %v2168, 7
  %v2170 = vsub.s32 0, %v2169
  %v2171 = vrot.slane %v30, %v2170
  %v2429 = vunpack.c.l.b16 %v1911
  %v2430 = vunpack.c.l.b16 %v1912
  %v2431 = vunpack.c.l.b16 %v1913
  %v2432 = vunpack.c.l.b16 %v1914
  %v2433 = vunpack.c.l.b16 %v1915
  %v2434 = vunpack.c.l.b16 %v1916
  %v2435 = vunpack.c.l.b16 %v1917
  %v2436 = vunpack.c.l.b16 %v1918
  %v2437 = vunpack.c.l.b16 %v1919
  %v2438 = vunpack.c.l.b16 %v1920
  %v2439 = vunpack.c.l.b16 %v1921
  %v2440 = vunpack.c.l.b16 %v1922
  %v2441 = vunpack.c.l.b16 %v1923
  %v2442 = vunpack.c.l.b16 %v1924
  %v2443 = vunpack.c.l.b16 %v1925
  %v2444 = vunpack.c.l.b16 %v1926
  %v2445 = vunpack.c.l.b16 %v1927
  %v2446 = vunpack.c.l.b16 %v1928
  %v2447 = vunpack.c.l.b16 %v1929
  %v2448 = vunpack.c.l.b16 %v1930
  %v2449 = vunpack.c.l.b16 %v1931
  %v2450 = vunpack.c.l.b16 %v1932
  %v2451 = vunpack.c.l.b16 %v1933
  %v2452 = vunpack.c.l.b16 %v1934
  %v2453 = vunpack.c.l.b16 %v1935
  %v2454 = vunpack.c.l.b16 %v1936
  %v2455 = vunpack.c.l.b16 %v1937
  %v2456 = vunpack.c.l.b16 %v1938
  %v2457 = vunpack.c.l.b16 %v1939
  %v2458 = vunpack.c.l.b16 %v1940
  %v2459 = vunpack.c.l.b16 %v1941
  %v2460 = vunpack.c.l.b16 %v1942
  %v2461 = vunpack.c.l.b16 %v1943
  %v2462 = vunpack.c.l.b16 %v1944
  %v2463 = vunpack.c.l.b16 %v1945
  %v2464 = vunpack.c.l.b16 %v1946
  %v2465 = vunpack.c.l.b16 %v1947
  %v2466 = vunpack.c.l.b16 %v1948
  %v2467 = vunpack.c.l.b16 %v1949
  %v2468 = vunpack.c.l.b16 %v1950
  %v2469 = vunpack.c.l.b16 %v1951
  %v2470 = vunpack.c.l.b16 %v1952
  %v2471 = vunpack.c.l.b16 %v1953
  %v2472 = vunpack.c.l.b16 %v1954
  %v2473 = vunpack.c.l.b16 %v1955
  %v2474 = vunpack.c.l.b16 %v1956
  %v2475 = vunpack.c.l.b16 %v1957
  %v2476 = vunpack.c.l.b16 %v1958
  %v2477 = vunpack.c.l.b16 %v1959
  %v2478 = vunpack.c.l.b16 %v1960
  %v2479 = vunpack.c.l.b16 %v1961
  %v2480 = vunpack.c.l.b16 %v1962
  %v2481 = vunpack.c.l.b16 %v1963
  %v2482 = vunpack.c.l.b16 %v1964
  %v2483 = vunpack.c.l.b16 %v1965
  %v2484 = vunpack.c.l.b16 %v1966
  %v2485 = vunpack.c.l.b16 %v1967
  %v2486 = vunpack.c.l.b16 %v1968
  %v2487 = vunpack.c.l.b16 %v1969
  %v2488 = vunpack.c.l.b16 %v1970
  %v2489 = vunpack.c.l.b16 %v1971
  %v2490 = vunpack.c.l.b16 %v1972
  %v2491 = vunpack.c.l.b16 %v1973
  %v2492 = vunpack.c.l.b16 %v1974
  %v2493 = vunpack.c.l.b16 %v1975
  %v2494 = vunpack.c.l.b16 %v1976
  %v2495 = vunpack.c.l.b16 %v1977
  %v2496 = vunpack.c.l.b16 %v1978
  %v2497 = vunpack.c.l.b16 %v1979
  %v2498 = vunpack.c.l.b16 %v1980
  %v2499 = vunpack.c.l.b16 %v1981
  %v2500 = vunpack.c.l.b16 %v1982
  %v2501 = vunpack.c.l.b16 %v1983
  %v2502 = vunpack.c.l.b16 %v1984
  %v2503 = vunpack.c.l.b16 %v1985
  %v2504 = vunpack.c.l.b16 %v1986
  %v2505 = vunpack.c.l.b16 %v1987
  %v2506 = vunpack.c.l.b16 %v1988
  %v2507 = vunpack.c.l.b16 %v1989
  %v2508 = vunpack.c.l.b16 %v1990
  %v2509 = vunpack.c.l.b16 %v1991
  %v2510 = vunpack.c.l.b16 %v1992
  %v2511 = vunpack.c.l.b16 %v1993
  %v2512 = vunpack.c.l.b16 %v1994
  %v2513 = vunpack.c.l.b16 %v1995
  %v2514 = vunpack.c.l.b16 %v1996
  %v2515 = vunpack.c.l.b16 %v1997
  %v2516 = vunpack.c.l.b16 %v1998
  %v2517 = vunpack.c.l.b16 %v1999
  %v2518 = vunpack.c.l.b16 %v2000
  %v2519 = vunpack.c.l.b16 %v2001
  %v2520 = vunpack.c.l.b16 %v2002
  %v2521 = vunpack.c.l.b16 %v2003
  %v2522 = vunpack.c.l.b16 %v2004
  %v2523 = vunpack.c.l.b16 %v2005
  %v2524 = vunpack.c.l.b16 %v2006
  %v2525 = vunpack.c.l.b16 %v2007
  %v2526 = vunpack.c.l.b16 %v2008
  %v2527 = vunpack.c.l.b16 %v2009
  %v2528 = vunpack.c.l.b16 %v2010
  %v2529 = vunpack.c.l.b16 %v2011
  %v2530 = vunpack.c.l.b16 %v2012
  %v2531 = vunpack.c.l.b16 %v2013
  %v2532 = vunpack.c.l.b16 %v2014
  %v2533 = vunpack.c.l.b16 %v2015
  %v2534 = vunpack.c.l.b16 %v2016
  %v2535 = vunpack.c.l.b16 %v2017
  %v2536 = vunpack.c.l.b16 %v2018
  %v2537 = vunpack.c.l.b16 %v2019
  %v2538 = vunpack.c.l.b16 %v2020
  %v2539 = vunpack.c.l.b16 %v2021
  %v2540 = vunpack.c.l.b16 %v2022
  %v2541 = vunpack.c.l.b16 %v2023
  %v2542 = vunpack.c.l.b16 %v2024
  %v2543 = vunpack.c.l.b16 %v2025
  %v2544 = vunpack.c.l.b16 %v2026
  %v2545 = vunpack.c.l.b16 %v2027
  %v2546 = vunpack.c.l.b16 %v2028
  %v2547 = vunpack.c.l.b16 %v2029
  %v2548 = vunpack.c.l.b16 %v2030
  %v2549 = vunpack.c.l.b16 %v2031
  %v2550 = vunpack.c.l.b16 %v2032
  %v2551 = vunpack.c.l.b16 %v2033
  %v2552 = vunpack.c.l.b16 %v2034
  %v2553 = vunpack.c.l.b16 %v2035
  %v2554 = vunpack.c.l.b16 %v2036
  %v2555 = vunpack.c.l.b16 %v2037
  %v2556 = vunpack.c.l.b16 %v2038
  %v2557 = vunpack.c.l.b16 %v2039
  %v2558 = vunpack.c.l.b16 %v2040
  %v2559 = vunpack.c.l.b16 %v2041
  %v2560 = vunpack.c.l.b16 %v2042
  %v2561 = vunpack.c.l.b16 %v2043
  %v2562 = vunpack.c.l.b16 %v2044
  %v2563 = vunpack.c.l.b16 %v2045
  %v2564 = vunpack.c.l.b16 %v2046
  %v2565 = vunpack.c.l.b16 %v2047
  %v2566 = vunpack.c.l.b16 %v2048
  %v2567 = vunpack.c.l.b16 %v2049
  %v2568 = vunpack.c.l.b16 %v2050
  %v2569 = vunpack.c.l.b16 %v2051
  %v2570 = vunpack.c.l.b16 %v2052
  %v2571 = vunpack.c.l.b16 %v2053
  %v2572 = vunpack.c.l.b16 %v2054
  %v2573 = vunpack.c.l.b16 %v2055
  %v2574 = vunpack.c.l.b16 %v2056
  %v2575 = vunpack.c.l.b16 %v2057
  %v2576 = vunpack.c.l.b16 %v2058
  %v2577 = vunpack.c.l.b16 %v2059
  %v2578 = vunpack.c.l.b16 %v2060
  %v2579 = vunpack.c.l.b16 %v2061
  %v2580 = vunpack.c.l.b16 %v2062
  %v2581 = vunpack.c.l.b16 %v2063
  %v2582 = vunpack.c.l.b16 %v2064
  %v2583 = vunpack.c.l.b16 %v2065
  %v2584 = vunpack.c.l.b16 %v2066
  %v2585 = vunpack.c.l.b16 %v2067
  %v2586 = vunpack.c.l.b16 %v2068
  %v2587 = vunpack.c.l.b16 %v2069
  %v2588 = vunpack.c.l.b16 %v2070
  %v2589 = vunpack.c.l.b16 %v2071
  %v2590 = vunpack.c.l.b16 %v2072
  %v2591 = vunpack.c.l.b16 %v2073
  %v2592 = vunpack.c.l.b16 %v2074
  %v2593 = vunpack.c.l.b16 %v2075
  %v2594 = vunpack.c.l.b16 %v2076
  %v2595 = vunpack.c.l.b16 %v2077
  %v2596 = vunpack.c.l.b16 %v2078
  %v2597 = vunpack.c.l.b16 %v2079
  %v2598 = vunpack.c.l.b16 %v2080
  %v2599 = vunpack.c.l.b16 %v2081
  %v2600 = vunpack.c.l.b16 %v2082
  %v2601 = vunpack.c.l.b16 %v2083
  %v2602 = vunpack.c.l.b16 %v2084
  %v2603 = vunpack.c.l.b16 %v2085
  %v2604 = vunpack.c.l.b16 %v2086
  %v2605 = vunpack.c.l.b16 %v2087
  %v2606 = vunpack.c.l.b16 %v2088
  %v2607 = vunpack.c.l.b16 %v2089
  %v2608 = vunpack.c.l.b16 %v2090
  %v2609 = vunpack.c.l.b16 %v2091
  %v2610 = vunpack.c.l.b16 %v2092
  %v2611 = vunpack.c.l.b16 %v2093
  %v2612 = vunpack.c.l.b16 %v2094
  %v2613 = vunpack.c.l.b16 %v2095
  %v2614 = vunpack.c.l.b16 %v2096
  %v2615 = vunpack.c.l.b16 %v2097
  %v2616 = vunpack.c.l.b16 %v2098
  %v2617 = vunpack.c.l.b16 %v2099
  %v2618 = vunpack.c.l.b16 %v2100
  %v2619 = vunpack.c.l.b16 %v2101
  %v2620 = vunpack.c.l.b16 %v2102
  %v2621 = vunpack.c.l.b16 %v2103
  %v2622 = vunpack.c.l.b16 %v2104
  %v2623 = vunpack.c.l.b16 %v2105
  %v2624 = vunpack.c.l.b16 %v2106
  %v2625 = vunpack.c.l.b16 %v2107
  %v2626 = vunpack.c.l.b16 %v2108
  %v2627 = vunpack.c.l.b16 %v2109
  %v2628 = vunpack.c.l.b16 %v2110
  %v2629 = vunpack.c.l.b16 %v2111
  %v2630 = vunpack.c.l.b16 %v2112
  %v2631 = vunpack.c.l.b16 %v2113
  %v2632 = vunpack.c.l.b16 %v2114
  %v2633 = vunpack.c.l.b16 %v2115
  %v2634 = vunpack.c.l.b16 %v2116
  %v2635 = vunpack.c.l.b16 %v2117
  %v2636 = vunpack.c.l.b16 %v2118
  %v2637 = vunpack.c.l.b16 %v2119
  %v2638 = vunpack.c.l.b16 %v2120
  %v2639 = vunpack.c.l.b16 %v2121
  %v2640 = vunpack.c.l.b16 %v2122
  %v2641 = vunpack.c.l.b16 %v2123
  %v2642 = vunpack.c.l.b16 %v2124
  %v2643 = vunpack.c.l.b16 %v2125
  %v2644 = vunpack.c.l.b16 %v2126
  %v2645 = vunpack.c.l.b16 %v2127
  %v2646 = vunpack.c.l.b16 %v2128
  %v2647 = vunpack.c.l.b16 %v2129
  %v2648 = vunpack.c.l.b16 %v2130
  %v2649 = vunpack.c.l.b16 %v2131
  %v2650 = vunpack.c.l.b16 %v2132
  %v2651 = vunpack.c.l.b16 %v2133
  %v2652 = vunpack.c.l.b16 %v2134
  %v2653 = vunpack.c.l.b16 %v2135
  %v2654 = vunpack.c.l.b16 %v2136
  %v2655 = vunpack.c.l.b16 %v2137
  %v2656 = vunpack.c.l.b16 %v2138
  %v2657 = vunpack.c.l.b16 %v2139
  %v2658 = vunpack.c.l.b16 %v2140
  %v2659 = vunpack.c.l.b16 %v2141
  %v2660 = vunpack.c.l.b16 %v2142
  %v2661 = vunpack.c.l.b16 %v2143
  %v2662 = vunpack.c.l.b16 %v2144
  %v2663 = vunpack.c.l.b16 %v2145
  %v2664 = vunpack.c.l.b16 %v2146
  %v2665 = vunpack.c.l.b16 %v2147
  %v2666 = vunpack.c.l.b16 %v2148
  %v2667 = vunpack.c.l.b16 %v2149
  %v2668 = vunpack.c.l.b16 %v2150
  %v2669 = vunpack.c.l.b16 %v2151
  %v2670 = vunpack.c.l.b16 %v2152
  %v2671 = vunpack.c.l.b16 %v2153
  %v2672 = vunpack.c.l.b16 %v2154
  %v2673 = vunpack.c.l.b16 %v2155
  %v2674 = vunpack.c.l.b16 %v2156
  %v2675 = vunpack.c.l.b16 %v2157
  %v2676 = vunpack.c.l.b16 %v2158
  %v2677 = vunpack.c.l.b16 %v2159
  %v2678 = vunpack.c.l.b16 %v2160
  %v2679 = vunpack.c.l.b16 %v2161
  %v2680 = vunpack.c.l.b16 %v2162
  %v2681 = vunpack.c.l.b16 %v2163
  %v2682 = vunpack.c.l.b16 %v2164
  %v2683 = vunpack.c.l.b16 %v2165
  %v2684 = vunpack.c.l.b16 %v2166
  %v2685 = vpack.c.b16 %v2430, %v2429
  %v2686 = vpack.c.b16 %v2432, %v2431
  %v2687 = vpack.c.b16 %v2434, %v2433
  %v2688 = vpack.c.b16 %v2436, %v2435
  %v2689 = vpack.c.b16 %v2438, %v2437
  %v2690 = vpack.c.b16 %v2440, %v2439
  %v2691 = vpack.c.b16 %v2442, %v2441
  %v2692 = vpack.c.b16 %v2444, %v2443
  %v2693 = vpack.c.b16 %v2446, %v2445
  %v2694 = vpack.c.b16 %v2448, %v2447
  %v2695 = vpack.c.b16 %v2450, %v2449
  %v2696 = vpack.c.b16 %v2452, %v2451
  %v2697 = vpack.c.b16 %v2454, %v2453
  %v2698 = vpack.c.b16 %v2456, %v2455
  %v2699 = vpack.c.b16 %v2458, %v2457
  %v2700 = vpack.c.b16 %v2460, %v2459
  %v2701 = vpack.c.b16 %v2462, %v2461
  %v2702 = vpack.c.b16 %v2464, %v2463
  %v2703 = vpack.c.b16 %v2466, %v2465
  %v2704 = vpack.c.b16 %v2468, %v2467
  %v2705 = vpack.c.b16 %v2470, %v2469
  %v2706 = vpack.c.b16 %v2472, %v2471
  %v2707 = vpack.c.b16 %v2474, %v2473
  %v2708 = vpack.c.b16 %v2476, %v2475
  %v2709 = vpack.c.b16 %v2478, %v2477
  %v2710 = vpack.c.b16 %v2480, %v2479
  %v2711 = vpack.c.b16 %v2482, %v2481
  %v2712 = vpack.c.b16 %v2484, %v2483
  %v2713 = vpack.c.b16 %v2486, %v2485
  %v2714 = vpack.c.b16 %v2488, %v2487
  %v2715 = vpack.c.b16 %v2490, %v2489
  %v2716 = vpack.c.b16 %v2492, %v2491
  %v2717 = vpack.c.b16 %v2494, %v2493
  %v2718 = vpack.c.b16 %v2496, %v2495
  %v2719 = vpack.c.b16 %v2498, %v2497
  %v2720 = vpack.c.b16 %v2500, %v2499
  %v2721 = vpack.c.b16 %v2502, %v2501
  %v2722 = vpack.c.b16 %v2504, %v2503
  %v2723 = vpack.c.b16 %v2506, %v2505
  %v2724 = vpack.c.b16 %v2508, %v2507
  %v2725 = vpack.c.b16 %v2510, %v2509
  %v2726 = vpack.c.b16 %v2512, %v2511
  %v2727 = vpack.c.b16 %v2514, %v2513
  %v2728 = vpack.c.b16 %v2516, %v2515
  %v2729 = vpack.c.b16 %v2518, %v2517
  %v2730 = vpack.c.b16 %v2520, %v2519
  %v2731 = vpack.c.b16 %v2522, %v2521
  %v2732 = vpack.c.b16 %v2524, %v2523
  %v2733 = vpack.c.b16 %v2526, %v2525
  %v2734 = vpack.c.b16 %v2528, %v2527
  %v2735 = vpack.c.b16 %v2530, %v2529
  %v2736 = vpack.c.b16 %v2532, %v2531
  %v2737 = vpack.c.b16 %v2534, %v2533
  %v2738 = vpack.c.b16 %v2536, %v2535
  %v2739 = vpack.c.b16 %v2538, %v2537
  %v2740 = vpack.c.b16 %v2540, %v2539
  %v2741 = vpack.c.b16 %v2542, %v2541
  %v2742 = vpack.c.b16 %v2544, %v2543
  %v2743 = vpack.c.b16 %v2546, %v2545
  %v2744 = vpack.c.b16 %v2548, %v2547
  %v2745 = vpack.c.b16 %v2550, %v2549
  %v2746 = vpack.c.b16 %v2552, %v2551
  %v2747 = vpack.c.b16 %v2554, %v2553
  %v2748 = vpack.c.b16 %v2556, %v2555
  %v2749 = vpack.c.b16 %v2558, %v2557
  %v2750 = vpack.c.b16 %v2560, %v2559
  %v2751 = vpack.c.b16 %v2562, %v2561
  %v2752 = vpack.c.b16 %v2564, %v2563
  %v2753 = vpack.c.b16 %v2566, %v2565
  %v2754 = vpack.c.b16 %v2568, %v2567
  %v2755 = vpack.c.b16 %v2570, %v2569
  %v2756 = vpack.c.b16 %v2572, %v2571
  %v2757 = vpack.c.b16 %v2574, %v2573
  %v2758 = vpack.c.b16 %v2576, %v2575
  %v2759 = vpack.c.b16 %v2578, %v2577
  %v2760 = vpack.c.b16 %v2580, %v2579
  %v2761 = vpack.c.b16 %v2582, %v2581
  %v2762 = vpack.c.b16 %v2584, %v2583
  %v2763 = vpack.c.b16 %v2586, %v2585
  %v2764 = vpack.c.b16 %v2588, %v2587
  %v2765 = vpack.c.b16 %v2590, %v2589
  %v2766 = vpack.c.b16 %v2592, %v2591
  %v2767 = vpack.c.b16 %v2594, %v2593
  %v2768 = vpack.c.b16 %v2596, %v2595
  %v2769 = vpack.c.b16 %v2598, %v2597
  %v2770 = vpack.c.b16 %v2600, %v2599
  %v2771 = vpack.c.b16 %v2602, %v2601
  %v2772 = vpack.c.b16 %v2604, %v2603
  %v2773 = vpack.c.b16 %v2606, %v2605
  %v2774 = vpack.c.b16 %v2608, %v2607
  %v2775 = vpack.c.b16 %v2610, %v2609
  %v2776 = vpack.c.b16 %v2612, %v2611
  %v2777 = vpack.c.b16 %v2614, %v2613
  %v2778 = vpack.c.b16 %v2616, %v2615
  %v2779 = vpack.c.b16 %v2618, %v2617
  %v2780 = vpack.c.b16 %v2620, %v2619
  %v2781 = vpack.c.b16 %v2622, %v2621
  %v2782 = vpack.c.b16 %v2624, %v2623
  %v2783 = vpack.c.b16 %v2626, %v2625
  %v2784 = vpack.c.b16 %v2628, %v2627
  %v2785 = vpack.c.b16 %v2630, %v2629
  %v2786 = vpack.c.b16 %v2632, %v2631
  %v2787 = vpack.c.b16 %v2634, %v2633
  %v2788 = vpack.c.b16 %v2636, %v2635
  %v2789 = vpack.c.b16 %v2638, %v2637
  %v2790 = vpack.c.b16 %v2640, %v2639
  %v2791 = vpack.c.b16 %v2642, %v2641
  %v2792 = vpack.c.b16 %v2644, %v2643
  %v2793 = vpack.c.b16 %v2646, %v2645
  %v2794 = vpack.c.b16 %v2648, %v2647
  %v2795 = vpack.c.b16 %v2650, %v2649
  %v2796 = vpack.c.b16 %v2652, %v2651
  %v2797 = vpack.c.b16 %v2654, %v2653
  %v2798 = vpack.c.b16 %v2656, %v2655
  %v2799 = vpack.c.b16 %v2658, %v2657
  %v2800 = vpack.c.b16 %v2660, %v2659
  %v2801 = vpack.c.b16 %v2662, %v2661
  %v2802 = vpack.c.b16 %v2664, %v2663
  %v2803 = vpack.c.b16 %v2666, %v2665
  %v2804 = vpack.c.b16 %v2668, %v2667
  %v2805 = vpack.c.b16 %v2670, %v2669
  %v2806 = vpack.c.b16 %v2672, %v2671
  %v2807 = vpack.c.b16 %v2674, %v2673
  %v2808 = vpack.c.b16 %v2676, %v2675
  %v2809 = vpack.c.b16 %v2678, %v2677
  %v2810 = vpack.c.b16 %v2680, %v2679
  %v2811 = vpack.c.b16 %v2682, %v2681
  %v2812 = vpack.c.b16 %v2684, %v2683
  %2941 = vmatprep.subr.bf16.mxu0 0
  %2942 = vmatpush1.bf16.msra.mxu0 %v2685
  %2943 = vmatprep.subr.bf16.mxu0 0
  %2944 = vmatpush1.bf16.msra.mxu0 %v2686
  %2945 = vmatprep.subr.bf16.mxu0 0
  %2946 = vmatpush1.bf16.msra.mxu0 %v2687
  %2947 = vmatprep.subr.bf16.mxu0 0
  %2948 = vmatpush1.bf16.msra.mxu0 %v2688
  %2949 = vmatprep.subr.bf16.mxu0 0
  %2950 = vmatpush1.bf16.msra.mxu0 %v2689
  %2951 = vmatprep.subr.bf16.mxu0 0
  %2952 = vmatpush1.bf16.msra.mxu0 %v2690
  %2953 = vmatprep.subr.bf16.mxu0 0
  %2954 = vmatpush1.bf16.msra.mxu0 %v2691
  %2955 = vmatprep.subr.bf16.mxu0 0
  %2956 = vmatpush1.bf16.msra.mxu0 %v2692
  %2957 = vmatprep.subr.bf16.mxu0 0
  %2958 = vmatpush1.bf16.msra.mxu0 %v2693
  %2959 = vmatprep.subr.bf16.mxu0 0
  %2960 = vmatpush1.bf16.msra.mxu0 %v2694
  %2961 = vmatprep.subr.bf16.mxu0 0
  %2962 = vmatpush1.bf16.msra.mxu0 %v2695
  %2963 = vmatprep.subr.bf16.mxu0 0
  %2964 = vmatpush1.bf16.msra.mxu0 %v2696
  %2965 = vmatprep.subr.bf16.mxu0 0
  %2966 = vmatpush1.bf16.msra.mxu0 %v2697
  %2967 = vmatprep.subr.bf16.mxu0 0
  %2968 = vmatpush1.bf16.msra.mxu0 %v2698
  %2969 = vmatprep.subr.bf16.mxu0 0
  %2970 = vmatpush1.bf16.msra.mxu0 %v2699
  %2971 = vmatprep.subr.bf16.mxu0 0
  %2972 = vmatpush1.bf16.msra.mxu0 %v2700
  %2973 = vmatprep.mubr.bf16.mxu0 %v1896
  %2974 = vmatmul.mubr.bf16.gmra.mrb[0].mxu0 %v1895
  %v2975 = vpop.f32.mrb[0].mxu0
  %v2976 = vadd.f32 %v2171, %v2975
  %v2977 = vpop.f32.mrb[0].mxu0
  %v2978 = vpop.f32.mrb[0].mxu0
  %v2979 = vadd.f32 %v2171, %v2978
  %v2980 = vpop.f32.mrb[0].mxu0
  %2981 = vdwg.mxu0
  %2982 = vmatprep.subr.bf16.mxu0 0
  %2983 = vmatpush1.bf16.msra.mxu0 %v2701
  %2984 = vmatprep.subr.bf16.mxu0 0
  %2985 = vmatpush1.bf16.msra.mxu0 %v2702
  %2986 = vmatprep.subr.bf16.mxu0 0
  %2987 = vmatpush1.bf16.msra.mxu0 %v2703
  %2988 = vmatprep.subr.bf16.mxu0 0
  %2989 = vmatpush1.bf16.msra.mxu0 %v2704
  %2990 = vmatprep.subr.bf16.mxu0 0
  %2991 = vmatpush1.bf16.msra.mxu0 %v2705
  %2992 = vmatprep.subr.bf16.mxu0 0
  %2993 = vmatpush1.bf16.msra.mxu0 %v2706
  %2994 = vmatprep.subr.bf16.mxu0 0
  %2995 = vmatpush1.bf16.msra.mxu0 %v2707
  %2996 = vmatprep.subr.bf16.mxu0 0
  %2997 = vmatpush1.bf16.msra.mxu0 %v2708
  %2998 = vmatprep.subr.bf16.mxu0 0
  %2999 = vmatpush1.bf16.msra.mxu0 %v2709
  %3000 = vmatprep.subr.bf16.mxu0 0
  %3001 = vmatpush1.bf16.msra.mxu0 %v2710
  %3002 = vmatprep.subr.bf16.mxu0 0
  %3003 = vmatpush1.bf16.msra.mxu0 %v2711
  %3004 = vmatprep.subr.bf16.mxu0 0
  %3005 = vmatpush1.bf16.msra.mxu0 %v2712
  %3006 = vmatprep.subr.bf16.mxu0 0
  %3007 = vmatpush1.bf16.msra.mxu0 %v2713
  %3008 = vmatprep.subr.bf16.mxu0 0
  %3009 = vmatpush1.bf16.msra.mxu0 %v2714
  %3010 = vmatprep.subr.bf16.mxu0 0
  %3011 = vmatpush1.bf16.msra.mxu0 %v2715
  %3012 = vmatprep.subr.bf16.mxu0 0
  %3013 = vmatpush1.bf16.msra.mxu0 %v2716
  %3014 = vmatprep.mubr.bf16.mxu0 %v1898
  %3015 = vmatmul.mubr.bf16.gmra.mrb[0].mxu0 %v1897
  %v3016 = vpop.f32.mrb[0].mxu0
  %v3017 = vadd.f32 %v2976, %v3016
  %v3018 = vpop.f32.mrb[0].mxu0
  %v3019 = vpop.f32.mrb[0].mxu0
  %v3020 = vadd.f32 %v2979, %v3019
  %v3021 = vpop.f32.mrb[0].mxu0
  %3022 = vdwg.mxu0
  %3023 = vmatprep.subr.bf16.mxu0 0
  %3024 = vmatpush1.bf16.msra.mxu0 %v2717
  %3025 = vmatprep.subr.bf16.mxu0 0
  %3026 = vmatpush1.bf16.msra.mxu0 %v2718
  %3027 = vmatprep.subr.bf16.mxu0 0
  %3028 = vmatpush1.bf16.msra.mxu0 %v2719
  %3029 = vmatprep.subr.bf16.mxu0 0
  %3030 = vmatpush1.bf16.msra.mxu0 %v2720
  %3031 = vmatprep.subr.bf16.mxu0 0
  %3032 = vmatpush1.bf16.msra.mxu0 %v2721
  %3033 = vmatprep.subr.bf16.mxu0 0
  %3034 = vmatpush1.bf16.msra.mxu0 %v2722
  %3035 = vmatprep.subr.bf16.mxu0 0
  %3036 = vmatpush1.bf16.msra.mxu0 %v2723
  %3037 = vmatprep.subr.bf16.mxu0 0
  %3038 = vmatpush1.bf16.msra.mxu0 %v2724
  %3039 = vmatprep.subr.bf16.mxu0 0
  %3040 = vmatpush1.bf16.msra.mxu0 %v2725
  %3041 = vmatprep.subr.bf16.mxu0 0
  %3042 = vmatpush1.bf16.msra.mxu0 %v2726
  %3043 = vmatprep.subr.bf16.mxu0 0
  %3044 = vmatpush1.bf16.msra.mxu0 %v2727
  %3045 = vmatprep.subr.bf16.mxu0 0
  %3046 = vmatpush1.bf16.msra.mxu0 %v2728
  %3047 = vmatprep.subr.bf16.mxu0 0
  %3048 = vmatpush1.bf16.msra.mxu0 %v2729
  %3049 = vmatprep.subr.bf16.mxu0 0
  %3050 = vmatpush1.bf16.msra.mxu0 %v2730
  %3051 = vmatprep.subr.bf16.mxu0 0
  %3052 = vmatpush1.bf16.msra.mxu0 %v2731
  %3053 = vmatprep.subr.bf16.mxu0 0
  %3054 = vmatpush1.bf16.msra.mxu0 %v2732
  %3055 = vmatprep.mubr.bf16.mxu0 %v1900
  %3056 = vmatmul.mubr.bf16.gmra.mrb[0].mxu0 %v1899
  %v3057 = vpop.f32.mrb[0].mxu0
  %v3058 = vadd.f32 %v3017, %v3057
  %v3059 = vpop.f32.mrb[0].mxu0
  %v3060 = vpop.f32.mrb[0].mxu0
  %v3061 = vadd.f32 %v3020, %v3060
  %v3062 = vpop.f32.mrb[0].mxu0
  %3063 = vdwg.mxu0
  %3064 = vmatprep.subr.bf16.mxu0 0
  %3065 = vmatpush1.bf16.msra.mxu0 %v2733
  %3066 = vmatprep.subr.bf16.mxu0 0
  %3067 = vmatpush1.bf16.msra.mxu0 %v2734
  %3068 = vmatprep.subr.bf16.mxu0 0
  %3069 = vmatpush1.bf16.msra.mxu0 %v2735
  %3070 = vmatprep.subr.bf16.mxu0 0
  %3071 = vmatpush1.bf16.msra.mxu0 %v2736
  %3072 = vmatprep.subr.bf16.mxu0 0
  %3073 = vmatpush1.bf16.msra.mxu0 %v2737
  %3074 = vmatprep.subr.bf16.mxu0 0
  %3075 = vmatpush1.bf16.msra.mxu0 %v2738
  %3076 = vmatprep.subr.bf16.mxu0 0
  %3077 = vmatpush1.bf16.msra.mxu0 %v2739
  %3078 = vmatprep.subr.bf16.mxu0 0
  %3079 = vmatpush1.bf16.msra.mxu0 %v2740
  %3080 = vmatprep.subr.bf16.mxu0 0
  %3081 = vmatpush1.bf16.msra.mxu0 %v2741
  %3082 = vmatprep.subr.bf16.mxu0 0
  %3083 = vmatpush1.bf16.msra.mxu0 %v2742
  %3084 = vmatprep.subr.bf16.mxu0 0
  %3085 = vmatpush1.bf16.msra.mxu0 %v2743
  %3086 = vmatprep.subr.bf16.mxu0 0
  %3087 = vmatpush1.bf16.msra.mxu0 %v2744
  %3088 = vmatprep.subr.bf16.mxu0 0
  %3089 = vmatpush1.bf16.msra.mxu0 %v2745
  %3090 = vmatprep.subr.bf16.mxu0 0
  %3091 = vmatpush1.bf16.msra.mxu0 %v2746
  %3092 = vmatprep.subr.bf16.mxu0 0
  %3093 = vmatpush1.bf16.msra.mxu0 %v2747
  %3094 = vmatprep.subr.bf16.mxu0 0
  %3095 = vmatpush1.bf16.msra.mxu0 %v2748
  %3096 = vmatprep.mubr.bf16.mxu0 %v1902
  %3097 = vmatmul.mubr.bf16.gmra.mrb[0].mxu0 %v1901
  %v3098 = vpop.f32.mrb[0].mxu0
  %v3099 = vadd.f32 %v3058, %v3098
  %v3100 = vpop.f32.mrb[0].mxu0
  %v3101 = vpop.f32.mrb[0].mxu0
  %v3102 = vadd.f32 %v3061, %v3101
  %v3103 = vpop.f32.mrb[0].mxu0
  %3104 = vdwg.mxu0
  %3105 = vmatprep.subr.bf16.mxu0 0
  %3106 = vmatpush1.bf16.msra.mxu0 %v2749
  %3107 = vmatprep.subr.bf16.mxu0 0
  %3108 = vmatpush1.bf16.msra.mxu0 %v2750
  %3109 = vmatprep.subr.bf16.mxu0 0
  %3110 = vmatpush1.bf16.msra.mxu0 %v2751
  %3111 = vmatprep.subr.bf16.mxu0 0
  %3112 = vmatpush1.bf16.msra.mxu0 %v2752
  %3113 = vmatprep.subr.bf16.mxu0 0
  %3114 = vmatpush1.bf16.msra.mxu0 %v2753
  %3115 = vmatprep.subr.bf16.mxu0 0
  %3116 = vmatpush1.bf16.msra.mxu0 %v2754
  %3117 = vmatprep.subr.bf16.mxu0 0
  %3118 = vmatpush1.bf16.msra.mxu0 %v2755
  %3119 = vmatprep.subr.bf16.mxu0 0
  %3120 = vmatpush1.bf16.msra.mxu0 %v2756
  %3121 = vmatprep.subr.bf16.mxu0 0
  %3122 = vmatpush1.bf16.msra.mxu0 %v2757
  %3123 = vmatprep.subr.bf16.mxu0 0
  %3124 = vmatpush1.bf16.msra.mxu0 %v2758
  %3125 = vmatprep.subr.bf16.mxu0 0
  %3126 = vmatpush1.bf16.msra.mxu0 %v2759
  %3127 = vmatprep.subr.bf16.mxu0 0
  %3128 = vmatpush1.bf16.msra.mxu0 %v2760
  %3129 = vmatprep.subr.bf16.mxu0 0
  %3130 = vmatpush1.bf16.msra.mxu0 %v2761
  %3131 = vmatprep.subr.bf16.mxu0 0
  %3132 = vmatpush1.bf16.msra.mxu0 %v2762
  %3133 = vmatprep.subr.bf16.mxu0 0
  %3134 = vmatpush1.bf16.msra.mxu0 %v2763
  %3135 = vmatprep.subr.bf16.mxu0 0
  %3136 = vmatpush1.bf16.msra.mxu0 %v2764
  %3137 = vmatprep.mubr.bf16.mxu0 %v1904
  %3138 = vmatmul.mubr.bf16.gmra.mrb[0].mxu0 %v1903
  %v3139 = vpop.f32.mrb[0].mxu0
  %v3140 = vadd.f32 %v3099, %v3139
  %v3141 = vpop.f32.mrb[0].mxu0
  %v3142 = vpop.f32.mrb[0].mxu0
  %v3143 = vadd.f32 %v3102, %v3142
  %v3144 = vpop.f32.mrb[0].mxu0
  %3145 = vdwg.mxu0
  %3146 = vmatprep.subr.bf16.mxu0 0
  %3147 = vmatpush1.bf16.msra.mxu0 %v2765
  %3148 = vmatprep.subr.bf16.mxu0 0
  %3149 = vmatpush1.bf16.msra.mxu0 %v2766
  %3150 = vmatprep.subr.bf16.mxu0 0
  %3151 = vmatpush1.bf16.msra.mxu0 %v2767
  %3152 = vmatprep.subr.bf16.mxu0 0
  %3153 = vmatpush1.bf16.msra.mxu0 %v2768
  %3154 = vmatprep.subr.bf16.mxu0 0
  %3155 = vmatpush1.bf16.msra.mxu0 %v2769
  %3156 = vmatprep.subr.bf16.mxu0 0
  %3157 = vmatpush1.bf16.msra.mxu0 %v2770
  %3158 = vmatprep.subr.bf16.mxu0 0
  %3159 = vmatpush1.bf16.msra.mxu0 %v2771
  %3160 = vmatprep.subr.bf16.mxu0 0
  %3161 = vmatpush1.bf16.msra.mxu0 %v2772
  %3162 = vmatprep.subr.bf16.mxu0 0
  %3163 = vmatpush1.bf16.msra.mxu0 %v2773
  %3164 = vmatprep.subr.bf16.mxu0 0
  %3165 = vmatpush1.bf16.msra.mxu0 %v2774
  %3166 = vmatprep.subr.bf16.mxu0 0
  %3167 = vmatpush1.bf16.msra.mxu0 %v2775
  %3168 = vmatprep.subr.bf16.mxu0 0
  %3169 = vmatpush1.bf16.msra.mxu0 %v2776
  %3170 = vmatprep.subr.bf16.mxu0 0
  %3171 = vmatpush1.bf16.msra.mxu0 %v2777
  %3172 = vmatprep.subr.bf16.mxu0 0
  %3173 = vmatpush1.bf16.msra.mxu0 %v2778
  %3174 = vmatprep.subr.bf16.mxu0 0
  %3175 = vmatpush1.bf16.msra.mxu0 %v2779
  %3176 = vmatprep.subr.bf16.mxu0 0
  %3177 = vmatpush1.bf16.msra.mxu0 %v2780
  %3178 = vmatprep.mubr.bf16.mxu0 %v1906
  %3179 = vmatmul.mubr.bf16.gmra.mrb[0].mxu0 %v1905
  %v3180 = vpop.f32.mrb[0].mxu0
  %v3181 = vadd.f32 %v3140, %v3180
  %v3182 = vpop.f32.mrb[0].mxu0
  %v3183 = vpop.f32.mrb[0].mxu0
  %v3184 = vadd.f32 %v3143, %v3183
  %v3185 = vpop.f32.mrb[0].mxu0
  %3186 = vdwg.mxu0
  %3187 = vmatprep.subr.bf16.mxu0 0
  %3188 = vmatpush1.bf16.msra.mxu0 %v2781
  %3189 = vmatprep.subr.bf16.mxu0 0
  %3190 = vmatpush1.bf16.msra.mxu0 %v2782
  %3191 = vmatprep.subr.bf16.mxu0 0
  %3192 = vmatpush1.bf16.msra.mxu0 %v2783
  %3193 = vmatprep.subr.bf16.mxu0 0
  %3194 = vmatpush1.bf16.msra.mxu0 %v2784
  %3195 = vmatprep.subr.bf16.mxu0 0
  %3196 = vmatpush1.bf16.msra.mxu0 %v2785
  %3197 = vmatprep.subr.bf16.mxu0 0
  %3198 = vmatpush1.bf16.msra.mxu0 %v2786
  %3199 = vmatprep.subr.bf16.mxu0 0
  %3200 = vmatpush1.bf16.msra.mxu0 %v2787
  %3201 = vmatprep.subr.bf16.mxu0 0
  %3202 = vmatpush1.bf16.msra.mxu0 %v2788
  %3203 = vmatprep.subr.bf16.mxu0 0
  %3204 = vmatpush1.bf16.msra.mxu0 %v2789
  %3205 = vmatprep.subr.bf16.mxu0 0
  %3206 = vmatpush1.bf16.msra.mxu0 %v2790
  %3207 = vmatprep.subr.bf16.mxu0 0
  %3208 = vmatpush1.bf16.msra.mxu0 %v2791
  %3209 = vmatprep.subr.bf16.mxu0 0
  %3210 = vmatpush1.bf16.msra.mxu0 %v2792
  %3211 = vmatprep.subr.bf16.mxu0 0
  %3212 = vmatpush1.bf16.msra.mxu0 %v2793
  %3213 = vmatprep.subr.bf16.mxu0 0
  %3214 = vmatpush1.bf16.msra.mxu0 %v2794
  %3215 = vmatprep.subr.bf16.mxu0 0
  %3216 = vmatpush1.bf16.msra.mxu0 %v2795
  %3217 = vmatprep.subr.bf16.mxu0 0
  %3218 = vmatpush1.bf16.msra.mxu0 %v2796
  %3219 = vmatprep.mubr.bf16.mxu0 %v1908
  %3220 = vmatmul.mubr.bf16.gmra.mrb[0].mxu0 %v1907
  %v3221 = vpop.f32.mrb[0].mxu0
  %v3222 = vadd.f32 %v3181, %v3221
  %v3223 = vpop.f32.mrb[0].mxu0
  %v3224 = vpop.f32.mrb[0].mxu0
  %v3225 = vadd.f32 %v3184, %v3224
  %v3226 = vpop.f32.mrb[0].mxu0
  %3227 = vdwg.mxu0
  %3228 = vmatprep.subr.bf16.mxu0 0
  %3229 = vmatpush1.bf16.msra.mxu0 %v2797
  %3230 = vmatprep.subr.bf16.mxu0 0
  %3231 = vmatpush1.bf16.msra.mxu0 %v2798
  %3232 = vmatprep.subr.bf16.mxu0 0
  %3233 = vmatpush1.bf16.msra.mxu0 %v2799
  %3234 = vmatprep.subr.bf16.mxu0 0
  %3235 = vmatpush1.bf16.msra.mxu0 %v2800
  %3236 = vmatprep.subr.bf16.mxu0 0
  %3237 = vmatpush1.bf16.msra.mxu0 %v2801
  %3238 = vmatprep.subr.bf16.mxu0 0
  %3239 = vmatpush1.bf16.msra.mxu0 %v2802
  %3240 = vmatprep.subr.bf16.mxu0 0
  %3241 = vmatpush1.bf16.msra.mxu0 %v2803
  %3242 = vmatprep.subr.bf16.mxu0 0
  %3243 = vmatpush1.bf16.msra.mxu0 %v2804
  %3244 = vmatprep.subr.bf16.mxu0 0
  %3245 = vmatpush1.bf16.msra.mxu0 %v2805
  %3246 = vmatprep.subr.bf16.mxu0 0
  %3247 = vmatpush1.bf16.msra.mxu0 %v2806
  %3248 = vmatprep.subr.bf16.mxu0 0
  %3249 = vmatpush1.bf16.msra.mxu0 %v2807
  %3250 = vmatprep.subr.bf16.mxu0 0
  %3251 = vmatpush1.bf16.msra.mxu0 %v2808
  %3252 = vmatprep.subr.bf16.mxu0 0
  %3253 = vmatpush1.bf16.msra.mxu0 %v2809
  %3254 = vmatprep.subr.bf16.mxu0 0
  %3255 = vmatpush1.bf16.msra.mxu0 %v2810
  %3256 = vmatprep.subr.bf16.mxu0 0
  %3257 = vmatpush1.bf16.msra.mxu0 %v2811
  %3258 = vmatprep.subr.bf16.mxu0 0
  %3259 = vmatpush1.bf16.msra.mxu0 %v2812
  %3260 = vmatprep.mubr.bf16.mxu0 %v1910
  %3261 = vmatmul.mubr.bf16.gmra.mrb[0].mxu0 %v1909
  %v3262 = vpop.f32.mrb[0].mxu0
  %v3263 = vadd.f32 %v3222, %v3262
  %v3264 = vpop.f32.mrb[0].mxu0
  %v3265 = vpop.f32.mrb[0].mxu0
  %v3266 = vadd.f32 %v3225, %v3265
  %v3267 = vpop.f32.mrb[0].mxu0
  %3268 = vdwg.mxu0
  %v3269 = vadd.f32 %v1239, %v3263
  %v3270 = vadd.f32 %v1240, %v3266
  %v3271 = vsel %vm221, %v3269, 0.0
  %3272 = vadd.xlane.f32.xlu0 %v3271
  %v3273 = vpop.xlane.xlu0 %3272
  %v3274 = vsel %vm221, %v3270, 0.0
  %3275 = vadd.xlane.f32.xlu0 %v3274
  %v3276 = vpop.xlane.xlu0 %3275
  %v3277 = vmul.f32 %v3273, %v1204
  %v3278 = vmul.f32 %v3276, %v1204
  %v3279 = vsub.f32 %v3269, %v3277
  %v3280 = vsub.f32 %v3270, %v3278
  %v3281 = vmul.f32 %v3279, %v3279
  %v3282 = vmul.f32 %v3280, %v3280
  %v3283 = vsel %vm221, %v3281, 0.0
  %3284 = vadd.xlane.f32.xlu0 %v3283
  %v3285 = vpop.xlane.xlu0 %3284
  %v3286 = vsel %vm221, %v3282, 0.0
  %3287 = vadd.xlane.f32.xlu0 %v3286
  %v3288 = vpop.xlane.xlu0 %3287
  %v3289 = vmul.f32 %v3285, %v1204
  %v3290 = vmul.f32 %v3288, %v1204
  %v3291 = vadd.f32 %v3289, 1e-05
  %v3292 = vadd.f32 %v3290, 1e-05
  %v3293 = vrsqrt.pop %v3291
  %v3294 = vrsqrt.pop %v3292
  %v3295 = vmul.f32 %v3279, %v3293
  %v3296 = vmul.f32 %v3280, %v3294
  %v3298 = vlaneseq
  %v3299 = vshrl.u32 %v3298, 7
  %v3300 = vsub.s32 0, %v3299
  %v3301 = vrot.slane %v28, %v3300
  %v3303 = vmul.f32 %v3295, %v3301
  %v3304 = vmul.f32 %v3296, %v3301
  %v3306 = vlaneseq
  %v3307 = vshrl.u32 %v3306, 7
  %v3308 = vsub.s32 0, %v3307
  %v3309 = vrot.slane %v29, %v3308
  %v3311 = vadd.f32 %v3303, %v3309
  %v3312 = vadd.f32 %v3304, %v3309
  %v3313 = vpack.c.bf16 %v3312, %v3311
  %v3314 = vld [vmem:[%s2 + $0x44] sm:$0xf]
  %v3315 = vld [vmem:[%s2 + $0x90] sm:$0xf]
  %v3316 = vld [vmem:[%s2 + $0xdc] sm:$0xf]
  %v3317 = vld [vmem:[%s2 + $0x128] sm:$0xf]
  %v3319 = vlaneseq
  %v3320 = vshrl.u32 %v3319, 7
  %v3321 = vsub.s32 0, %v3320
  %v3322 = vrot.slane %v24, %v3321
  %v3328 = vunpack.c.l.b16 %v3314
  %v3329 = vunpack.c.l.b16 %v3315
  %v3330 = vunpack.c.l.b16 %v3316
  %v3331 = vunpack.c.l.b16 %v3317
  %v3332 = vpack.c.b16 %v3329, %v3328
  %v3333 = vpack.c.b16 %v3331, %v3330
  %v3337 = vsel %vm221, %v3313, 0
  %3339 = vmatprep.subr.bf16.mxu0 0
  %3340 = vmatpush1.bf16.msra.mxu0 %v3332
  %3341 = vmatprep.subr.bf16.mxu0 0
  %3342 = vmatpush1.bf16.msra.mxu0 %v3333
  %3343 = vmatprep.subr.bf16.mxu0 0
  %3344 = vmatpush1.bf16.msra.mxu0 0
  %3345 = vmatprep.subr.bf16.mxu0 0
  %3346 = vmatpush1.bf16.msra.mxu0 0
  %3347 = vmatprep.subr.bf16.mxu0 0
  %3348 = vmatpush1.bf16.msra.mxu0 0
  %3349 = vmatprep.subr.bf16.mxu0 0
  %3350 = vmatpush1.bf16.msra.mxu0 0
  %3351 = vmatprep.subr.bf16.mxu0 0
  %3352 = vmatpush1.bf16.msra.mxu0 0
  %3353 = vmatprep.subr.bf16.mxu0 0
  %3354 = vmatpush1.bf16.msra.mxu0 0
  %3355 = vmatprep.subr.bf16.mxu0 0
  %3356 = vmatpush1.bf16.msra.mxu0 0
  %3357 = vmatprep.subr.bf16.mxu0 0
  %3358 = vmatpush1.bf16.msra.mxu0 0
  %3359 = vmatprep.subr.bf16.mxu0 0
  %3360 = vmatpush1.bf16.msra.mxu0 0
  %3361 = vmatprep.subr.bf16.mxu0 0
  %3362 = vmatpush1.bf16.msra.mxu0 0
  %3363 = vmatprep.subr.bf16.mxu0 0
  %3364 = vmatpush1.bf16.msra.mxu0 0
  %3365 = vmatprep.subr.bf16.mxu0 0
  %3366 = vmatpush1.bf16.msra.mxu0 0
  %3367 = vmatprep.subr.bf16.mxu0 0
  %3368 = vmatpush1.bf16.msra.mxu0 0
  %3369 = vmatprep.subr.bf16.mxu0 0
  %3370 = vmatpush1.bf16.msra.mxu0 0
  %3371 = vmatprep.mubr.bf16.mxu0 0
  %3372 = vmatmul.mubr.bf16.gmra.mrb[0].mxu0 %v3337
  %v3373 = vpop.f32.mrb[0].mxu0
  %v3374 = vadd.f32 %v3322, %v3373
  %v3375 = vpop.f32.mrb[0].mxu0
  %v3376 = vpop.f32.mrb[0].mxu0
  %v3377 = vadd.f32 %v3322, %v3376
  %v3378 = vpop.f32.mrb[0].mxu0
  %3379 = vdwg.mxu0
  %3380 = vst [vmem:[%s5] sm:$0xff] %v3374
  %3381 = vst [vmem:[%s5 + $0x8] sm:$0xff] %v3377
  // Predicated region
  $region22: #{minimal_transformer_forward.1} parent=0 // pred_check
    _
  $region23: #{minimal_transformer_forward.1} parent=0 // pred_check_branch
    %3383 = sbr.rel (0) target = $region25
  $region24: #{minimal_transformer_forward.1} parent=0 // pred_region
    _
  $region25: #{minimal_transformer_forward.1} parent=0 // pred_fallthru
    _
  // Predicated region
  $region26: #{minimal_transformer_forward.1} parent=0 // pred_check
    _
  $region27: #{minimal_transformer_forward.1} parent=0 // pred_check_branch
    %3385 = sbr.rel (0) target = $region29
  $region28: #{minimal_transformer_forward.1} parent=0 // pred_region
    _
  $region29: #{minimal_transformer_forward.1} parent=0 // pred_fallthru
    _

</llo_original>
